<compile_context>
chip_gen: v7x
topology: tpu7x:2x2x1
jax: 0.10.0
libtpu: 0.0.40
codegen_flags: <defaults>
</compile_context>

<pallas_src>
import functools

import jax
import jax.numpy as jnp
from jax.experimental import pallas as pl
from jax.experimental.pallas import tpu as pltpu


def imputer_kernel(data_ref, mask_ref, noise_ref,
                   w1_ref, b1_ref, w2_ref, b2_ref, w3_ref, b3_ref,
                   w4_ref, b4_ref, w5_ref, b5_ref, w6_ref, b6_ref,
                   out_ref, *, hidden_dtype):
    data = data_ref[...]
    mask = mask_ref[...]
    noise = noise_ref[...]

    # Masked mix of observed data and noise (f32 elementwise).
    net = data * mask + noise * (1.0 - mask)

    def hidden(x, w_ref, b_ref):
        # bf16 x bf16 MXU matmul with f32 accumulation; bias-add + ReLU run in
        # hidden_dtype (bf16 on v6e/v7x halves VPU + store traffic, f32 on
        # v5e where there is no bf16 VALU). Next layer's operand is bf16.
        y = jnp.dot(x, w_ref[...], preferred_element_type=jnp.float32)
        y = y.astype(hidden_dtype) + b_ref[...].astype(hidden_dtype)
        return jnp.maximum(y, 0).astype(jnp.bfloat16)

    h = net.astype(jnp.bfloat16)
    h = hidden(h, w1_ref, b1_ref)   # D   -> 512
    h = hidden(h, w2_ref, b2_ref)   # 512 -> 512
    h = hidden(h, w3_ref, b3_ref)   # 512 -> 512
    h = hidden(h, w4_ref, b4_ref)   # 512 -> 256
    h = hidden(h, w5_ref, b5_ref)   # 256 -> 128

    # Final layer + sigmoid + blend stay in f32 for output precision.
    logits = jnp.dot(h, w6_ref[...],
                     preferred_element_type=jnp.float32) + b6_ref[...]
    g = jax.nn.sigmoid(logits)

    # Impute only the missing entries.
    out_ref[...] = data * mask + g * (1.0 - mask)


def make_imputer_params(key, input_dim, arch=(512, 512)):
    """PyTorch-Linear-style init U(-1/sqrt(fan_in), 1/sqrt(fan_in)).

    Weights are pre-cast to bf16 ONCE here (MXU operand dtype); biases stay
    f32. This removes the per-call weight conversion from the forward path.
    """
    dims = [input_dim, arch[0], arch[1], arch[0], 256, 128, input_dim]
    params = []
    for i in range(len(dims) - 1):
        fan_in, fan_out = dims[i], dims[i + 1]
        key, kw, kb = jax.random.split(key, 3)
        bound = 1.0 / jnp.sqrt(jnp.float32(fan_in))
        w = jax.random.uniform(kw, (fan_in, fan_out), jnp.float32,
                               -bound, bound).astype(jnp.bfloat16)
        b = jax.random.uniform(kb, (1, fan_out), jnp.float32, -bound, bound)
        params += [w, b]
    return params


def _round_up(x, m):
    return ((x + m - 1) // m) * m


def _pick_block(batch, block_b):
    """Batch tile: multiple of 8, <= block_b, and >= 2 grid steps whenever the
    batch allows it (keeps both TensorCores busy on v7x)."""
    if batch <= 8:
        return batch                      # single block == full array extent
    half = _round_up((batch + 1) // 2, 8)
    return max(8, min(block_b, half))


@functools.partial(jax.jit, static_argnames=("block_b", "hidden_dtype"))
def imputer_forward(data, mask, noise, params, block_b=512,
                    hidden_dtype=jnp.bfloat16):
    B, D = data.shape
    bb = _pick_block(B, block_b)
    # Ragged last block (when bb does not divide B) is handled by Pallas:
    # out-of-bounds rows are padded on read and masked on write, and every
    # row is computed independently, so no pad/slice round-trips are needed.
    grid = (pl.cdiv(B, bb),)

    act_spec = pl.BlockSpec((bb, D), lambda i: (i, 0))
    # Weights / biases: full arrays, same block every grid step (VMEM-resident,
    # not re-fetched across iterations).
    param_specs = [pl.BlockSpec(p.shape, lambda i: (0, 0)) for p in params]

    # Advisory cost hint for XLA's scheduler around the custom call.
    flops = sum(2 * B * w.shape[0] * w.shape[1] for w in params[::2])
    param_bytes = sum(int(p.size) * p.dtype.itemsize for p in params)
    cost = pl.CostEstimate(
        flops=int(flops),
        transcendentals=int(B * D),
        bytes_accessed=int(4 * B * D * 4 + param_bytes),
    )

    return pl.pallas_call(
        functools.partial(imputer_kernel, hidden_dtype=hidden_dtype),
        out_shape=jax.ShapeDtypeStruct((B, D), jnp.float32),
        grid_spec=pltpu.PrefetchScalarGridSpec(
            num_scalar_prefetch=0,
            grid=grid,
            in_specs=[act_spec, act_spec, act_spec] + param_specs,
            out_specs=act_spec,
        ),
        compiler_params=pltpu.CompilerParams(
            dimension_semantics=("parallel",)),
        cost_estimate=cost,
    )(data, mask, noise, *params)


def imputer_reference(data, mask, noise, params):
    net = data * mask + noise * (1.0 - mask)
    h = net
    n_layers = len(params) // 2
    for li in range(n_layers):
        w, b = params[2 * li], params[2 * li + 1]
        h = h @ w.astype(jnp.float32) + b
        if li != n_layers - 1:
            h = jnp.maximum(h, 0.0)
    g = jax.nn.sigmoid(h)
    return data * mask + g * (1.0 - mask)


if __name__ == "__main__":
    D = 16          # input_dim (tabular feature dim from GenerateData)
    ARCH = (512, 512)

    # v5e has no bf16 VALU: keep hidden bias/ReLU in f32 there, bf16 elsewhere.
    try:
        _kind = jax.devices()[0].device_kind.lower()
    except Exception:
        _kind = ""
    hidden_dtype = jnp.float32 if ("v5 lite" in _kind or "v5e" in _kind) \
        else jnp.bfloat16

    key = jax.random.PRNGKey(0)
    kd, kn, km, kp = jax.random.split(key, 4)
    params = make_imputer_params(kp, D, ARCH)

    # Small demo shape: grid of 2 (one block per TensorCore on v7x).
    B = 32
    data = jax.random.uniform(kd, (B, D), jnp.float32)                 # normalized records
    mask = (jax.random.uniform(km, (B, D)) < 0.8).astype(jnp.float32)  # Bernoulli(0.8) masks
    noise = jax.random.normal(kn, (B, D), jnp.float32)

    out = jax.block_until_ready(
        imputer_forward(data, mask, noise, params, hidden_dtype=hidden_dtype))
    ref = imputer_reference(data, mask, noise, params)
    assert out.shape == (B, D)
    # bf16 matmul operands / intermediates -> relaxed tolerance vs f32 reference.
    assert jnp.allclose(out, ref, atol=3e-2, rtol=3e-2), \
        "mismatch vs JAX reference (small)"

    # Exercise the ragged-grid path (B not a multiple of the block size).
    B2 = 520
    kd2, kn2, km2 = jax.random.split(jax.random.PRNGKey(1), 3)
    data2 = jax.random.uniform(kd2, (B2, D), jnp.float32)
    mask2 = (jax.random.uniform(km2, (B2, D)) < 0.8).astype(jnp.float32)
    noise2 = jax.random.normal(kn2, (B2, D), jnp.float32)
    out2 = jax.block_until_ready(
        imputer_forward(data2, mask2, noise2, params, hidden_dtype=hidden_dtype))
    ref2 = imputer_reference(data2, mask2, noise2, params)
    assert out2.shape == (B2, D)
    assert jnp.allclose(out2, ref2, atol=3e-2, rtol=3e-2), \
        "mismatch vs JAX reference (ragged)"

    print("KERNEL_OK")
</pallas_src>

<mosaic_0001>
module attributes {stable_mosaic.version = 11 : i64} {
  func.func @imputer_kernel(%arg0: i32, %arg1: memref<16x16xf32, #tpu.memory_space<vmem>>, %arg2: memref<16x16xf32, #tpu.memory_space<vmem>>, %arg3: memref<16x16xf32, #tpu.memory_space<vmem>>, %arg4: memref<16x512xbf16, #tpu.memory_space<vmem>>, %arg5: memref<1x512xf32, #tpu.memory_space<vmem>>, %arg6: memref<512x512xbf16, #tpu.memory_space<vmem>>, %arg7: memref<1x512xf32, #tpu.memory_space<vmem>>, %arg8: memref<512x512xbf16, #tpu.memory_space<vmem>>, %arg9: memref<1x512xf32, #tpu.memory_space<vmem>>, %arg10: memref<512x256xbf16, #tpu.memory_space<vmem>>, %arg11: memref<1x256xf32, #tpu.memory_space<vmem>>, %arg12: memref<256x128xbf16, #tpu.memory_space<vmem>>, %arg13: memref<1x128xf32, #tpu.memory_space<vmem>>, %arg14: memref<128x16xbf16, #tpu.memory_space<vmem>>, %arg15: memref<1x16xf32, #tpu.memory_space<vmem>>, %arg16: memref<16x16xf32, #tpu.memory_space<vmem>>) attributes {dimension_semantics = [#tpu.dimension_semantics<parallel>], iteration_bounds = array<i64: 2>, scalar_prefetch = 0 : i64, scratch_operands = 0 : i64, tpu.core_type = #tpu.core_type<tc>, window_params = [{transform_indices = @transform_0, window_bounds = array<i64: 16, 16>}, {transform_indices = @transform_1, window_bounds = array<i64: 16, 16>}, {transform_indices = @transform_2, window_bounds = array<i64: 16, 16>}, {pipeline_mode = #tpu.pipeline_mode<synchronous>, transform_indices = @transform_3, window_bounds = array<i64: 16, 512>}, {pipeline_mode = #tpu.pipeline_mode<synchronous>, transform_indices = @transform_4, window_bounds = array<i64: 1, 512>}, {pipeline_mode = #tpu.pipeline_mode<synchronous>, transform_indices = @transform_5, window_bounds = array<i64: 512, 512>}, {pipeline_mode = #tpu.pipeline_mode<synchronous>, transform_indices = @transform_6, window_bounds = array<i64: 1, 512>}, {pipeline_mode = #tpu.pipeline_mode<synchronous>, transform_indices = @transform_7, window_bounds = array<i64: 512, 512>}, {pipeline_mode = #tpu.pipeline_mode<synchronous>, transform_indices = @transform_8, window_bounds = array<i64: 1, 512>}, {pipeline_mode = #tpu.pipeline_mode<synchronous>, transform_indices = @transform_9, window_bounds = array<i64: 512, 256>}, {pipeline_mode = #tpu.pipeline_mode<synchronous>, transform_indices = @transform_10, window_bounds = array<i64: 1, 256>}, {pipeline_mode = #tpu.pipeline_mode<synchronous>, transform_indices = @transform_11, window_bounds = array<i64: 256, 128>}, {pipeline_mode = #tpu.pipeline_mode<synchronous>, transform_indices = @transform_12, window_bounds = array<i64: 1, 128>}, {pipeline_mode = #tpu.pipeline_mode<synchronous>, transform_indices = @transform_13, window_bounds = array<i64: 128, 16>}, {pipeline_mode = #tpu.pipeline_mode<synchronous>, transform_indices = @transform_14, window_bounds = array<i64: 1, 16>}, {transform_indices = @transform_15, window_bounds = array<i64: 16, 16>}]} {
    %c0 = arith.constant 0 : index
    %c0_0 = arith.constant 0 : index
    %0 = vector.load %arg1[%c0, %c0_0] : memref<16x16xf32, #tpu.memory_space<vmem>>, vector<16x16xf32>
    %c0_1 = arith.constant 0 : index
    %c0_2 = arith.constant 0 : index
    %1 = vector.load %arg2[%c0_1, %c0_2] : memref<16x16xf32, #tpu.memory_space<vmem>>, vector<16x16xf32>
    %c0_3 = arith.constant 0 : index
    %c0_4 = arith.constant 0 : index
    %2 = vector.load %arg3[%c0_3, %c0_4] : memref<16x16xf32, #tpu.memory_space<vmem>>, vector<16x16xf32>
    %3 = arith.mulf %0, %1 : vector<16x16xf32>
    %cst = arith.constant 1.000000e+00 : f32
    %4 = vector.broadcast %cst : f32 to vector<16x16xf32>
    %5 = arith.subf %4, %1 : vector<16x16xf32>
    %6 = arith.mulf %2, %5 : vector<16x16xf32>
    %7 = arith.addf %3, %6 : vector<16x16xf32>
    %8 = arith.truncf %7 : vector<16x16xf32> to vector<16x16xbf16>
    %c0_5 = arith.constant 0 : index
    %c0_6 = arith.constant 0 : index
    %9 = vector.load %arg4[%c0_5, %c0_6] : memref<16x512xbf16, #tpu.memory_space<vmem>>, vector<16x512xbf16>
    %cst_7 = arith.constant dense<0.000000e+00> : vector<16x512xf32>
    %10 = tpu.matmul %8, %9, %cst_7 {dimension_numbers = #tpu.dot_dimension_numbers<[1], [0], [0], [1], [0, 0, 1, 1], [], []>} : vector<16x16xbf16>, vector<16x512xbf16>, vector<16x512xf32> -> vector<16x512xf32>
    %11 = arith.truncf %10 : vector<16x512xf32> to vector<16x512xbf16>
    %c0_8 = arith.constant 0 : index
    %c0_9 = arith.constant 0 : index
    %12 = vector.load %arg5[%c0_8, %c0_9] : memref<1x512xf32, #tpu.memory_space<vmem>>, vector<1x512xf32>
    %13 = arith.truncf %12 : vector<1x512xf32> to vector<1x512xbf16>
    %14 = vector.broadcast %13 : vector<1x512xbf16> to vector<16x512xbf16>
    %15 = arith.addf %11, %14 : vector<16x512xbf16>
    %cst_10 = arith.constant 0.000000e+00 : bf16
    %16 = vector.broadcast %cst_10 : bf16 to vector<16x512xbf16>
    %17 = arith.maximumf %15, %16 : vector<16x512xbf16>
    %c0_11 = arith.constant 0 : index
    %c0_12 = arith.constant 0 : index
    %18 = vector.load %arg6[%c0_11, %c0_12] : memref<512x512xbf16, #tpu.memory_space<vmem>>, vector<512x512xbf16>
    %cst_13 = arith.constant dense<0.000000e+00> : vector<16x512xf32>
    %19 = tpu.matmul %17, %18, %cst_13 {dimension_numbers = #tpu.dot_dimension_numbers<[1], [0], [0], [1], [0, 0, 1, 1], [], []>} : vector<16x512xbf16>, vector<512x512xbf16>, vector<16x512xf32> -> vector<16x512xf32>
    %20 = arith.truncf %19 : vector<16x512xf32> to vector<16x512xbf16>
    %c0_14 = arith.constant 0 : index
    %c0_15 = arith.constant 0 : index
    %21 = vector.load %arg7[%c0_14, %c0_15] : memref<1x512xf32, #tpu.memory_space<vmem>>, vector<1x512xf32>
    %22 = arith.truncf %21 : vector<1x512xf32> to vector<1x512xbf16>
    %23 = vector.broadcast %22 : vector<1x512xbf16> to vector<16x512xbf16>
    %24 = arith.addf %20, %23 : vector<16x512xbf16>
    %cst_16 = arith.constant 0.000000e+00 : bf16
    %25 = vector.broadcast %cst_16 : bf16 to vector<16x512xbf16>
    %26 = arith.maximumf %24, %25 : vector<16x512xbf16>
    %c0_17 = arith.constant 0 : index
    %c0_18 = arith.constant 0 : index
    %27 = vector.load %arg8[%c0_17, %c0_18] : memref<512x512xbf16, #tpu.memory_space<vmem>>, vector<512x512xbf16>
    %cst_19 = arith.constant dense<0.000000e+00> : vector<16x512xf32>
    %28 = tpu.matmul %26, %27, %cst_19 {dimension_numbers = #tpu.dot_dimension_numbers<[1], [0], [0], [1], [0, 0, 1, 1], [], []>} : vector<16x512xbf16>, vector<512x512xbf16>, vector<16x512xf32> -> vector<16x512xf32>
    %29 = arith.truncf %28 : vector<16x512xf32> to vector<16x512xbf16>
    %c0_20 = arith.constant 0 : index
    %c0_21 = arith.constant 0 : index
    %30 = vector.load %arg9[%c0_20, %c0_21] : memref<1x512xf32, #tpu.memory_space<vmem>>, vector<1x512xf32>
    %31 = arith.truncf %30 : vector<1x512xf32> to vector<1x512xbf16>
    %32 = vector.broadcast %31 : vector<1x512xbf16> to vector<16x512xbf16>
    %33 = arith.addf %29, %32 : vector<16x512xbf16>
    %cst_22 = arith.constant 0.000000e+00 : bf16
    %34 = vector.broadcast %cst_22 : bf16 to vector<16x512xbf16>
    %35 = arith.maximumf %33, %34 : vector<16x512xbf16>
    %c0_23 = arith.constant 0 : index
    %c0_24 = arith.constant 0 : index
    %36 = vector.load %arg10[%c0_23, %c0_24] : memref<512x256xbf16, #tpu.memory_space<vmem>>, vector<512x256xbf16>
    %cst_25 = arith.constant dense<0.000000e+00> : vector<16x256xf32>
    %37 = tpu.matmul %35, %36, %cst_25 {dimension_numbers = #tpu.dot_dimension_numbers<[1], [0], [0], [1], [0, 0, 1, 1], [], []>} : vector<16x512xbf16>, vector<512x256xbf16>, vector<16x256xf32> -> vector<16x256xf32>
    %38 = arith.truncf %37 : vector<16x256xf32> to vector<16x256xbf16>
    %c0_26 = arith.constant 0 : index
    %c0_27 = arith.constant 0 : index
    %39 = vector.load %arg11[%c0_26, %c0_27] : memref<1x256xf32, #tpu.memory_space<vmem>>, vector<1x256xf32>
    %40 = arith.truncf %39 : vector<1x256xf32> to vector<1x256xbf16>
    %41 = vector.broadcast %40 : vector<1x256xbf16> to vector<16x256xbf16>
    %42 = arith.addf %38, %41 : vector<16x256xbf16>
    %cst_28 = arith.constant 0.000000e+00 : bf16
    %43 = vector.broadcast %cst_28 : bf16 to vector<16x256xbf16>
    %44 = arith.maximumf %42, %43 : vector<16x256xbf16>
    %c0_29 = arith.constant 0 : index
    %c0_30 = arith.constant 0 : index
    %45 = vector.load %arg12[%c0_29, %c0_30] : memref<256x128xbf16, #tpu.memory_space<vmem>>, vector<256x128xbf16>
    %cst_31 = arith.constant dense<0.000000e+00> : vector<16x128xf32>
    %46 = tpu.matmul %44, %45, %cst_31 {dimension_numbers = #tpu.dot_dimension_numbers<[1], [0], [0], [1], [0, 0, 1, 1], [], []>} : vector<16x256xbf16>, vector<256x128xbf16>, vector<16x128xf32> -> vector<16x128xf32>
    %47 = arith.truncf %46 : vector<16x128xf32> to vector<16x128xbf16>
    %c0_32 = arith.constant 0 : index
    %c0_33 = arith.constant 0 : index
    %48 = vector.load %arg13[%c0_32, %c0_33] : memref<1x128xf32, #tpu.memory_space<vmem>>, vector<1x128xf32>
    %49 = arith.truncf %48 : vector<1x128xf32> to vector<1x128xbf16>
    %50 = vector.broadcast %49 : vector<1x128xbf16> to vector<16x128xbf16>
    %51 = arith.addf %47, %50 : vector<16x128xbf16>
    %cst_34 = arith.constant 0.000000e+00 : bf16
    %52 = vector.broadcast %cst_34 : bf16 to vector<16x128xbf16>
    %53 = arith.maximumf %51, %52 : vector<16x128xbf16>
    %c0_35 = arith.constant 0 : index
    %c0_36 = arith.constant 0 : index
    %54 = vector.load %arg14[%c0_35, %c0_36] : memref<128x16xbf16, #tpu.memory_space<vmem>>, vector<128x16xbf16>
    %cst_37 = arith.constant dense<0.000000e+00> : vector<16x16xf32>
    %55 = tpu.matmul %53, %54, %cst_37 {dimension_numbers = #tpu.dot_dimension_numbers<[1], [0], [0], [1], [0, 0, 1, 1], [], []>} : vector<16x128xbf16>, vector<128x16xbf16>, vector<16x16xf32> -> vector<16x16xf32>
    %c0_38 = arith.constant 0 : index
    %c0_39 = arith.constant 0 : index
    %56 = vector.load %arg15[%c0_38, %c0_39] : memref<1x16xf32, #tpu.memory_space<vmem>>, vector<1x16xf32>
    %57 = vector.broadcast %56 : vector<1x16xf32> to vector<16x16xf32>
    %58 = arith.addf %55, %57 : vector<16x16xf32>
    %59 = arith.negf %58 : vector<16x16xf32>
    %60 = math.exp %59 : vector<16x16xf32>
    %cst_40 = arith.constant 1.000000e+00 : f32
    %61 = vector.broadcast %cst_40 : f32 to vector<16x16xf32>
    %62 = arith.addf %61, %60 : vector<16x16xf32>
    %63 = arith.divf %61, %62 : vector<16x16xf32>
    %64 = arith.mulf %0, %1 : vector<16x16xf32>
    %cst_41 = arith.constant 1.000000e+00 : f32
    %65 = vector.broadcast %cst_41 : f32 to vector<16x16xf32>
    %66 = arith.subf %65, %1 : vector<16x16xf32>
    %67 = arith.mulf %63, %66 : vector<16x16xf32>
    %68 = arith.addf %64, %67 : vector<16x16xf32>
    %c0_42 = arith.constant 0 : index
    %c0_43 = arith.constant 0 : index
    %69 = vector.load %arg16[%c0_42, %c0_43] : memref<16x16xf32, #tpu.memory_space<vmem>>, vector<16x16xf32>
    tpu.vector_store %arg16[%c0_42, %c0_43], %68 {strides = array<i32>} : memref<16x16xf32, #tpu.memory_space<vmem>>, vector<16x16xf32>,
    return
  }
  func.func @transform_0(%arg0: i32) -> (i32, i32) {
    %c0_i32 = arith.constant 0 : i32
    %c0_i32_0 = arith.constant 0 : i32
    return %arg0, %c0_i32 : i32, i32
  }
  func.func @transform_1(%arg0: i32) -> (i32, i32) {
    %c0_i32 = arith.constant 0 : i32
    %c0_i32_0 = arith.constant 0 : i32
    return %arg0, %c0_i32 : i32, i32
  }
  func.func @transform_2(%arg0: i32) -> (i32, i32) {
    %c0_i32 = arith.constant 0 : i32
    %c0_i32_0 = arith.constant 0 : i32
    return %arg0, %c0_i32 : i32, i32
  }
  func.func @transform_3(%arg0: i32) -> (i32, i32) {
    %c0_i32 = arith.constant 0 : i32
    %c0_i32_0 = arith.constant 0 : i32
    %c0_i32_1 = arith.constant 0 : i32
    return %c0_i32, %c0_i32_0 : i32, i32
  }
  func.func @transform_4(%arg0: i32) -> (i32, i32) {
    %c0_i32 = arith.constant 0 : i32
    %c0_i32_0 = arith.constant 0 : i32
    %c0_i32_1 = arith.constant 0 : i32
    return %c0_i32, %c0_i32_0 : i32, i32
  }
  func.func @transform_5(%arg0: i32) -> (i32, i32) {
    %c0_i32 = arith.constant 0 : i32
    %c0_i32_0 = arith.constant 0 : i32
    %c0_i32_1 = arith.constant 0 : i32
    return %c0_i32, %c0_i32_0 : i32, i32
  }
  func.func @transform_6(%arg0: i32) -> (i32, i32) {
    %c0_i32 = arith.constant 0 : i32
    %c0_i32_0 = arith.constant 0 : i32
    %c0_i32_1 = arith.constant 0 : i32
    return %c0_i32, %c0_i32_0 : i32, i32
  }
  func.func @transform_7(%arg0: i32) -> (i32, i32) {
    %c0_i32 = arith.constant 0 : i32
    %c0_i32_0 = arith.constant 0 : i32
    %c0_i32_1 = arith.constant 0 : i32
    return %c0_i32, %c0_i32_0 : i32, i32
  }
  func.func @transform_8(%arg0: i32) -> (i32, i32) {
    %c0_i32 = arith.constant 0 : i32
    %c0_i32_0 = arith.constant 0 : i32
    %c0_i32_1 = arith.constant 0 : i32
    return %c0_i32, %c0_i32_0 : i32, i32
  }
  func.func @transform_9(%arg0: i32) -> (i32, i32) {
    %c0_i32 = arith.constant 0 : i32
    %c0_i32_0 = arith.constant 0 : i32
    %c0_i32_1 = arith.constant 0 : i32
    return %c0_i32, %c0_i32_0 : i32, i32
  }
  func.func @transform_10(%arg0: i32) -> (i32, i32) {
    %c0_i32 = arith.constant 0 : i32
    %c0_i32_0 = arith.constant 0 : i32
    %c0_i32_1 = arith.constant 0 : i32
    return %c0_i32, %c0_i32_0 : i32, i32
  }
  func.func @transform_11(%arg0: i32) -> (i32, i32) {
    %c0_i32 = arith.constant 0 : i32
    %c0_i32_0 = arith.constant 0 : i32
    %c0_i32_1 = arith.constant 0 : i32
    return %c0_i32, %c0_i32_0 : i32, i32
  }
  func.func @transform_12(%arg0: i32) -> (i32, i32) {
    %c0_i32 = arith.constant 0 : i32
    %c0_i32_0 = arith.constant 0 : i32
    %c0_i32_1 = arith.constant 0 : i32
    return %c0_i32, %c0_i32_0 : i32, i32
  }
  func.func @transform_13(%arg0: i32) -> (i32, i32) {
    %c0_i32 = arith.constant 0 : i32
    %c0_i32_0 = arith.constant 0 : i32
    %c0_i32_1 = arith.constant 0 : i32
    return %c0_i32, %c0_i32_0 : i32, i32
  }
  func.func @transform_14(%arg0: i32) -> (i32, i32) {
    %c0_i32 = arith.constant 0 : i32
    %c0_i32_0 = arith.constant 0 : i32
    %c0_i32_1 = arith.constant 0 : i32
    return %c0_i32, %c0_i32_0 : i32, i32
  }
  func.func @transform_15(%arg0: i32) -> (i32, i32) {
    %c0_i32 = arith.constant 0 : i32
    %c0_i32_0 = arith.constant 0 : i32
    return %arg0, %c0_i32 : i32, i32
  }
}

</mosaic_0001>

<llo_original>
// kernel: imputer_forward.1
$region0: #{imputer_forward.1}
  #allocation0 [shape = 'u32[]', space=smem, size = 0x4, offset = 0x4, fixed_abs, tag = 'smem constant byte address 0x4 - core index']
  #allocation1 [shape = 'u32[144,128]{1,0:T(1,128)}', space=vmem, size = 0x12000, scoped, tag = 'internal scratch']
  %s0 = inlined_call_operand.vmem [shape: f32[32,16], index: 0, kind: input, shape index: {}]
  %s1 = inlined_call_operand.vmem [shape: f32[32,16], index: 1, kind: input, shape index: {}]
  %s2 = inlined_call_operand.vmem [shape: f32[32,16], index: 2, kind: input, shape index: {}]
  %s3 = inlined_call_operand.vmem [shape: bf16[16,512], index: 3, kind: input, shape index: {}]
  %s4 = inlined_call_operand.vmem [shape: f32[1,512], index: 4, kind: input, shape index: {}]
  %s5 = inlined_call_operand.hbm [shape: bf16[512,512], index: 5, kind: input, shape index: {}]
  %s6 = inlined_call_operand.vmem [shape: f32[1,512], index: 6, kind: input, shape index: {}]
  %s7 = inlined_call_operand.hbm [shape: bf16[512,512], index: 7, kind: input, shape index: {}]
  %s8 = inlined_call_operand.vmem [shape: f32[1,512], index: 8, kind: input, shape index: {}]
  %s9 = inlined_call_operand.hbm [shape: bf16[512,256], index: 9, kind: input, shape index: {}]
  %s10 = inlined_call_operand.vmem [shape: f32[1,256], index: 10, kind: input, shape index: {}]
  %s11 = inlined_call_operand.vmem [shape: bf16[256,128], index: 11, kind: input, shape index: {}]
  %s12 = inlined_call_operand.vmem [shape: f32[1,128], index: 12, kind: input, shape index: {}]
  %s13 = inlined_call_operand.vmem [shape: bf16[128,16], index: 13, kind: input, shape index: {}]
  %s14 = inlined_call_operand.vmem [shape: f32[1,16], index: 14, kind: input, shape index: {}]
  %s15 = inlined_call_operand.vmem [shape: f32[32,16], index: 15, kind: output, shape index: {}]
  %s16 = sld [smem:[#allocation0]]
  $region105: #{imputer_forward.1} parent=0
    _
  %s18 = ssub.s32 1, %s16
  %s19 = scalar_select 0, %s18, %s16
  $region1: #{imputer_forward.1} parent=0
    #allocation2 [shape = 'u8[524288]{0}', space=vmem, size = 0x80000, scoped, tag = 'input window, operand 5, single buffered']
    #allocation3 [shape = 's32[2]{0}', space=sflag, size = 0x8, scoped, tag = 'scoped memory for imputer_forward.1']
    #allocation4 [shape = 'u8[524288]{0}', space=vmem, size = 0x80000, scoped, tag = 'input window, operand 7, single buffered']
    #allocation5 [shape = 's32[1]{0}', space=sflag, size = 0x4, scoped, tag = 'scoped memory for imputer_forward.1']
    #allocation6 [shape = 'u8[262144]{0}', space=vmem, size = 0x40000, scoped, tag = 'input window, operand 9, single buffered']
    %20 = vsyncpa [#allocation3], 0
    %21 = vsyncpa [#allocation5], 0
    loop: start=0, step=1, limit=4
    $region2: #{imputer_forward.1} parent=1 // loop_pre_header
      _
    $region3: #{imputer_forward.1} parent=1 // loop_header
      %s23 = sphi 0, %s27
      %p24 = scmp.ge.s32.totalorder %s23, 4
      %s33 = sphi 0, %s35
      %s36 = sphi 0, %s33
      %s37 = sphi 0, %s36
      %s53 = sphi 0, %s37
      %s59 = sphi 0, %s61
      %s62 = sphi 0, %s59
      %s63 = sphi 0, %s62
      %s79 = sphi 0, %s63
      %s85 = sphi 0, %s87
      %s88 = sphi 0, %s85
      %s89 = sphi 0, %s88
      %s105 = sphi 0, %s89
      %s109 = sphi 0, %s109
      %s111 = sphi 0, %s109
      %s112 = sphi 0, %s111
      %s126 = sphi 0, %s112
      %s130 = sphi 0, %s130
      %s132 = sphi 0, %s130
      %s133 = sphi 0, %s132
      %s147 = sphi 0, %s133
      %s151 = sphi 0, %s151
      %s153 = sphi 0, %s151
      %s154 = sphi 0, %s153
      %s168 = sphi 0, %s154
      %s172 = sphi 0, %s172
      %s174 = sphi 0, %s172
      %s175 = sphi 0, %s174
      %s189 = sphi 0, %s175
      %s193 = sphi 0, %s193
      %s195 = sphi 0, %s193
      %s196 = sphi 0, %s195
      %s210 = sphi 0, %s196
      %s214 = sphi 0, %s214
      %s216 = sphi 0, %s214
      %s217 = sphi 0, %s216
      %s231 = sphi 0, %s217
      %s235 = sphi 0, %s235
      %s237 = sphi 0, %s235
      %s238 = sphi 0, %s237
      %s252 = sphi 0, %s238
      %s256 = sphi 0, %s256
      %s258 = sphi 0, %s256
      %s259 = sphi 0, %s258
      %s273 = sphi 0, %s259
      %s277 = sphi 0, %s277
      %s279 = sphi 0, %s277
      %s280 = sphi 0, %s279
      %s294 = sphi 0, %s280
      %s298 = sphi 0, %s298
      %s300 = sphi 0, %s298
      %s301 = sphi 0, %s300
      %s315 = sphi 0, %s301
      %s319 = sphi 0, %s319
      %s321 = sphi 0, %s319
      %s322 = sphi 0, %s321
      %s336 = sphi 0, %s322
      %s340 = sphi 0, %s340
      %s342 = sphi 0, %s340
      %s343 = sphi 0, %s342
      %s357 = sphi 0, %s343
      %s363 = sphi 0, %s365
      %s366 = sphi 0, %s363
      %s367 = sphi 0, %s366
      %s383 = sphi 0, %s367
    $region4: #{imputer_forward.1} parent=1 // loop_header_branch
      %26 = sbr.rel (%p24) target = $region8
    $region5: #{imputer_forward.1} parent=1 // loop_body
      %s28 = ssub.s32 %s23, 1
      %s29 = ssub.s32 %s23, 2
      %s30 = sadd.s32 %s23, 1
      %s31 = ssub.s32 %s23, %s30
      %p32 = scmp.eq.s32.totalorder %s31, 0
      %s34 = sadd.s32 %s33, 1
      %s35 = scalar_select %p32, %s33, %s34
      %p38 = pneg %p32
      %p39 = scmp.eq.s32.totalorder %s23, 1
      %p40 = por %p38, %p39
      %p41 = scmp.ne.s32.totalorder %s33, %s36
      %p42 = scmp.eq.s32.totalorder %s23, 0
      %p43 = por %p41, %p42
      %p44 = scmp.ne.s32.totalorder %s33, %s36
      %p45 = scmp.eq.s32.totalorder %s28, 1
      %p46 = por %p44, %p45
      %p47 = scmp.ne.s32.totalorder %s36, %s37
      %p48 = scmp.eq.s32.totalorder %s28, 0
      %p49 = por %p47, %p48
      %p50 = scmp.ne.s32.totalorder %s36, %s37
      %p51 = scmp.eq.s32.totalorder %s29, 1
      %p52 = por %p50, %p51
      %p54 = scmp.ne.s32.totalorder %s37, %s53
      %p55 = scmp.eq.s32.totalorder %s29, 0
      %p56 = por %p54, %p55
      %s57 = ssub.s32 %s23, %s30
      %p58 = scmp.eq.s32.totalorder %s57, 0
      %s60 = sadd.s32 %s59, 1
      %s61 = scalar_select %p58, %s59, %s60
      %p64 = pneg %p58
      %p65 = scmp.eq.s32.totalorder %s23, 1
      %p66 = por %p64, %p65
      %p67 = scmp.ne.s32.totalorder %s59, %s62
      %p68 = scmp.eq.s32.totalorder %s23, 0
      %p69 = por %p67, %p68
      %p70 = scmp.ne.s32.totalorder %s59, %s62
      %p71 = scmp.eq.s32.totalorder %s28, 1
      %p72 = por %p70, %p71
      %p73 = scmp.ne.s32.totalorder %s62, %s63
      %p74 = scmp.eq.s32.totalorder %s28, 0
      %p75 = por %p73, %p74
      %p76 = scmp.ne.s32.totalorder %s62, %s63
      %p77 = scmp.eq.s32.totalorder %s29, 1
      %p78 = por %p76, %p77
      %p80 = scmp.ne.s32.totalorder %s63, %s79
      %p81 = scmp.eq.s32.totalorder %s29, 0
      %p82 = por %p80, %p81
      %s83 = ssub.s32 %s23, %s30
      %p84 = scmp.eq.s32.totalorder %s83, 0
      %s86 = sadd.s32 %s85, 1
      %s87 = scalar_select %p84, %s85, %s86
      %p90 = pneg %p84
      %p91 = scmp.eq.s32.totalorder %s23, 1
      %p92 = por %p90, %p91
      %p93 = scmp.ne.s32.totalorder %s85, %s88
      %p94 = scmp.eq.s32.totalorder %s23, 0
      %p95 = por %p93, %p94
      %p96 = scmp.ne.s32.totalorder %s85, %s88
      %p97 = scmp.eq.s32.totalorder %s28, 1
      %p98 = por %p96, %p97
      %p99 = scmp.ne.s32.totalorder %s88, %s89
      %p100 = scmp.eq.s32.totalorder %s28, 0
      %p101 = por %p99, %p100
      %p102 = scmp.ne.s32.totalorder %s88, %s89
      %p103 = scmp.eq.s32.totalorder %s29, 1
      %p104 = por %p102, %p103
      %p106 = scmp.ne.s32.totalorder %s89, %s105
      %p107 = scmp.eq.s32.totalorder %s29, 0
      %p108 = por %p106, %p107
      %s110 = sadd.s32 %s109, 1
      %p113 = scmp.eq.s32.totalorder %s23, 1
      %p114 = scmp.ne.s32.totalorder %s109, %s111
      %p115 = scmp.eq.s32.totalorder %s23, 0
      %p116 = por %p114, %p115
      %p117 = scmp.ne.s32.totalorder %s109, %s111
      %p118 = scmp.eq.s32.totalorder %s28, 1
      %p119 = por %p117, %p118
      %p120 = scmp.ne.s32.totalorder %s111, %s112
      %p121 = scmp.eq.s32.totalorder %s28, 0
      %p122 = por %p120, %p121
      %p123 = scmp.ne.s32.totalorder %s111, %s112
      %p124 = scmp.eq.s32.totalorder %s29, 1
      %p125 = por %p123, %p124
      %p127 = scmp.ne.s32.totalorder %s112, %s126
      %p128 = scmp.eq.s32.totalorder %s29, 0
      %p129 = por %p127, %p128
      %s131 = sadd.s32 %s130, 1
      %p134 = scmp.eq.s32.totalorder %s23, 1
      %p135 = scmp.ne.s32.totalorder %s130, %s132
      %p136 = scmp.eq.s32.totalorder %s23, 0
      %p137 = por %p135, %p136
      %p138 = scmp.ne.s32.totalorder %s130, %s132
      %p139 = scmp.eq.s32.totalorder %s28, 1
      %p140 = por %p138, %p139
      %p141 = scmp.ne.s32.totalorder %s132, %s133
      %p142 = scmp.eq.s32.totalorder %s28, 0
      %p143 = por %p141, %p142
      %p144 = scmp.ne.s32.totalorder %s132, %s133
      %p145 = scmp.eq.s32.totalorder %s29, 1
      %p146 = por %p144, %p145
      %p148 = scmp.ne.s32.totalorder %s133, %s147
      %p149 = scmp.eq.s32.totalorder %s29, 0
      %p150 = por %p148, %p149
      %s152 = sadd.s32 %s151, 1
      %p155 = scmp.eq.s32.totalorder %s23, 1
      %p156 = scmp.ne.s32.totalorder %s151, %s153
      %p157 = scmp.eq.s32.totalorder %s23, 0
      %p158 = por %p156, %p157
      %p159 = scmp.ne.s32.totalorder %s151, %s153
      %p160 = scmp.eq.s32.totalorder %s28, 1
      %p161 = por %p159, %p160
      %p162 = scmp.ne.s32.totalorder %s153, %s154
      %p163 = scmp.eq.s32.totalorder %s28, 0
      %p164 = por %p162, %p163
      %p165 = scmp.ne.s32.totalorder %s153, %s154
      %p166 = scmp.eq.s32.totalorder %s29, 1
      %p167 = por %p165, %p166
      %p169 = scmp.ne.s32.totalorder %s154, %s168
      %p170 = scmp.eq.s32.totalorder %s29, 0
      %p171 = por %p169, %p170
      %s173 = sadd.s32 %s172, 1
      %p176 = scmp.eq.s32.totalorder %s23, 1
      %p177 = scmp.ne.s32.totalorder %s172, %s174
      %p178 = scmp.eq.s32.totalorder %s23, 0
      %p179 = por %p177, %p178
      %p180 = scmp.ne.s32.totalorder %s172, %s174
      %p181 = scmp.eq.s32.totalorder %s28, 1
      %p182 = por %p180, %p181
      %p183 = scmp.ne.s32.totalorder %s174, %s175
      %p184 = scmp.eq.s32.totalorder %s28, 0
      %p185 = por %p183, %p184
      %p186 = scmp.ne.s32.totalorder %s174, %s175
      %p187 = scmp.eq.s32.totalorder %s29, 1
      %p188 = por %p186, %p187
      %p190 = scmp.ne.s32.totalorder %s175, %s189
      %p191 = scmp.eq.s32.totalorder %s29, 0
      %p192 = por %p190, %p191
      %s194 = sadd.s32 %s193, 1
      %p197 = scmp.eq.s32.totalorder %s23, 1
      %p198 = scmp.ne.s32.totalorder %s193, %s195
      %p199 = scmp.eq.s32.totalorder %s23, 0
      %p200 = por %p198, %p199
      %p201 = scmp.ne.s32.totalorder %s193, %s195
      %p202 = scmp.eq.s32.totalorder %s28, 1
      %p203 = por %p201, %p202
      %p204 = scmp.ne.s32.totalorder %s195, %s196
      %p205 = scmp.eq.s32.totalorder %s28, 0
      %p206 = por %p204, %p205
      %p207 = scmp.ne.s32.totalorder %s195, %s196
      %p208 = scmp.eq.s32.totalorder %s29, 1
      %p209 = por %p207, %p208
      %p211 = scmp.ne.s32.totalorder %s196, %s210
      %p212 = scmp.eq.s32.totalorder %s29, 0
      %p213 = por %p211, %p212
      %s215 = sadd.s32 %s214, 1
      %p218 = scmp.eq.s32.totalorder %s23, 1
      %p219 = scmp.ne.s32.totalorder %s214, %s216
      %p220 = scmp.eq.s32.totalorder %s23, 0
      %p221 = por %p219, %p220
      %p222 = scmp.ne.s32.totalorder %s214, %s216
      %p223 = scmp.eq.s32.totalorder %s28, 1
      %p224 = por %p222, %p223
      %p225 = scmp.ne.s32.totalorder %s216, %s217
      %p226 = scmp.eq.s32.totalorder %s28, 0
      %p227 = por %p225, %p226
      %p228 = scmp.ne.s32.totalorder %s216, %s217
      %p229 = scmp.eq.s32.totalorder %s29, 1
      %p230 = por %p228, %p229
      %p232 = scmp.ne.s32.totalorder %s217, %s231
      %p233 = scmp.eq.s32.totalorder %s29, 0
      %p234 = por %p232, %p233
      %s236 = sadd.s32 %s235, 1
      %p239 = scmp.eq.s32.totalorder %s23, 1
      %p240 = scmp.ne.s32.totalorder %s235, %s237
      %p241 = scmp.eq.s32.totalorder %s23, 0
      %p242 = por %p240, %p241
      %p243 = scmp.ne.s32.totalorder %s235, %s237
      %p244 = scmp.eq.s32.totalorder %s28, 1
      %p245 = por %p243, %p244
      %p246 = scmp.ne.s32.totalorder %s237, %s238
      %p247 = scmp.eq.s32.totalorder %s28, 0
      %p248 = por %p246, %p247
      %p249 = scmp.ne.s32.totalorder %s237, %s238
      %p250 = scmp.eq.s32.totalorder %s29, 1
      %p251 = por %p249, %p250
      %p253 = scmp.ne.s32.totalorder %s238, %s252
      %p254 = scmp.eq.s32.totalorder %s29, 0
      %p255 = por %p253, %p254
      %s257 = sadd.s32 %s256, 1
      %p260 = scmp.eq.s32.totalorder %s23, 1
      %p261 = scmp.ne.s32.totalorder %s256, %s258
      %p262 = scmp.eq.s32.totalorder %s23, 0
      %p263 = por %p261, %p262
      %p264 = scmp.ne.s32.totalorder %s256, %s258
      %p265 = scmp.eq.s32.totalorder %s28, 1
      %p266 = por %p264, %p265
      %p267 = scmp.ne.s32.totalorder %s258, %s259
      %p268 = scmp.eq.s32.totalorder %s28, 0
      %p269 = por %p267, %p268
      %p270 = scmp.ne.s32.totalorder %s258, %s259
      %p271 = scmp.eq.s32.totalorder %s29, 1
      %p272 = por %p270, %p271
      %p274 = scmp.ne.s32.totalorder %s259, %s273
      %p275 = scmp.eq.s32.totalorder %s29, 0
      %p276 = por %p274, %p275
      %s278 = sadd.s32 %s277, 1
      %p281 = scmp.eq.s32.totalorder %s23, 1
      %p282 = scmp.ne.s32.totalorder %s277, %s279
      %p283 = scmp.eq.s32.totalorder %s23, 0
      %p284 = por %p282, %p283
      %p285 = scmp.ne.s32.totalorder %s277, %s279
      %p286 = scmp.eq.s32.totalorder %s28, 1
      %p287 = por %p285, %p286
      %p288 = scmp.ne.s32.totalorder %s279, %s280
      %p289 = scmp.eq.s32.totalorder %s28, 0
      %p290 = por %p288, %p289
      %p291 = scmp.ne.s32.totalorder %s279, %s280
      %p292 = scmp.eq.s32.totalorder %s29, 1
      %p293 = por %p291, %p292
      %p295 = scmp.ne.s32.totalorder %s280, %s294
      %p296 = scmp.eq.s32.totalorder %s29, 0
      %p297 = por %p295, %p296
      %s299 = sadd.s32 %s298, 1
      %p302 = scmp.eq.s32.totalorder %s23, 1
      %p303 = scmp.ne.s32.totalorder %s298, %s300
      %p304 = scmp.eq.s32.totalorder %s23, 0
      %p305 = por %p303, %p304
      %p306 = scmp.ne.s32.totalorder %s298, %s300
      %p307 = scmp.eq.s32.totalorder %s28, 1
      %p308 = por %p306, %p307
      %p309 = scmp.ne.s32.totalorder %s300, %s301
      %p310 = scmp.eq.s32.totalorder %s28, 0
      %p311 = por %p309, %p310
      %p312 = scmp.ne.s32.totalorder %s300, %s301
      %p313 = scmp.eq.s32.totalorder %s29, 1
      %p314 = por %p312, %p313
      %p316 = scmp.ne.s32.totalorder %s301, %s315
      %p317 = scmp.eq.s32.totalorder %s29, 0
      %p318 = por %p316, %p317
      %s320 = sadd.s32 %s319, 1
      %p323 = scmp.eq.s32.totalorder %s23, 1
      %p324 = scmp.ne.s32.totalorder %s319, %s321
      %p325 = scmp.eq.s32.totalorder %s23, 0
      %p326 = por %p324, %p325
      %p327 = scmp.ne.s32.totalorder %s319, %s321
      %p328 = scmp.eq.s32.totalorder %s28, 1
      %p329 = por %p327, %p328
      %p330 = scmp.ne.s32.totalorder %s321, %s322
      %p331 = scmp.eq.s32.totalorder %s28, 0
      %p332 = por %p330, %p331
      %p333 = scmp.ne.s32.totalorder %s321, %s322
      %p334 = scmp.eq.s32.totalorder %s29, 1
      %p335 = por %p333, %p334
      %p337 = scmp.ne.s32.totalorder %s322, %s336
      %p338 = scmp.eq.s32.totalorder %s29, 0
      %p339 = por %p337, %p338
      %s341 = sadd.s32 %s340, 1
      %p344 = scmp.eq.s32.totalorder %s23, 1
      %p345 = scmp.ne.s32.totalorder %s340, %s342
      %p346 = scmp.eq.s32.totalorder %s23, 0
      %p347 = por %p345, %p346
      %p348 = scmp.ne.s32.totalorder %s340, %s342
      %p349 = scmp.eq.s32.totalorder %s28, 1
      %p350 = por %p348, %p349
      %p351 = scmp.ne.s32.totalorder %s342, %s343
      %p352 = scmp.eq.s32.totalorder %s28, 0
      %p353 = por %p351, %p352
      %p354 = scmp.ne.s32.totalorder %s342, %s343
      %p355 = scmp.eq.s32.totalorder %s29, 1
      %p356 = por %p354, %p355
      %p358 = scmp.ne.s32.totalorder %s343, %s357
      %p359 = scmp.eq.s32.totalorder %s29, 0
      %p360 = por %p358, %p359
      %s361 = ssub.s32 %s23, %s30
      %p362 = scmp.eq.s32.totalorder %s361, 0
      %s364 = sadd.s32 %s363, 1
      %s365 = scalar_select %p362, %s363, %s364
      %p368 = pneg %p362
      %p369 = scmp.eq.s32.totalorder %s23, 1
      %p370 = por %p368, %p369
      %p371 = scmp.ne.s32.totalorder %s363, %s366
      %p372 = scmp.eq.s32.totalorder %s23, 0
      %p373 = por %p371, %p372
      %p374 = scmp.ne.s32.totalorder %s363, %s366
      %p375 = scmp.eq.s32.totalorder %s28, 1
      %p376 = por %p374, %p375
      %p377 = scmp.ne.s32.totalorder %s366, %s367
      %p378 = scmp.eq.s32.totalorder %s28, 0
      %p379 = por %p377, %p378
      %p380 = scmp.ne.s32.totalorder %s366, %s367
      %p381 = scmp.eq.s32.totalorder %s29, 1
      %p382 = por %p380, %p381
      %p384 = scmp.ne.s32.totalorder %s367, %s383
      %p385 = scmp.eq.s32.totalorder %s29, 0
      %p386 = por %p384, %p385
      %p387 = scmp.le.s32.totalorder 1, %s23
      %p388 = scmp.lt.s32.totalorder %s23, 3
      %p389 = pnand %p387, %p388
      %p390 = pneg %p389
      // Predicated region
      $region9: #{imputer_forward.1} parent=5 // pred_check
        _
      $region10: #{imputer_forward.1} parent=5 // pred_check_branch
        %392 = sbr.rel (%p389) target = $region12
      $region11: #{imputer_forward.1} parent=5 // pred_region
        %s393 = ssub.s32 %s23, 1
        // Predicated region
        $region13: #{imputer_forward.1} parent=11 // pred_check
          %p394 = pneg %p122
        $region14: #{imputer_forward.1} parent=11 // pred_check_branch
          %396 = sbr.rel (%p394) target = $region16
        $region15: #{imputer_forward.1} parent=11 // pred_region
          _
        $region16: #{imputer_forward.1} parent=11 // pred_fallthru
          _
        // Predicated region
        $region17: #{imputer_forward.1} parent=11 // pred_check
          %p397 = pneg %p143
        $region18: #{imputer_forward.1} parent=11 // pred_check_branch
          %399 = sbr.rel (%p397) target = $region20
        $region19: #{imputer_forward.1} parent=11 // pred_region
          _
        $region20: #{imputer_forward.1} parent=11 // pred_fallthru
          _
        // Predicated region
        $region21: #{imputer_forward.1} parent=11 // pred_check
          %p400 = pneg %p164
        $region22: #{imputer_forward.1} parent=11 // pred_check_branch
          %402 = sbr.rel (%p400) target = $region24
        $region23: #{imputer_forward.1} parent=11 // pred_region
          %s404 = ssub.s32 16384, 16384
          %405 = vsyncadd [#allocation3], %s404
          %s406 = sshll.u32 [#allocation2], 4
          %s407 = int_to_ptr.vmem [resolvable:$true] %s406
          %412 = dma.hbm_to_vmem [thread:$0]  %s5, 16384, %s407, [#allocation3], 256, 256, 16
        $region24: #{imputer_forward.1} parent=11 // pred_fallthru
          _
        // Predicated region
        $region25: #{imputer_forward.1} parent=11 // pred_check
          %p413 = pneg %p185
        $region26: #{imputer_forward.1} parent=11 // pred_check_branch
          %415 = sbr.rel (%p413) target = $region28
        $region27: #{imputer_forward.1} parent=11 // pred_region
          _
        $region28: #{imputer_forward.1} parent=11 // pred_fallthru
          _
        // Predicated region
        $region29: #{imputer_forward.1} parent=11 // pred_check
          %p416 = pneg %p206
        $region30: #{imputer_forward.1} parent=11 // pred_check_branch
          %418 = sbr.rel (%p416) target = $region32
        $region31: #{imputer_forward.1} parent=11 // pred_region
          %s420 = ssub.s32 16384, 16384
          %421 = vsyncadd [#allocation5], %s420
          %s422 = sshll.u32 [#allocation4], 4
          %s423 = int_to_ptr.vmem [resolvable:$true] %s422
          %428 = dma.hbm_to_vmem [thread:$0]  %s7, 16384, %s423, [#allocation5], 256, 256, 16
        $region32: #{imputer_forward.1} parent=11 // pred_fallthru
          _
        // Predicated region
        $region33: #{imputer_forward.1} parent=11 // pred_check
          %p429 = pneg %p227
        $region34: #{imputer_forward.1} parent=11 // pred_check_branch
          %431 = sbr.rel (%p429) target = $region36
        $region35: #{imputer_forward.1} parent=11 // pred_region
          _
        $region36: #{imputer_forward.1} parent=11 // pred_fallthru
          _
        // Predicated region
        $region37: #{imputer_forward.1} parent=11 // pred_check
          %p432 = pneg %p248
        $region38: #{imputer_forward.1} parent=11 // pred_check_branch
          %434 = sbr.rel (%p432) target = $region40
        $region39: #{imputer_forward.1} parent=11 // pred_region
          %s436 = ssub.s32 8192, 8192
          %437 = vsyncadd [#allocation5], %s436
          %s438 = sshll.u32 [#allocation6], 4
          %s439 = int_to_ptr.vmem [resolvable:$true] %s438
          %444 = dma.hbm_to_vmem [thread:$0]  %s9, 8192, %s439, [#allocation5], 128, 128, 8
        $region40: #{imputer_forward.1} parent=11 // pred_fallthru
          _
        // Predicated region
        $region41: #{imputer_forward.1} parent=11 // pred_check
          %p445 = pneg %p269
        $region42: #{imputer_forward.1} parent=11 // pred_check_branch
          %447 = sbr.rel (%p445) target = $region44
        $region43: #{imputer_forward.1} parent=11 // pred_region
          _
        $region44: #{imputer_forward.1} parent=11 // pred_fallthru
          _
        // Predicated region
        $region45: #{imputer_forward.1} parent=11 // pred_check
          %p448 = pneg %p290
        $region46: #{imputer_forward.1} parent=11 // pred_check_branch
          %450 = sbr.rel (%p448) target = $region48
        $region47: #{imputer_forward.1} parent=11 // pred_region
          _
        $region48: #{imputer_forward.1} parent=11 // pred_fallthru
          _
        // Predicated region
        $region49: #{imputer_forward.1} parent=11 // pred_check
          %p451 = pneg %p311
        $region50: #{imputer_forward.1} parent=11 // pred_check_branch
          %453 = sbr.rel (%p451) target = $region52
        $region51: #{imputer_forward.1} parent=11 // pred_region
          _
        $region52: #{imputer_forward.1} parent=11 // pred_fallthru
          _
        // Predicated region
        $region53: #{imputer_forward.1} parent=11 // pred_check
          %p454 = pneg %p332
        $region54: #{imputer_forward.1} parent=11 // pred_check_branch
          %456 = sbr.rel (%p454) target = $region56
        $region55: #{imputer_forward.1} parent=11 // pred_region
          _
        $region56: #{imputer_forward.1} parent=11 // pred_fallthru
          _
        // Predicated region
        $region57: #{imputer_forward.1} parent=11 // pred_check
          %p457 = pneg %p353
        $region58: #{imputer_forward.1} parent=11 // pred_check_branch
          %459 = sbr.rel (%p457) target = $region60
        $region59: #{imputer_forward.1} parent=11 // pred_region
          _
        $region60: #{imputer_forward.1} parent=11 // pred_fallthru
          _
      $region12: #{imputer_forward.1} parent=5 // pred_fallthru
        _
      %p460 = scmp.lt.s32.totalorder %s23, 2
      // Predicated region
      $region61: #{imputer_forward.1} parent=5 // pred_check
        %p461 = pneg %p460
      $region62: #{imputer_forward.1} parent=5 // pred_check_branch
        %463 = sbr.rel (%p461) target = $region64
      $region63: #{imputer_forward.1} parent=5 // pred_region
        // Predicated region
        $region65: #{imputer_forward.1} parent=63 // pred_check
          %p464 = pneg %p43
        $region66: #{imputer_forward.1} parent=63 // pred_check_branch
          %466 = sbr.rel (%p464) target = $region68
        $region67: #{imputer_forward.1} parent=63 // pred_region
          %s467 = smul.u32 2, %s23
          %p468 = scmp.lt.s32.totalorder %s467, 3
          %s469 = scalar_select %p468, %s467, 3
          %s470 = smul.addr %s469, 8
          %s471 = scalar_lea.vmem %s0, %s470
          %s472 = smul.u32 2, %s23
        $region68: #{imputer_forward.1} parent=63 // pred_fallthru
          _
        // Predicated region
        $region69: #{imputer_forward.1} parent=63 // pred_check
          %p473 = pneg %p69
        $region70: #{imputer_forward.1} parent=63 // pred_check_branch
          %475 = sbr.rel (%p473) target = $region72
        $region71: #{imputer_forward.1} parent=63 // pred_region
          %s476 = smul.u32 2, %s23
          %p477 = scmp.lt.s32.totalorder %s476, 3
          %s478 = scalar_select %p477, %s476, 3
          %s479 = smul.addr %s478, 8
          %s480 = scalar_lea.vmem %s1, %s479
          %s481 = smul.u32 2, %s23
        $region72: #{imputer_forward.1} parent=63 // pred_fallthru
          _
        // Predicated region
        $region73: #{imputer_forward.1} parent=63 // pred_check
          %p482 = pneg %p95
        $region74: #{imputer_forward.1} parent=63 // pred_check_branch
          %484 = sbr.rel (%p482) target = $region76
        $region75: #{imputer_forward.1} parent=63 // pred_region
          %s485 = smul.u32 2, %s23
          %p486 = scmp.lt.s32.totalorder %s485, 3
          %s487 = scalar_select %p486, %s485, 3
          %s488 = smul.addr %s487, 8
          %s489 = scalar_lea.vmem %s2, %s488
          %s490 = smul.u32 2, %s23
        $region76: #{imputer_forward.1} parent=63 // pred_fallthru
          _
      $region64: #{imputer_forward.1} parent=5 // pred_fallthru
        _
      %p491 = scmp.le.s32.totalorder 1, %s23
      %p492 = scmp.lt.s32.totalorder %s23, 3
      %p493 = pnand %p491, %p492
      %p494 = pneg %p493
      // Predicated region
      $region77: #{imputer_forward.1} parent=5 // pred_check
        _
      $region78: #{imputer_forward.1} parent=5 // pred_check_branch
        %496 = sbr.rel (%p493) target = $region80
      $region79: #{imputer_forward.1} parent=5 // pred_region
        %s497 = ssub.s32 %s23, 1
        // Predicated region
        $region81: #{imputer_forward.1} parent=79 // pred_check
          %p498 = pneg %p164
        $region82: #{imputer_forward.1} parent=79 // pred_check_branch
          %500 = sbr.rel (%p498) target = $region84
        $region83: #{imputer_forward.1} parent=79 // pred_region
          %501 = dma.done [#allocation3], 16384
        $region84: #{imputer_forward.1} parent=79 // pred_fallthru
          _
        // Predicated region
        $region85: #{imputer_forward.1} parent=79 // pred_check
          %p502 = pneg %p206
        $region86: #{imputer_forward.1} parent=79 // pred_check_branch
          %504 = sbr.rel (%p502) target = $region88
        $region87: #{imputer_forward.1} parent=79 // pred_region
          %505 = dma.done [#allocation5], 16384
        $region88: #{imputer_forward.1} parent=79 // pred_fallthru
          _
        // Predicated region
        $region89: #{imputer_forward.1} parent=79 // pred_check
          %p506 = pneg %p248
        $region90: #{imputer_forward.1} parent=79 // pred_check_branch
          %508 = sbr.rel (%p506) target = $region92
        $region91: #{imputer_forward.1} parent=79 // pred_region
          %509 = dma.done [#allocation5], 8192
        $region92: #{imputer_forward.1} parent=79 // pred_fallthru
          _
        %s510 = smul.u32 2, %s28
        %p511 = scmp.lt.s32.totalorder %s510, 3
        %s512 = scalar_select %p511, %s510, 3
        %s513 = smul.addr %s512, 8
        %s514 = scalar_lea.vmem %s0, %s513
        %p515 = pneg %p49
        %p516 = pneg %p46
        %s517 = smul.u32 2, %s28
        %p518 = scmp.lt.s32.totalorder %s517, 3
        %s519 = scalar_select %p518, %s517, 3
        %s520 = smul.addr %s519, 8
        %s521 = scalar_lea.vmem %s1, %s520
        %p522 = pneg %p75
        %p523 = pneg %p72
        %s524 = smul.u32 2, %s28
        %p525 = scmp.lt.s32.totalorder %s524, 3
        %s526 = scalar_select %p525, %s524, 3
        %s527 = smul.addr %s526, 8
        %s528 = scalar_lea.vmem %s2, %s527
        %p529 = pneg %p101
        %p530 = pneg %p98
        %p531 = pneg %p122
        %p532 = pneg %p119
        %p533 = pneg %p143
        %p534 = pneg %p140
        %p535 = pneg %p164
        %p536 = pneg %p161
        %p537 = pneg %p185
        %p538 = pneg %p182
        %p539 = pneg %p206
        %p540 = pneg %p203
        %p541 = pneg %p227
        %p542 = pneg %p224
        %p543 = pneg %p248
        %p544 = pneg %p245
        %p545 = pneg %p269
        %p546 = pneg %p266
        %p547 = pneg %p290
        %p548 = pneg %p287
        %p549 = pneg %p311
        %p550 = pneg %p308
        %p551 = pneg %p332
        %p552 = pneg %p329
        %p553 = pneg %p353
        %p554 = pneg %p350
        %p555 = pneg %p379
        %p556 = pneg %p376
        %s557 = smul.u32 2, %s28
        %p558 = scmp.lt.s32.totalorder %s557, 3
        %s559 = scalar_select %p558, %s557, 3
        %s560 = smul.addr %s559, 8
        %s561 = scalar_lea.vmem %s15, %s560
        %s562 = smul.u32 2, %s28
        %p563 = scmp.lt.s32.totalorder %s562, 3
        %s564 = scalar_select %p563, %s562, 3
        %s565 = smul.addr %s564, 8
        %s566 = scalar_lea.vmem %s0, %s565
        %s567 = smul.u32 2, %s28
        %s568 = smul.u32 2, %s28
        %p569 = scmp.lt.s32.totalorder %s568, 3
        %s570 = scalar_select %p569, %s568, 3
        %s571 = smul.addr %s570, 8
        %s572 = scalar_lea.vmem %s1, %s571
        %s573 = smul.u32 2, %s28
        %s574 = smul.u32 2, %s28
        %p575 = scmp.lt.s32.totalorder %s574, 3
        %s576 = scalar_select %p575, %s574, 3
        %s577 = smul.addr %s576, 8
        %s578 = scalar_lea.vmem %s2, %s577
        %s579 = smul.u32 2, %s28
        %s580 = smul.u32 2, %s28
        %p581 = scmp.lt.s32.totalorder %s580, 3
        %s582 = scalar_select %p581, %s580, 3
        %s583 = smul.addr %s582, 8
        %s584 = scalar_lea.vmem %s15, %s583
        %s585 = smul.u32 2, %s28
        %v587 = vld [vmem:[%s566] sm:$0xff]
        %v588 = vld [vmem:[%s566 + $0x8] sm:$0xff]
        %v589 = vld [vmem:[%s572] sm:$0xff]
        %v590 = vld [vmem:[%s572 + $0x8] sm:$0xff]
        %v591 = vld [vmem:[%s578] sm:$0xff]
        %v592 = vld [vmem:[%s578 + $0x8] sm:$0xff]
        %v593 = vmul.f32 %v587, %v589
        %v594 = vmul.f32 %v588, %v590
        %v595 = vsub.f32 1.0, %v589
        %v596 = vsub.f32 1.0, %v590
        %v597 = vmul.f32 %v591, %v595
        %v598 = vmul.f32 %v592, %v596
        %v599 = vadd.f32 %v593, %v597
        %v600 = vadd.f32 %v594, %v598
        %v601 = vpack.c.bf16 %v600, %v599
        %v602 = vld [vmem:[%s3] sm:$0xff]
        %v603 = vld [vmem:[%s3 + $0x8] sm:$0xff]
        %v604 = vld [vmem:[%s3 + $0x10] sm:$0xff]
        %v605 = vld [vmem:[%s3 + $0x18] sm:$0xff]
        %v610 = vunpack.c.l.b16 %v602
        %v611 = vunpack.c.h.b16 %v602
        %v612 = vunpack.c.l.b16 %v603
        %v613 = vunpack.c.h.b16 %v603
        %v614 = vunpack.c.l.b16 %v604
        %v615 = vunpack.c.h.b16 %v604
        %v616 = vunpack.c.l.b16 %v605
        %v617 = vunpack.c.h.b16 %v605
        %v618 = vpack.c.b16 %v614, %v610
        %v619 = vpack.c.b16 %v615, %v611
        %v620 = vpack.c.b16 %v616, %v612
        %v621 = vpack.c.b16 %v617, %v613
        %vm626 = vcmask 130048
        %v628 = vsel %vm626, %v601, 0
        %630 = vmatprep.subr.bf16.mxu0 %v619
        %631 = vmatpush1.bf16.msra.mxu0 %v618
        %632 = vmatprep.subr.bf16.mxu0 0
        %633 = vmatpush1.bf16.msra.mxu0 0
        %634 = vmatprep.subr.bf16.mxu0 0
        %635 = vmatpush1.bf16.msra.mxu0 0
        %636 = vmatprep.subr.bf16.mxu0 0
        %637 = vmatpush1.bf16.msra.mxu0 0
        %638 = vmatprep.subr.bf16.mxu0 0
        %639 = vmatpush1.bf16.msra.mxu0 0
        %640 = vmatprep.subr.bf16.mxu0 0
        %641 = vmatpush1.bf16.msra.mxu0 0
        %642 = vmatprep.subr.bf16.mxu0 0
        %643 = vmatpush1.bf16.msra.mxu0 0
        %644 = vmatprep.subr.bf16.mxu0 0
        %645 = vmatpush1.bf16.msra.mxu0 0
        %646 = vmatprep.subr.bf16.mxu0 0
        %647 = vmatpush1.bf16.msra.mxu0 0
        %648 = vmatprep.subr.bf16.mxu0 0
        %649 = vmatpush1.bf16.msra.mxu0 0
        %650 = vmatprep.subr.bf16.mxu0 0
        %651 = vmatpush1.bf16.msra.mxu0 0
        %652 = vmatprep.subr.bf16.mxu0 0
        %653 = vmatpush1.bf16.msra.mxu0 0
        %654 = vmatprep.subr.bf16.mxu0 0
        %655 = vmatpush1.bf16.msra.mxu0 0
        %656 = vmatprep.subr.bf16.mxu0 0
        %657 = vmatpush1.bf16.msra.mxu0 0
        %658 = vmatprep.subr.bf16.mxu0 0
        %659 = vmatpush1.bf16.msra.mxu0 0
        %660 = vmatprep.subr.bf16.mxu0 0
        %661 = vmatpush1.bf16.msra.mxu0 0
        %662 = vmatprep.mubr.bf16.mxu0 0
        %663 = vmatmul.mubr.bf16.gmra.mrb[0].mxu0 %v628
        %v664 = vpop.f32.mrb[0].mxu0
        %v665 = vadd.f32 0.0, %v664
        %v666 = vpop.f32.mrb[0].mxu0
        %v667 = vadd.f32 0.0, %v666
        %v668 = vpop.f32.mrb[0].mxu0
        %v669 = vadd.f32 0.0, %v668
        %v670 = vpop.f32.mrb[0].mxu0
        %v671 = vadd.f32 0.0, %v670
        %672 = vdwg.mxu0
        %673 = vmatprep.subr.bf16.mxu0 %v621
        %674 = vmatpush1.bf16.msra.mxu0 %v620
        %675 = vmatprep.subr.bf16.mxu0 0
        %676 = vmatpush1.bf16.msra.mxu0 0
        %677 = vmatprep.subr.bf16.mxu0 0
        %678 = vmatpush1.bf16.msra.mxu0 0
        %679 = vmatprep.subr.bf16.mxu0 0
        %680 = vmatpush1.bf16.msra.mxu0 0
        %681 = vmatprep.subr.bf16.mxu0 0
        %682 = vmatpush1.bf16.msra.mxu0 0
        %683 = vmatprep.subr.bf16.mxu0 0
        %684 = vmatpush1.bf16.msra.mxu0 0
        %685 = vmatprep.subr.bf16.mxu0 0
        %686 = vmatpush1.bf16.msra.mxu0 0
        %687 = vmatprep.subr.bf16.mxu0 0
        %688 = vmatpush1.bf16.msra.mxu0 0
        %689 = vmatprep.subr.bf16.mxu0 0
        %690 = vmatpush1.bf16.msra.mxu0 0
        %691 = vmatprep.subr.bf16.mxu0 0
        %692 = vmatpush1.bf16.msra.mxu0 0
        %693 = vmatprep.subr.bf16.mxu0 0
        %694 = vmatpush1.bf16.msra.mxu0 0
        %695 = vmatprep.subr.bf16.mxu0 0
        %696 = vmatpush1.bf16.msra.mxu0 0
        %697 = vmatprep.subr.bf16.mxu0 0
        %698 = vmatpush1.bf16.msra.mxu0 0
        %699 = vmatprep.subr.bf16.mxu0 0
        %700 = vmatpush1.bf16.msra.mxu0 0
        %701 = vmatprep.subr.bf16.mxu0 0
        %702 = vmatpush1.bf16.msra.mxu0 0
        %703 = vmatprep.subr.bf16.mxu0 0
        %704 = vmatpush1.bf16.msra.mxu0 0
        %705 = vmatprep.mubr.bf16.mxu0 0
        %706 = vmatmul.mubr.bf16.gmra.mrb[0].mxu0 %v628
        %v707 = vpop.f32.mrb[0].mxu0
        %v708 = vadd.f32 0.0, %v707
        %v709 = vpop.f32.mrb[0].mxu0
        %v710 = vadd.f32 0.0, %v709
        %v711 = vpop.f32.mrb[0].mxu0
        %v712 = vadd.f32 0.0, %v711
        %v713 = vpop.f32.mrb[0].mxu0
        %v714 = vadd.f32 0.0, %v713
        %715 = vdwg.mxu0
        %v716 = vpack.c.bf16 %v669, %v665
        %v717 = vpack.c.bf16 %v671, %v667
        %v718 = vpack.c.bf16 %v712, %v708
        %v719 = vpack.c.bf16 %v714, %v710
        %v720 = vld [vmem:[%s4] sm:$0xf]
        %v722 = vlaneseq
        %v723 = vshrl.u32 %v722, 7
        %v724 = vsub.s32 0, %v723
        %v725 = vrot.slane %v720, %v724
        %v726 = vlaneseq
        %v727 = vshrl.u32 %v726, 7
        %v728 = vsub.s32 1, %v727
        %v729 = vrot.slane %v720, %v728
        %v730 = vlaneseq
        %v731 = vshrl.u32 %v730, 7
        %v732 = vsub.s32 2, %v731
        %v733 = vrot.slane %v720, %v732
        %v734 = vlaneseq
        %v735 = vshrl.u32 %v734, 7
        %v736 = vsub.s32 3, %v735
        %v737 = vrot.slane %v720, %v736
        %v742 = vpack.c.bf16 %v725, %v725
        %v743 = vpack.c.bf16 %v729, %v729
        %v744 = vpack.c.bf16 %v733, %v733
        %v745 = vpack.c.bf16 %v737, %v737
        %v747 = vpack.i.b16 %v742, %v742
        %v749 = vlaneseq
        %v750 = vshrl.u32 %v749, 7
        %v751 = vsub.s32 0, %v750
        %v752 = vrot.slane %v747, %v751
        %v754 = vpack.i.b16 %v743, %v743
        %v756 = vlaneseq
        %v757 = vshrl.u32 %v756, 7
        %v758 = vsub.s32 0, %v757
        %v759 = vrot.slane %v754, %v758
        %v761 = vpack.i.b16 %v744, %v744
        %v763 = vlaneseq
        %v764 = vshrl.u32 %v763, 7
        %v765 = vsub.s32 0, %v764
        %v766 = vrot.slane %v761, %v765
        %v768 = vpack.i.b16 %v745, %v745
        %v770 = vlaneseq
        %v771 = vshrl.u32 %v770, 7
        %v772 = vsub.s32 0, %v771
        %v773 = vrot.slane %v768, %v772
        %v774 = vadd.bf16 %v716, %v752
        %v775 = vadd.bf16 %v717, %v759
        %v776 = vadd.bf16 %v718, %v766
        %v777 = vadd.bf16 %v719, %v773
        %v778 = vmax.bf16 %v774, 0
        %v779 = vmax.bf16 %v775, 0
        %v780 = vmax.bf16 %v776, 0
        %v781 = vmax.bf16 %v777, 0
        %v782 = vld [vmem:[#allocation2] sm:$0xff]
        %v783 = vld [vmem:[#allocation2 + $0x8] sm:$0xff]
        %v784 = vld [vmem:[#allocation2 + $0x10] sm:$0xff]
        %v785 = vld [vmem:[#allocation2 + $0x18] sm:$0xff]
        %v786 = vld [vmem:[#allocation2 + $0x20] sm:$0xff]
        %v787 = vld [vmem:[#allocation2 + $0x28] sm:$0xff]
        %v788 = vld [vmem:[#allocation2 + $0x30] sm:$0xff]
        %v789 = vld [vmem:[#allocation2 + $0x38] sm:$0xff]
        %v790 = vld [vmem:[#allocation2 + $0x40] sm:$0xff]
        %v791 = vld [vmem:[#allocation2 + $0x48] sm:$0xff]
        %v792 = vld [vmem:[#allocation2 + $0x50] sm:$0xff]
        %v793 = vld [vmem:[#allocation2 + $0x58] sm:$0xff]
        %v794 = vld [vmem:[#allocation2 + $0x60] sm:$0xff]
        %v795 = vld [vmem:[#allocation2 + $0x68] sm:$0xff]
        %v796 = vld [vmem:[#allocation2 + $0x70] sm:$0xff]
        %v797 = vld [vmem:[#allocation2 + $0x78] sm:$0xff]
        %v798 = vld [vmem:[#allocation2 + $0x80] sm:$0xff]
        %v799 = vld [vmem:[#allocation2 + $0x88] sm:$0xff]
        %v800 = vld [vmem:[#allocation2 + $0x90] sm:$0xff]
        %v801 = vld [vmem:[#allocation2 + $0x98] sm:$0xff]
        %v802 = vld [vmem:[#allocation2 + $0xa0] sm:$0xff]
        %v803 = vld [vmem:[#allocation2 + $0xa8] sm:$0xff]
        %v804 = vld [vmem:[#allocation2 + $0xb0] sm:$0xff]
        %v805 = vld [vmem:[#allocation2 + $0xb8] sm:$0xff]
        %v806 = vld [vmem:[#allocation2 + $0xc0] sm:$0xff]
        %v807 = vld [vmem:[#allocation2 + $0xc8] sm:$0xff]
        %v808 = vld [vmem:[#allocation2 + $0xd0] sm:$0xff]
        %v809 = vld [vmem:[#allocation2 + $0xd8] sm:$0xff]
        %v810 = vld [vmem:[#allocation2 + $0xe0] sm:$0xff]
        %v811 = vld [vmem:[#allocation2 + $0xe8] sm:$0xff]
        %v812 = vld [vmem:[#allocation2 + $0xf0] sm:$0xff]
        %v813 = vld [vmem:[#allocation2 + $0xf8] sm:$0xff]
        %v814 = vld [vmem:[#allocation2 + $0x100] sm:$0xff]
        %v815 = vld [vmem:[#allocation2 + $0x108] sm:$0xff]
        %v816 = vld [vmem:[#allocation2 + $0x110] sm:$0xff]
        %v817 = vld [vmem:[#allocation2 + $0x118] sm:$0xff]
        %v818 = vld [vmem:[#allocation2 + $0x120] sm:$0xff]
        %v819 = vld [vmem:[#allocation2 + $0x128] sm:$0xff]
        %v820 = vld [vmem:[#allocation2 + $0x130] sm:$0xff]
        %v821 = vld [vmem:[#allocation2 + $0x138] sm:$0xff]
        %v822 = vld [vmem:[#allocation2 + $0x140] sm:$0xff]
        %v823 = vld [vmem:[#allocation2 + $0x148] sm:$0xff]
        %v824 = vld [vmem:[#allocation2 + $0x150] sm:$0xff]
        %v825 = vld [vmem:[#allocation2 + $0x158] sm:$0xff]
        %v826 = vld [vmem:[#allocation2 + $0x160] sm:$0xff]
        %v827 = vld [vmem:[#allocation2 + $0x168] sm:$0xff]
        %v828 = vld [vmem:[#allocation2 + $0x170] sm:$0xff]
        %v829 = vld [vmem:[#allocation2 + $0x178] sm:$0xff]
        %v830 = vld [vmem:[#allocation2 + $0x180] sm:$0xff]
        %v831 = vld [vmem:[#allocation2 + $0x188] sm:$0xff]
        %v832 = vld [vmem:[#allocation2 + $0x190] sm:$0xff]
        %v833 = vld [vmem:[#allocation2 + $0x198] sm:$0xff]
        %v834 = vld [vmem:[#allocation2 + $0x1a0] sm:$0xff]
        %v835 = vld [vmem:[#allocation2 + $0x1a8] sm:$0xff]
        %v836 = vld [vmem:[#allocation2 + $0x1b0] sm:$0xff]
        %v837 = vld [vmem:[#allocation2 + $0x1b8] sm:$0xff]
        %v838 = vld [vmem:[#allocation2 + $0x1c0] sm:$0xff]
        %v839 = vld [vmem:[#allocation2 + $0x1c8] sm:$0xff]
        %v840 = vld [vmem:[#allocation2 + $0x1d0] sm:$0xff]
        %v841 = vld [vmem:[#allocation2 + $0x1d8] sm:$0xff]
        %v842 = vld [vmem:[#allocation2 + $0x1e0] sm:$0xff]
        %v843 = vld [vmem:[#allocation2 + $0x1e8] sm:$0xff]
        %v844 = vld [vmem:[#allocation2 + $0x1f0] sm:$0xff]
        %v845 = vld [vmem:[#allocation2 + $0x1f8] sm:$0xff]
        %v846 = vld [vmem:[#allocation2 + $0x200] sm:$0xff]
        %v847 = vld [vmem:[#allocation2 + $0x208] sm:$0xff]
        %v848 = vld [vmem:[#allocation2 + $0x210] sm:$0xff]
        %v849 = vld [vmem:[#allocation2 + $0x218] sm:$0xff]
        %v850 = vld [vmem:[#allocation2 + $0x220] sm:$0xff]
        %v851 = vld [vmem:[#allocation2 + $0x228] sm:$0xff]
        %v852 = vld [vmem:[#allocation2 + $0x230] sm:$0xff]
        %v853 = vld [vmem:[#allocation2 + $0x238] sm:$0xff]
        %v854 = vld [vmem:[#allocation2 + $0x240] sm:$0xff]
        %v855 = vld [vmem:[#allocation2 + $0x248] sm:$0xff]
        %v856 = vld [vmem:[#allocation2 + $0x250] sm:$0xff]
        %v857 = vld [vmem:[#allocation2 + $0x258] sm:$0xff]
        %v858 = vld [vmem:[#allocation2 + $0x260] sm:$0xff]
        %v859 = vld [vmem:[#allocation2 + $0x268] sm:$0xff]
        %v860 = vld [vmem:[#allocation2 + $0x270] sm:$0xff]
        %v861 = vld [vmem:[#allocation2 + $0x278] sm:$0xff]
        %v862 = vld [vmem:[#allocation2 + $0x280] sm:$0xff]
        %v863 = vld [vmem:[#allocation2 + $0x288] sm:$0xff]
        %v864 = vld [vmem:[#allocation2 + $0x290] sm:$0xff]
        %v865 = vld [vmem:[#allocation2 + $0x298] sm:$0xff]
        %v866 = vld [vmem:[#allocation2 + $0x2a0] sm:$0xff]
        %v867 = vld [vmem:[#allocation2 + $0x2a8] sm:$0xff]
        %v868 = vld [vmem:[#allocation2 + $0x2b0] sm:$0xff]
        %v869 = vld [vmem:[#allocation2 + $0x2b8] sm:$0xff]
        %v870 = vld [vmem:[#allocation2 + $0x2c0] sm:$0xff]
        %v871 = vld [vmem:[#allocation2 + $0x2c8] sm:$0xff]
        %v872 = vld [vmem:[#allocation2 + $0x2d0] sm:$0xff]
        %v873 = vld [vmem:[#allocation2 + $0x2d8] sm:$0xff]
        %v874 = vld [vmem:[#allocation2 + $0x2e0] sm:$0xff]
        %v875 = vld [vmem:[#allocation2 + $0x2e8] sm:$0xff]
        %v876 = vld [vmem:[#allocation2 + $0x2f0] sm:$0xff]
        %v877 = vld [vmem:[#allocation2 + $0x2f8] sm:$0xff]
        %v878 = vld [vmem:[#allocation2 + $0x300] sm:$0xff]
        %v879 = vld [vmem:[#allocation2 + $0x308] sm:$0xff]
        %v880 = vld [vmem:[#allocation2 + $0x310] sm:$0xff]
        %v881 = vld [vmem:[#allocation2 + $0x318] sm:$0xff]
        %v882 = vld [vmem:[#allocation2 + $0x320] sm:$0xff]
        %v883 = vld [vmem:[#allocation2 + $0x328] sm:$0xff]
        %v884 = vld [vmem:[#allocation2 + $0x330] sm:$0xff]
        %v885 = vld [vmem:[#allocation2 + $0x338] sm:$0xff]
        %v886 = vld [vmem:[#allocation2 + $0x340] sm:$0xff]
        %v887 = vld [vmem:[#allocation2 + $0x348] sm:$0xff]
        %v888 = vld [vmem:[#allocation2 + $0x350] sm:$0xff]
        %v889 = vld [vmem:[#allocation2 + $0x358] sm:$0xff]
        %v890 = vld [vmem:[#allocation2 + $0x360] sm:$0xff]
        %v891 = vld [vmem:[#allocation2 + $0x368] sm:$0xff]
        %v892 = vld [vmem:[#allocation2 + $0x370] sm:$0xff]
        %v893 = vld [vmem:[#allocation2 + $0x378] sm:$0xff]
        %v894 = vld [vmem:[#allocation2 + $0x380] sm:$0xff]
        %v895 = vld [vmem:[#allocation2 + $0x388] sm:$0xff]
        %v896 = vld [vmem:[#allocation2 + $0x390] sm:$0xff]
        %v897 = vld [vmem:[#allocation2 + $0x398] sm:$0xff]
        %v898 = vld [vmem:[#allocation2 + $0x3a0] sm:$0xff]
        %v899 = vld [vmem:[#allocation2 + $0x3a8] sm:$0xff]
        %v900 = vld [vmem:[#allocation2 + $0x3b0] sm:$0xff]
        %v901 = vld [vmem:[#allocation2 + $0x3b8] sm:$0xff]
        %v902 = vld [vmem:[#allocation2 + $0x3c0] sm:$0xff]
        %v903 = vld [vmem:[#allocation2 + $0x3c8] sm:$0xff]
        %v904 = vld [vmem:[#allocation2 + $0x3d0] sm:$0xff]
        %v905 = vld [vmem:[#allocation2 + $0x3d8] sm:$0xff]
        %v906 = vld [vmem:[#allocation2 + $0x3e0] sm:$0xff]
        %v907 = vld [vmem:[#allocation2 + $0x3e8] sm:$0xff]
        %v908 = vld [vmem:[#allocation2 + $0x3f0] sm:$0xff]
        %v909 = vld [vmem:[#allocation2 + $0x3f8] sm:$0xff]
        %v1038 = vunpack.c.l.b16 %v782
        %v1039 = vunpack.c.h.b16 %v782
        %v1040 = vunpack.c.l.b16 %v783
        %v1041 = vunpack.c.h.b16 %v783
        %v1042 = vunpack.c.l.b16 %v784
        %v1043 = vunpack.c.h.b16 %v784
        %v1044 = vunpack.c.l.b16 %v785
        %v1045 = vunpack.c.h.b16 %v785
        %v1046 = vunpack.c.l.b16 %v786
        %v1047 = vunpack.c.h.b16 %v786
        %v1048 = vunpack.c.l.b16 %v787
        %v1049 = vunpack.c.h.b16 %v787
        %v1050 = vunpack.c.l.b16 %v788
        %v1051 = vunpack.c.h.b16 %v788
        %v1052 = vunpack.c.l.b16 %v789
        %v1053 = vunpack.c.h.b16 %v789
        %v1054 = vunpack.c.l.b16 %v790
        %v1055 = vunpack.c.h.b16 %v790
        %v1056 = vunpack.c.l.b16 %v791
        %v1057 = vunpack.c.h.b16 %v791
        %v1058 = vunpack.c.l.b16 %v792
        %v1059 = vunpack.c.h.b16 %v792
        %v1060 = vunpack.c.l.b16 %v793
        %v1061 = vunpack.c.h.b16 %v793
        %v1062 = vunpack.c.l.b16 %v794
        %v1063 = vunpack.c.h.b16 %v794
        %v1064 = vunpack.c.l.b16 %v795
        %v1065 = vunpack.c.h.b16 %v795
        %v1066 = vunpack.c.l.b16 %v796
        %v1067 = vunpack.c.h.b16 %v796
        %v1068 = vunpack.c.l.b16 %v797
        %v1069 = vunpack.c.h.b16 %v797
        %v1070 = vunpack.c.l.b16 %v798
        %v1071 = vunpack.c.h.b16 %v798
        %v1072 = vunpack.c.l.b16 %v799
        %v1073 = vunpack.c.h.b16 %v799
        %v1074 = vunpack.c.l.b16 %v800
        %v1075 = vunpack.c.h.b16 %v800
        %v1076 = vunpack.c.l.b16 %v801
        %v1077 = vunpack.c.h.b16 %v801
        %v1078 = vunpack.c.l.b16 %v802
        %v1079 = vunpack.c.h.b16 %v802
        %v1080 = vunpack.c.l.b16 %v803
        %v1081 = vunpack.c.h.b16 %v803
        %v1082 = vunpack.c.l.b16 %v804
        %v1083 = vunpack.c.h.b16 %v804
        %v1084 = vunpack.c.l.b16 %v805
        %v1085 = vunpack.c.h.b16 %v805
        %v1086 = vunpack.c.l.b16 %v806
        %v1087 = vunpack.c.h.b16 %v806
        %v1088 = vunpack.c.l.b16 %v807
        %v1089 = vunpack.c.h.b16 %v807
        %v1090 = vunpack.c.l.b16 %v808
        %v1091 = vunpack.c.h.b16 %v808
        %v1092 = vunpack.c.l.b16 %v809
        %v1093 = vunpack.c.h.b16 %v809
        %v1094 = vunpack.c.l.b16 %v810
        %v1095 = vunpack.c.h.b16 %v810
        %v1096 = vunpack.c.l.b16 %v811
        %v1097 = vunpack.c.h.b16 %v811
        %v1098 = vunpack.c.l.b16 %v812
        %v1099 = vunpack.c.h.b16 %v812
        %v1100 = vunpack.c.l.b16 %v813
        %v1101 = vunpack.c.h.b16 %v813
        %v1102 = vunpack.c.l.b16 %v814
        %v1103 = vunpack.c.h.b16 %v814
        %v1104 = vunpack.c.l.b16 %v815
        %v1105 = vunpack.c.h.b16 %v815
        %v1106 = vunpack.c.l.b16 %v816
        %v1107 = vunpack.c.h.b16 %v816
        %v1108 = vunpack.c.l.b16 %v817
        %v1109 = vunpack.c.h.b16 %v817
        %v1110 = vunpack.c.l.b16 %v818
        %v1111 = vunpack.c.h.b16 %v818
        %v1112 = vunpack.c.l.b16 %v819
        %v1113 = vunpack.c.h.b16 %v819
        %v1114 = vunpack.c.l.b16 %v820
        %v1115 = vunpack.c.h.b16 %v820
        %v1116 = vunpack.c.l.b16 %v821
        %v1117 = vunpack.c.h.b16 %v821
        %v1118 = vunpack.c.l.b16 %v822
        %v1119 = vunpack.c.h.b16 %v822
        %v1120 = vunpack.c.l.b16 %v823
        %v1121 = vunpack.c.h.b16 %v823
        %v1122 = vunpack.c.l.b16 %v824
        %v1123 = vunpack.c.h.b16 %v824
        %v1124 = vunpack.c.l.b16 %v825
        %v1125 = vunpack.c.h.b16 %v825
        %v1126 = vunpack.c.l.b16 %v826
        %v1127 = vunpack.c.h.b16 %v826
        %v1128 = vunpack.c.l.b16 %v827
        %v1129 = vunpack.c.h.b16 %v827
        %v1130 = vunpack.c.l.b16 %v828
        %v1131 = vunpack.c.h.b16 %v828
        %v1132 = vunpack.c.l.b16 %v829
        %v1133 = vunpack.c.h.b16 %v829
        %v1134 = vunpack.c.l.b16 %v830
        %v1135 = vunpack.c.h.b16 %v830
        %v1136 = vunpack.c.l.b16 %v831
        %v1137 = vunpack.c.h.b16 %v831
        %v1138 = vunpack.c.l.b16 %v832
        %v1139 = vunpack.c.h.b16 %v832
        %v1140 = vunpack.c.l.b16 %v833
        %v1141 = vunpack.c.h.b16 %v833
        %v1142 = vunpack.c.l.b16 %v834
        %v1143 = vunpack.c.h.b16 %v834
        %v1144 = vunpack.c.l.b16 %v835
        %v1145 = vunpack.c.h.b16 %v835
        %v1146 = vunpack.c.l.b16 %v836
        %v1147 = vunpack.c.h.b16 %v836
        %v1148 = vunpack.c.l.b16 %v837
        %v1149 = vunpack.c.h.b16 %v837
        %v1150 = vunpack.c.l.b16 %v838
        %v1151 = vunpack.c.h.b16 %v838
        %v1152 = vunpack.c.l.b16 %v839
        %v1153 = vunpack.c.h.b16 %v839
        %v1154 = vunpack.c.l.b16 %v840
        %v1155 = vunpack.c.h.b16 %v840
        %v1156 = vunpack.c.l.b16 %v841
        %v1157 = vunpack.c.h.b16 %v841
        %v1158 = vunpack.c.l.b16 %v842
        %v1159 = vunpack.c.h.b16 %v842
        %v1160 = vunpack.c.l.b16 %v843
        %v1161 = vunpack.c.h.b16 %v843
        %v1162 = vunpack.c.l.b16 %v844
        %v1163 = vunpack.c.h.b16 %v844
        %v1164 = vunpack.c.l.b16 %v845
        %v1165 = vunpack.c.h.b16 %v845
        %v1166 = vunpack.c.l.b16 %v846
        %v1167 = vunpack.c.h.b16 %v846
        %v1168 = vunpack.c.l.b16 %v847
        %v1169 = vunpack.c.h.b16 %v847
        %v1170 = vunpack.c.l.b16 %v848
        %v1171 = vunpack.c.h.b16 %v848
        %v1172 = vunpack.c.l.b16 %v849
        %v1173 = vunpack.c.h.b16 %v849
        %v1174 = vunpack.c.l.b16 %v850
        %v1175 = vunpack.c.h.b16 %v850
        %v1176 = vunpack.c.l.b16 %v851
        %v1177 = vunpack.c.h.b16 %v851
        %v1178 = vunpack.c.l.b16 %v852
        %v1179 = vunpack.c.h.b16 %v852
        %v1180 = vunpack.c.l.b16 %v853
        %v1181 = vunpack.c.h.b16 %v853
        %v1182 = vunpack.c.l.b16 %v854
        %v1183 = vunpack.c.h.b16 %v854
        %v1184 = vunpack.c.l.b16 %v855
        %v1185 = vunpack.c.h.b16 %v855
        %v1186 = vunpack.c.l.b16 %v856
        %v1187 = vunpack.c.h.b16 %v856
        %v1188 = vunpack.c.l.b16 %v857
        %v1189 = vunpack.c.h.b16 %v857
        %v1190 = vunpack.c.l.b16 %v858
        %v1191 = vunpack.c.h.b16 %v858
        %v1192 = vunpack.c.l.b16 %v859
        %v1193 = vunpack.c.h.b16 %v859
        %v1194 = vunpack.c.l.b16 %v860
        %v1195 = vunpack.c.h.b16 %v860
        %v1196 = vunpack.c.l.b16 %v861
        %v1197 = vunpack.c.h.b16 %v861
        %v1198 = vunpack.c.l.b16 %v862
        %v1199 = vunpack.c.h.b16 %v862
        %v1200 = vunpack.c.l.b16 %v863
        %v1201 = vunpack.c.h.b16 %v863
        %v1202 = vunpack.c.l.b16 %v864
        %v1203 = vunpack.c.h.b16 %v864
        %v1204 = vunpack.c.l.b16 %v865
        %v1205 = vunpack.c.h.b16 %v865
        %v1206 = vunpack.c.l.b16 %v866
        %v1207 = vunpack.c.h.b16 %v866
        %v1208 = vunpack.c.l.b16 %v867
        %v1209 = vunpack.c.h.b16 %v867
        %v1210 = vunpack.c.l.b16 %v868
        %v1211 = vunpack.c.h.b16 %v868
        %v1212 = vunpack.c.l.b16 %v869
        %v1213 = vunpack.c.h.b16 %v869
        %v1214 = vunpack.c.l.b16 %v870
        %v1215 = vunpack.c.h.b16 %v870
        %v1216 = vunpack.c.l.b16 %v871
        %v1217 = vunpack.c.h.b16 %v871
        %v1218 = vunpack.c.l.b16 %v872
        %v1219 = vunpack.c.h.b16 %v872
        %v1220 = vunpack.c.l.b16 %v873
        %v1221 = vunpack.c.h.b16 %v873
        %v1222 = vunpack.c.l.b16 %v874
        %v1223 = vunpack.c.h.b16 %v874
        %v1224 = vunpack.c.l.b16 %v875
        %v1225 = vunpack.c.h.b16 %v875
        %v1226 = vunpack.c.l.b16 %v876
        %v1227 = vunpack.c.h.b16 %v876
        %v1228 = vunpack.c.l.b16 %v877
        %v1229 = vunpack.c.h.b16 %v877
        %v1230 = vunpack.c.l.b16 %v878
        %v1231 = vunpack.c.h.b16 %v878
        %v1232 = vunpack.c.l.b16 %v879
        %v1233 = vunpack.c.h.b16 %v879
        %v1234 = vunpack.c.l.b16 %v880
        %v1235 = vunpack.c.h.b16 %v880
        %v1236 = vunpack.c.l.b16 %v881
        %v1237 = vunpack.c.h.b16 %v881
        %v1238 = vunpack.c.l.b16 %v882
        %v1239 = vunpack.c.h.b16 %v882
        %v1240 = vunpack.c.l.b16 %v883
        %v1241 = vunpack.c.h.b16 %v883
        %v1242 = vunpack.c.l.b16 %v884
        %v1243 = vunpack.c.h.b16 %v884
        %v1244 = vunpack.c.l.b16 %v885
        %v1245 = vunpack.c.h.b16 %v885
        %v1246 = vunpack.c.l.b16 %v886
        %v1247 = vunpack.c.h.b16 %v886
        %v1248 = vunpack.c.l.b16 %v887
        %v1249 = vunpack.c.h.b16 %v887
        %v1250 = vunpack.c.l.b16 %v888
        %v1251 = vunpack.c.h.b16 %v888
        %v1252 = vunpack.c.l.b16 %v889
        %v1253 = vunpack.c.h.b16 %v889
        %v1254 = vunpack.c.l.b16 %v890
        %v1255 = vunpack.c.h.b16 %v890
        %v1256 = vunpack.c.l.b16 %v891
        %v1257 = vunpack.c.h.b16 %v891
        %v1258 = vunpack.c.l.b16 %v892
        %v1259 = vunpack.c.h.b16 %v892
        %v1260 = vunpack.c.l.b16 %v893
        %v1261 = vunpack.c.h.b16 %v893
        %v1262 = vunpack.c.l.b16 %v894
        %v1263 = vunpack.c.h.b16 %v894
        %v1264 = vunpack.c.l.b16 %v895
        %v1265 = vunpack.c.h.b16 %v895
        %v1266 = vunpack.c.l.b16 %v896
        %v1267 = vunpack.c.h.b16 %v896
        %v1268 = vunpack.c.l.b16 %v897
        %v1269 = vunpack.c.h.b16 %v897
        %v1270 = vunpack.c.l.b16 %v898
        %v1271 = vunpack.c.h.b16 %v898
        %v1272 = vunpack.c.l.b16 %v899
        %v1273 = vunpack.c.h.b16 %v899
        %v1274 = vunpack.c.l.b16 %v900
        %v1275 = vunpack.c.h.b16 %v900
        %v1276 = vunpack.c.l.b16 %v901
        %v1277 = vunpack.c.h.b16 %v901
        %v1278 = vunpack.c.l.b16 %v902
        %v1279 = vunpack.c.h.b16 %v902
        %v1280 = vunpack.c.l.b16 %v903
        %v1281 = vunpack.c.h.b16 %v903
        %v1282 = vunpack.c.l.b16 %v904
        %v1283 = vunpack.c.h.b16 %v904
        %v1284 = vunpack.c.l.b16 %v905
        %v1285 = vunpack.c.h.b16 %v905
        %v1286 = vunpack.c.l.b16 %v906
        %v1287 = vunpack.c.h.b16 %v906
        %v1288 = vunpack.c.l.b16 %v907
        %v1289 = vunpack.c.h.b16 %v907
        %v1290 = vunpack.c.l.b16 %v908
        %v1291 = vunpack.c.h.b16 %v908
        %v1292 = vunpack.c.l.b16 %v909
        %v1293 = vunpack.c.h.b16 %v909
        %v1294 = vpack.c.b16 %v1042, %v1038
        %v1295 = vpack.c.b16 %v1043, %v1039
        %v1296 = vpack.c.b16 %v1044, %v1040
        %v1297 = vpack.c.b16 %v1045, %v1041
        %v1298 = vpack.c.b16 %v1050, %v1046
        %v1299 = vpack.c.b16 %v1051, %v1047
        %v1300 = vpack.c.b16 %v1052, %v1048
        %v1301 = vpack.c.b16 %v1053, %v1049
        %v1302 = vpack.c.b16 %v1058, %v1054
        %v1303 = vpack.c.b16 %v1059, %v1055
        %v1304 = vpack.c.b16 %v1060, %v1056
        %v1305 = vpack.c.b16 %v1061, %v1057
        %v1306 = vpack.c.b16 %v1066, %v1062
        %v1307 = vpack.c.b16 %v1067, %v1063
        %v1308 = vpack.c.b16 %v1068, %v1064
        %v1309 = vpack.c.b16 %v1069, %v1065
        %v1310 = vpack.c.b16 %v1074, %v1070
        %v1311 = vpack.c.b16 %v1075, %v1071
        %v1312 = vpack.c.b16 %v1076, %v1072
        %v1313 = vpack.c.b16 %v1077, %v1073
        %v1314 = vpack.c.b16 %v1082, %v1078
        %v1315 = vpack.c.b16 %v1083, %v1079
        %v1316 = vpack.c.b16 %v1084, %v1080
        %v1317 = vpack.c.b16 %v1085, %v1081
        %v1318 = vpack.c.b16 %v1090, %v1086
        %v1319 = vpack.c.b16 %v1091, %v1087
        %v1320 = vpack.c.b16 %v1092, %v1088
        %v1321 = vpack.c.b16 %v1093, %v1089
        %v1322 = vpack.c.b16 %v1098, %v1094
        %v1323 = vpack.c.b16 %v1099, %v1095
        %v1324 = vpack.c.b16 %v1100, %v1096
        %v1325 = vpack.c.b16 %v1101, %v1097
        %v1326 = vpack.c.b16 %v1106, %v1102
        %v1327 = vpack.c.b16 %v1107, %v1103
        %v1328 = vpack.c.b16 %v1108, %v1104
        %v1329 = vpack.c.b16 %v1109, %v1105
        %v1330 = vpack.c.b16 %v1114, %v1110
        %v1331 = vpack.c.b16 %v1115, %v1111
        %v1332 = vpack.c.b16 %v1116, %v1112
        %v1333 = vpack.c.b16 %v1117, %v1113
        %v1334 = vpack.c.b16 %v1122, %v1118
        %v1335 = vpack.c.b16 %v1123, %v1119
        %v1336 = vpack.c.b16 %v1124, %v1120
        %v1337 = vpack.c.b16 %v1125, %v1121
        %v1338 = vpack.c.b16 %v1130, %v1126
        %v1339 = vpack.c.b16 %v1131, %v1127
        %v1340 = vpack.c.b16 %v1132, %v1128
        %v1341 = vpack.c.b16 %v1133, %v1129
        %v1342 = vpack.c.b16 %v1138, %v1134
        %v1343 = vpack.c.b16 %v1139, %v1135
        %v1344 = vpack.c.b16 %v1140, %v1136
        %v1345 = vpack.c.b16 %v1141, %v1137
        %v1346 = vpack.c.b16 %v1146, %v1142
        %v1347 = vpack.c.b16 %v1147, %v1143
        %v1348 = vpack.c.b16 %v1148, %v1144
        %v1349 = vpack.c.b16 %v1149, %v1145
        %v1350 = vpack.c.b16 %v1154, %v1150
        %v1351 = vpack.c.b16 %v1155, %v1151
        %v1352 = vpack.c.b16 %v1156, %v1152
        %v1353 = vpack.c.b16 %v1157, %v1153
        %v1354 = vpack.c.b16 %v1162, %v1158
        %v1355 = vpack.c.b16 %v1163, %v1159
        %v1356 = vpack.c.b16 %v1164, %v1160
        %v1357 = vpack.c.b16 %v1165, %v1161
        %v1358 = vpack.c.b16 %v1170, %v1166
        %v1359 = vpack.c.b16 %v1171, %v1167
        %v1360 = vpack.c.b16 %v1172, %v1168
        %v1361 = vpack.c.b16 %v1173, %v1169
        %v1362 = vpack.c.b16 %v1178, %v1174
        %v1363 = vpack.c.b16 %v1179, %v1175
        %v1364 = vpack.c.b16 %v1180, %v1176
        %v1365 = vpack.c.b16 %v1181, %v1177
        %v1366 = vpack.c.b16 %v1186, %v1182
        %v1367 = vpack.c.b16 %v1187, %v1183
        %v1368 = vpack.c.b16 %v1188, %v1184
        %v1369 = vpack.c.b16 %v1189, %v1185
        %v1370 = vpack.c.b16 %v1194, %v1190
        %v1371 = vpack.c.b16 %v1195, %v1191
        %v1372 = vpack.c.b16 %v1196, %v1192
        %v1373 = vpack.c.b16 %v1197, %v1193
        %v1374 = vpack.c.b16 %v1202, %v1198
        %v1375 = vpack.c.b16 %v1203, %v1199
        %v1376 = vpack.c.b16 %v1204, %v1200
        %v1377 = vpack.c.b16 %v1205, %v1201
        %v1378 = vpack.c.b16 %v1210, %v1206
        %v1379 = vpack.c.b16 %v1211, %v1207
        %v1380 = vpack.c.b16 %v1212, %v1208
        %v1381 = vpack.c.b16 %v1213, %v1209
        %v1382 = vpack.c.b16 %v1218, %v1214
        %v1383 = vpack.c.b16 %v1219, %v1215
        %v1384 = vpack.c.b16 %v1220, %v1216
        %v1385 = vpack.c.b16 %v1221, %v1217
        %v1386 = vpack.c.b16 %v1226, %v1222
        %v1387 = vpack.c.b16 %v1227, %v1223
        %v1388 = vpack.c.b16 %v1228, %v1224
        %v1389 = vpack.c.b16 %v1229, %v1225
        %v1390 = vpack.c.b16 %v1234, %v1230
        %v1391 = vpack.c.b16 %v1235, %v1231
        %v1392 = vpack.c.b16 %v1236, %v1232
        %v1393 = vpack.c.b16 %v1237, %v1233
        %v1394 = vpack.c.b16 %v1242, %v1238
        %v1395 = vpack.c.b16 %v1243, %v1239
        %v1396 = vpack.c.b16 %v1244, %v1240
        %v1397 = vpack.c.b16 %v1245, %v1241
        %v1398 = vpack.c.b16 %v1250, %v1246
        %v1399 = vpack.c.b16 %v1251, %v1247
        %v1400 = vpack.c.b16 %v1252, %v1248
        %v1401 = vpack.c.b16 %v1253, %v1249
        %v1402 = vpack.c.b16 %v1258, %v1254
        %v1403 = vpack.c.b16 %v1259, %v1255
        %v1404 = vpack.c.b16 %v1260, %v1256
        %v1405 = vpack.c.b16 %v1261, %v1257
        %v1406 = vpack.c.b16 %v1266, %v1262
        %v1407 = vpack.c.b16 %v1267, %v1263
        %v1408 = vpack.c.b16 %v1268, %v1264
        %v1409 = vpack.c.b16 %v1269, %v1265
        %v1410 = vpack.c.b16 %v1274, %v1270
        %v1411 = vpack.c.b16 %v1275, %v1271
        %v1412 = vpack.c.b16 %v1276, %v1272
        %v1413 = vpack.c.b16 %v1277, %v1273
        %v1414 = vpack.c.b16 %v1282, %v1278
        %v1415 = vpack.c.b16 %v1283, %v1279
        %v1416 = vpack.c.b16 %v1284, %v1280
        %v1417 = vpack.c.b16 %v1285, %v1281
        %v1418 = vpack.c.b16 %v1290, %v1286
        %v1419 = vpack.c.b16 %v1291, %v1287
        %v1420 = vpack.c.b16 %v1292, %v1288
        %v1421 = vpack.c.b16 %v1293, %v1289
        %1550 = vmatprep.subr.bf16.mxu0 %v1295
        %1551 = vmatpush1.bf16.msra.mxu0 %v1294
        %1552 = vmatprep.subr.bf16.mxu0 %v1299
        %1553 = vmatpush1.bf16.msra.mxu0 %v1298
        %1554 = vmatprep.subr.bf16.mxu0 %v1303
        %1555 = vmatpush1.bf16.msra.mxu0 %v1302
        %1556 = vmatprep.subr.bf16.mxu0 %v1307
        %1557 = vmatpush1.bf16.msra.mxu0 %v1306
        %1558 = vmatprep.subr.bf16.mxu0 %v1311
        %1559 = vmatpush1.bf16.msra.mxu0 %v1310
        %1560 = vmatprep.subr.bf16.mxu0 %v1315
        %1561 = vmatpush1.bf16.msra.mxu0 %v1314
        %1562 = vmatprep.subr.bf16.mxu0 %v1319
        %1563 = vmatpush1.bf16.msra.mxu0 %v1318
        %1564 = vmatprep.subr.bf16.mxu0 %v1323
        %1565 = vmatpush1.bf16.msra.mxu0 %v1322
        %1566 = vmatprep.subr.bf16.mxu0 %v1327
        %1567 = vmatpush1.bf16.msra.mxu0 %v1326
        %1568 = vmatprep.subr.bf16.mxu0 %v1331
        %1569 = vmatpush1.bf16.msra.mxu0 %v1330
        %1570 = vmatprep.subr.bf16.mxu0 %v1335
        %1571 = vmatpush1.bf16.msra.mxu0 %v1334
        %1572 = vmatprep.subr.bf16.mxu0 %v1339
        %1573 = vmatpush1.bf16.msra.mxu0 %v1338
        %1574 = vmatprep.subr.bf16.mxu0 %v1343
        %1575 = vmatpush1.bf16.msra.mxu0 %v1342
        %1576 = vmatprep.subr.bf16.mxu0 %v1347
        %1577 = vmatpush1.bf16.msra.mxu0 %v1346
        %1578 = vmatprep.subr.bf16.mxu0 %v1351
        %1579 = vmatpush1.bf16.msra.mxu0 %v1350
        %1580 = vmatprep.subr.bf16.mxu0 %v1355
        %1581 = vmatpush1.bf16.msra.mxu0 %v1354
        %1582 = vmatprep.mubr.bf16.mxu0 %v779
        %1583 = vmatmul.mubr.bf16.gmra.mrb[0].mxu0 %v778
        %v1584 = vpop.f32.mrb[0].mxu0
        %v1585 = vadd.f32 0.0, %v1584
        %v1586 = vpop.f32.mrb[0].mxu0
        %v1587 = vadd.f32 0.0, %v1586
        %v1588 = vpop.f32.mrb[0].mxu0
        %v1589 = vadd.f32 0.0, %v1588
        %v1590 = vpop.f32.mrb[0].mxu0
        %v1591 = vadd.f32 0.0, %v1590
        %1592 = vdwg.mxu0
        %1593 = vmatprep.subr.bf16.mxu0 %v1359
        %1594 = vmatpush1.bf16.msra.mxu0 %v1358
        %1595 = vmatprep.subr.bf16.mxu0 %v1363
        %1596 = vmatpush1.bf16.msra.mxu0 %v1362
        %1597 = vmatprep.subr.bf16.mxu0 %v1367
        %1598 = vmatpush1.bf16.msra.mxu0 %v1366
        %1599 = vmatprep.subr.bf16.mxu0 %v1371
        %1600 = vmatpush1.bf16.msra.mxu0 %v1370
        %1601 = vmatprep.subr.bf16.mxu0 %v1375
        %1602 = vmatpush1.bf16.msra.mxu0 %v1374
        %1603 = vmatprep.subr.bf16.mxu0 %v1379
        %1604 = vmatpush1.bf16.msra.mxu0 %v1378
        %1605 = vmatprep.subr.bf16.mxu0 %v1383
        %1606 = vmatpush1.bf16.msra.mxu0 %v1382
        %1607 = vmatprep.subr.bf16.mxu0 %v1387
        %1608 = vmatpush1.bf16.msra.mxu0 %v1386
        %1609 = vmatprep.subr.bf16.mxu0 %v1391
        %1610 = vmatpush1.bf16.msra.mxu0 %v1390
        %1611 = vmatprep.subr.bf16.mxu0 %v1395
        %1612 = vmatpush1.bf16.msra.mxu0 %v1394
        %1613 = vmatprep.subr.bf16.mxu0 %v1399
        %1614 = vmatpush1.bf16.msra.mxu0 %v1398
        %1615 = vmatprep.subr.bf16.mxu0 %v1403
        %1616 = vmatpush1.bf16.msra.mxu0 %v1402
        %1617 = vmatprep.subr.bf16.mxu0 %v1407
        %1618 = vmatpush1.bf16.msra.mxu0 %v1406
        %1619 = vmatprep.subr.bf16.mxu0 %v1411
        %1620 = vmatpush1.bf16.msra.mxu0 %v1410
        %1621 = vmatprep.subr.bf16.mxu0 %v1415
        %1622 = vmatpush1.bf16.msra.mxu0 %v1414
        %1623 = vmatprep.subr.bf16.mxu0 %v1419
        %1624 = vmatpush1.bf16.msra.mxu0 %v1418
        %1625 = vmatprep.mubr.bf16.mxu0 %v781
        %1626 = vmatmul.mubr.bf16.gmra.mrb[0].mxu0 %v780
        %v1627 = vpop.f32.mrb[0].mxu0
        %v1628 = vadd.f32 %v1585, %v1627
        %v1629 = vpop.f32.mrb[0].mxu0
        %v1630 = vadd.f32 %v1587, %v1629
        %v1631 = vpop.f32.mrb[0].mxu0
        %v1632 = vadd.f32 %v1589, %v1631
        %v1633 = vpop.f32.mrb[0].mxu0
        %v1634 = vadd.f32 %v1591, %v1633
        %1635 = vdwg.mxu0
        %1636 = vmatprep.subr.bf16.mxu0 %v1297
        %1637 = vmatpush1.bf16.msra.mxu0 %v1296
        %1638 = vmatprep.subr.bf16.mxu0 %v1301
        %1639 = vmatpush1.bf16.msra.mxu0 %v1300
        %1640 = vmatprep.subr.bf16.mxu0 %v1305
        %1641 = vmatpush1.bf16.msra.mxu0 %v1304
        %1642 = vmatprep.subr.bf16.mxu0 %v1309
        %1643 = vmatpush1.bf16.msra.mxu0 %v1308
        %1644 = vmatprep.subr.bf16.mxu0 %v1313
        %1645 = vmatpush1.bf16.msra.mxu0 %v1312
        %1646 = vmatprep.subr.bf16.mxu0 %v1317
        %1647 = vmatpush1.bf16.msra.mxu0 %v1316
        %1648 = vmatprep.subr.bf16.mxu0 %v1321
        %1649 = vmatpush1.bf16.msra.mxu0 %v1320
        %1650 = vmatprep.subr.bf16.mxu0 %v1325
        %1651 = vmatpush1.bf16.msra.mxu0 %v1324
        %1652 = vmatprep.subr.bf16.mxu0 %v1329
        %1653 = vmatpush1.bf16.msra.mxu0 %v1328
        %1654 = vmatprep.subr.bf16.mxu0 %v1333
        %1655 = vmatpush1.bf16.msra.mxu0 %v1332
        %1656 = vmatprep.subr.bf16.mxu0 %v1337
        %1657 = vmatpush1.bf16.msra.mxu0 %v1336
        %1658 = vmatprep.subr.bf16.mxu0 %v1341
        %1659 = vmatpush1.bf16.msra.mxu0 %v1340
        %1660 = vmatprep.subr.bf16.mxu0 %v1345
        %1661 = vmatpush1.bf16.msra.mxu0 %v1344
        %1662 = vmatprep.subr.bf16.mxu0 %v1349
        %1663 = vmatpush1.bf16.msra.mxu0 %v1348
        %1664 = vmatprep.subr.bf16.mxu0 %v1353
        %1665 = vmatpush1.bf16.msra.mxu0 %v1352
        %1666 = vmatprep.subr.bf16.mxu0 %v1357
        %1667 = vmatpush1.bf16.msra.mxu0 %v1356
        %1668 = vmatprep.mubr.bf16.mxu0 %v779
        %1669 = vmatmul.mubr.bf16.gmra.mrb[0].mxu0 %v778
        %v1670 = vpop.f32.mrb[0].mxu0
        %v1671 = vadd.f32 0.0, %v1670
        %v1672 = vpop.f32.mrb[0].mxu0
        %v1673 = vadd.f32 0.0, %v1672
        %v1674 = vpop.f32.mrb[0].mxu0
        %v1675 = vadd.f32 0.0, %v1674
        %v1676 = vpop.f32.mrb[0].mxu0
        %v1677 = vadd.f32 0.0, %v1676
        %1678 = vdwg.mxu0
        %1679 = vmatprep.subr.bf16.mxu0 %v1361
        %1680 = vmatpush1.bf16.msra.mxu0 %v1360
        %1681 = vmatprep.subr.bf16.mxu0 %v1365
        %1682 = vmatpush1.bf16.msra.mxu0 %v1364
        %1683 = vmatprep.subr.bf16.mxu0 %v1369
        %1684 = vmatpush1.bf16.msra.mxu0 %v1368
        %1685 = vmatprep.subr.bf16.mxu0 %v1373
        %1686 = vmatpush1.bf16.msra.mxu0 %v1372
        %1687 = vmatprep.subr.bf16.mxu0 %v1377
        %1688 = vmatpush1.bf16.msra.mxu0 %v1376
        %1689 = vmatprep.subr.bf16.mxu0 %v1381
        %1690 = vmatpush1.bf16.msra.mxu0 %v1380
        %1691 = vmatprep.subr.bf16.mxu0 %v1385
        %1692 = vmatpush1.bf16.msra.mxu0 %v1384
        %1693 = vmatprep.subr.bf16.mxu0 %v1389
        %1694 = vmatpush1.bf16.msra.mxu0 %v1388
        %1695 = vmatprep.subr.bf16.mxu0 %v1393
        %1696 = vmatpush1.bf16.msra.mxu0 %v1392
        %1697 = vmatprep.subr.bf16.mxu0 %v1397
        %1698 = vmatpush1.bf16.msra.mxu0 %v1396
        %1699 = vmatprep.subr.bf16.mxu0 %v1401
        %1700 = vmatpush1.bf16.msra.mxu0 %v1400
        %1701 = vmatprep.subr.bf16.mxu0 %v1405
        %1702 = vmatpush1.bf16.msra.mxu0 %v1404
        %1703 = vmatprep.subr.bf16.mxu0 %v1409
        %1704 = vmatpush1.bf16.msra.mxu0 %v1408
        %1705 = vmatprep.subr.bf16.mxu0 %v1413
        %1706 = vmatpush1.bf16.msra.mxu0 %v1412
        %1707 = vmatprep.subr.bf16.mxu0 %v1417
        %1708 = vmatpush1.bf16.msra.mxu0 %v1416
        %1709 = vmatprep.subr.bf16.mxu0 %v1421
        %1710 = vmatpush1.bf16.msra.mxu0 %v1420
        %1711 = vmatprep.mubr.bf16.mxu0 %v781
        %1712 = vmatmul.mubr.bf16.gmra.mrb[0].mxu0 %v780
        %v1713 = vpop.f32.mrb[0].mxu0
        %v1714 = vadd.f32 %v1671, %v1713
        %v1715 = vpop.f32.mrb[0].mxu0
        %v1716 = vadd.f32 %v1673, %v1715
        %v1717 = vpop.f32.mrb[0].mxu0
        %v1718 = vadd.f32 %v1675, %v1717
        %v1719 = vpop.f32.mrb[0].mxu0
        %v1720 = vadd.f32 %v1677, %v1719
        %1721 = vdwg.mxu0
        %v1722 = vpack.c.bf16 %v1632, %v1628
        %v1723 = vpack.c.bf16 %v1634, %v1630
        %v1724 = vpack.c.bf16 %v1718, %v1714
        %v1725 = vpack.c.bf16 %v1720, %v1716
        %v1726 = vld [vmem:[%s6] sm:$0xf]
        %v1728 = vlaneseq
        %v1729 = vshrl.u32 %v1728, 7
        %v1730 = vsub.s32 0, %v1729
        %v1731 = vrot.slane %v1726, %v1730
        %v1732 = vlaneseq
        %v1733 = vshrl.u32 %v1732, 7
        %v1734 = vsub.s32 1, %v1733
        %v1735 = vrot.slane %v1726, %v1734
        %v1736 = vlaneseq
        %v1737 = vshrl.u32 %v1736, 7
        %v1738 = vsub.s32 2, %v1737
        %v1739 = vrot.slane %v1726, %v1738
        %v1740 = vlaneseq
        %v1741 = vshrl.u32 %v1740, 7
        %v1742 = vsub.s32 3, %v1741
        %v1743 = vrot.slane %v1726, %v1742
        %v1748 = vpack.c.bf16 %v1731, %v1731
        %v1749 = vpack.c.bf16 %v1735, %v1735
        %v1750 = vpack.c.bf16 %v1739, %v1739
        %v1751 = vpack.c.bf16 %v1743, %v1743
        %v1753 = vpack.i.b16 %v1748, %v1748
        %v1755 = vlaneseq
        %v1756 = vshrl.u32 %v1755, 7
        %v1757 = vsub.s32 0, %v1756
        %v1758 = vrot.slane %v1753, %v1757
        %v1760 = vpack.i.b16 %v1749, %v1749
        %v1762 = vlaneseq
        %v1763 = vshrl.u32 %v1762, 7
        %v1764 = vsub.s32 0, %v1763
        %v1765 = vrot.slane %v1760, %v1764
        %v1767 = vpack.i.b16 %v1750, %v1750
        %v1769 = vlaneseq
        %v1770 = vshrl.u32 %v1769, 7
        %v1771 = vsub.s32 0, %v1770
        %v1772 = vrot.slane %v1767, %v1771
        %v1774 = vpack.i.b16 %v1751, %v1751
        %v1776 = vlaneseq
        %v1777 = vshrl.u32 %v1776, 7
        %v1778 = vsub.s32 0, %v1777
        %v1779 = vrot.slane %v1774, %v1778
        %v1780 = vadd.bf16 %v1722, %v1758
        %v1781 = vadd.bf16 %v1723, %v1765
        %v1782 = vadd.bf16 %v1724, %v1772
        %v1783 = vadd.bf16 %v1725, %v1779
        %v1784 = vmax.bf16 %v1780, 0
        %v1785 = vmax.bf16 %v1781, 0
        %v1786 = vmax.bf16 %v1782, 0
        %v1787 = vmax.bf16 %v1783, 0
        %v1788 = vld [vmem:[#allocation4] sm:$0xff]
        %v1789 = vld [vmem:[#allocation4 + $0x8] sm:$0xff]
        %v1790 = vld [vmem:[#allocation4 + $0x10] sm:$0xff]
        %v1791 = vld [vmem:[#allocation4 + $0x18] sm:$0xff]
        %v1792 = vld [vmem:[#allocation4 + $0x20] sm:$0xff]
        %v1793 = vld [vmem:[#allocation4 + $0x28] sm:$0xff]
        %v1794 = vld [vmem:[#allocation4 + $0x30] sm:$0xff]
        %v1795 = vld [vmem:[#allocation4 + $0x38] sm:$0xff]
        %v1796 = vld [vmem:[#allocation4 + $0x40] sm:$0xff]
        %v1797 = vld [vmem:[#allocation4 + $0x48] sm:$0xff]
        %v1798 = vld [vmem:[#allocation4 + $0x50] sm:$0xff]
        %v1799 = vld [vmem:[#allocation4 + $0x58] sm:$0xff]
        %v1800 = vld [vmem:[#allocation4 + $0x60] sm:$0xff]
        %v1801 = vld [vmem:[#allocation4 + $0x68] sm:$0xff]
        %v1802 = vld [vmem:[#allocation4 + $0x70] sm:$0xff]
        %v1803 = vld [vmem:[#allocation4 + $0x78] sm:$0xff]
        %v1804 = vld [vmem:[#allocation4 + $0x80] sm:$0xff]
        %v1805 = vld [vmem:[#allocation4 + $0x88] sm:$0xff]
        %v1806 = vld [vmem:[#allocation4 + $0x90] sm:$0xff]
        %v1807 = vld [vmem:[#allocation4 + $0x98] sm:$0xff]
        %v1808 = vld [vmem:[#allocation4 + $0xa0] sm:$0xff]
        %v1809 = vld [vmem:[#allocation4 + $0xa8] sm:$0xff]
        %v1810 = vld [vmem:[#allocation4 + $0xb0] sm:$0xff]
        %v1811 = vld [vmem:[#allocation4 + $0xb8] sm:$0xff]
        %v1812 = vld [vmem:[#allocation4 + $0xc0] sm:$0xff]
        %v1813 = vld [vmem:[#allocation4 + $0xc8] sm:$0xff]
        %v1814 = vld [vmem:[#allocation4 + $0xd0] sm:$0xff]
        %v1815 = vld [vmem:[#allocation4 + $0xd8] sm:$0xff]
        %v1816 = vld [vmem:[#allocation4 + $0xe0] sm:$0xff]
        %v1817 = vld [vmem:[#allocation4 + $0xe8] sm:$0xff]
        %v1818 = vld [vmem:[#allocation4 + $0xf0] sm:$0xff]
        %v1819 = vld [vmem:[#allocation4 + $0xf8] sm:$0xff]
        %v1820 = vld [vmem:[#allocation4 + $0x100] sm:$0xff]
        %v1821 = vld [vmem:[#allocation4 + $0x108] sm:$0xff]
        %v1822 = vld [vmem:[#allocation4 + $0x110] sm:$0xff]
        %v1823 = vld [vmem:[#allocation4 + $0x118] sm:$0xff]
        %v1824 = vld [vmem:[#allocation4 + $0x120] sm:$0xff]
        %v1825 = vld [vmem:[#allocation4 + $0x128] sm:$0xff]
        %v1826 = vld [vmem:[#allocation4 + $0x130] sm:$0xff]
        %v1827 = vld [vmem:[#allocation4 + $0x138] sm:$0xff]
        %v1828 = vld [vmem:[#allocation4 + $0x140] sm:$0xff]
        %v1829 = vld [vmem:[#allocation4 + $0x148] sm:$0xff]
        %v1830 = vld [vmem:[#allocation4 + $0x150] sm:$0xff]
        %v1831 = vld [vmem:[#allocation4 + $0x158] sm:$0xff]
        %v1832 = vld [vmem:[#allocation4 + $0x160] sm:$0xff]
        %v1833 = vld [vmem:[#allocation4 + $0x168] sm:$0xff]
        %v1834 = vld [vmem:[#allocation4 + $0x170] sm:$0xff]
        %v1835 = vld [vmem:[#allocation4 + $0x178] sm:$0xff]
        %v1836 = vld [vmem:[#allocation4 + $0x180] sm:$0xff]
        %v1837 = vld [vmem:[#allocation4 + $0x188] sm:$0xff]
        %v1838 = vld [vmem:[#allocation4 + $0x190] sm:$0xff]
        %v1839 = vld [vmem:[#allocation4 + $0x198] sm:$0xff]
        %v1840 = vld [vmem:[#allocation4 + $0x1a0] sm:$0xff]
        %v1841 = vld [vmem:[#allocation4 + $0x1a8] sm:$0xff]
        %v1842 = vld [vmem:[#allocation4 + $0x1b0] sm:$0xff]
        %v1843 = vld [vmem:[#allocation4 + $0x1b8] sm:$0xff]
        %v1844 = vld [vmem:[#allocation4 + $0x1c0] sm:$0xff]
        %v1845 = vld [vmem:[#allocation4 + $0x1c8] sm:$0xff]
        %v1846 = vld [vmem:[#allocation4 + $0x1d0] sm:$0xff]
        %v1847 = vld [vmem:[#allocation4 + $0x1d8] sm:$0xff]
        %v1848 = vld [vmem:[#allocation4 + $0x1e0] sm:$0xff]
        %v1849 = vld [vmem:[#allocation4 + $0x1e8] sm:$0xff]
        %v1850 = vld [vmem:[#allocation4 + $0x1f0] sm:$0xff]
        %v1851 = vld [vmem:[#allocation4 + $0x1f8] sm:$0xff]
        %v1852 = vld [vmem:[#allocation4 + $0x200] sm:$0xff]
        %v1853 = vld [vmem:[#allocation4 + $0x208] sm:$0xff]
        %v1854 = vld [vmem:[#allocation4 + $0x210] sm:$0xff]
        %v1855 = vld [vmem:[#allocation4 + $0x218] sm:$0xff]
        %v1856 = vld [vmem:[#allocation4 + $0x220] sm:$0xff]
        %v1857 = vld [vmem:[#allocation4 + $0x228] sm:$0xff]
        %v1858 = vld [vmem:[#allocation4 + $0x230] sm:$0xff]
        %v1859 = vld [vmem:[#allocation4 + $0x238] sm:$0xff]
        %v1860 = vld [vmem:[#allocation4 + $0x240] sm:$0xff]
        %v1861 = vld [vmem:[#allocation4 + $0x248] sm:$0xff]
        %v1862 = vld [vmem:[#allocation4 + $0x250] sm:$0xff]
        %v1863 = vld [vmem:[#allocation4 + $0x258] sm:$0xff]
        %v1864 = vld [vmem:[#allocation4 + $0x260] sm:$0xff]
        %v1865 = vld [vmem:[#allocation4 + $0x268] sm:$0xff]
        %v1866 = vld [vmem:[#allocation4 + $0x270] sm:$0xff]
        %v1867 = vld [vmem:[#allocation4 + $0x278] sm:$0xff]
        %v1868 = vld [vmem:[#allocation4 + $0x280] sm:$0xff]
        %v1869 = vld [vmem:[#allocation4 + $0x288] sm:$0xff]
        %v1870 = vld [vmem:[#allocation4 + $0x290] sm:$0xff]
        %v1871 = vld [vmem:[#allocation4 + $0x298] sm:$0xff]
        %v1872 = vld [vmem:[#allocation4 + $0x2a0] sm:$0xff]
        %v1873 = vld [vmem:[#allocation4 + $0x2a8] sm:$0xff]
        %v1874 = vld [vmem:[#allocation4 + $0x2b0] sm:$0xff]
        %v1875 = vld [vmem:[#allocation4 + $0x2b8] sm:$0xff]
        %v1876 = vld [vmem:[#allocation4 + $0x2c0] sm:$0xff]
        %v1877 = vld [vmem:[#allocation4 + $0x2c8] sm:$0xff]
        %v1878 = vld [vmem:[#allocation4 + $0x2d0] sm:$0xff]
        %v1879 = vld [vmem:[#allocation4 + $0x2d8] sm:$0xff]
        %v1880 = vld [vmem:[#allocation4 + $0x2e0] sm:$0xff]
        %v1881 = vld [vmem:[#allocation4 + $0x2e8] sm:$0xff]
        %v1882 = vld [vmem:[#allocation4 + $0x2f0] sm:$0xff]
        %v1883 = vld [vmem:[#allocation4 + $0x2f8] sm:$0xff]
        %v1884 = vld [vmem:[#allocation4 + $0x300] sm:$0xff]
        %v1885 = vld [vmem:[#allocation4 + $0x308] sm:$0xff]
        %v1886 = vld [vmem:[#allocation4 + $0x310] sm:$0xff]
        %v1887 = vld [vmem:[#allocation4 + $0x318] sm:$0xff]
        %v1888 = vld [vmem:[#allocation4 + $0x320] sm:$0xff]
        %v1889 = vld [vmem:[#allocation4 + $0x328] sm:$0xff]
        %v1890 = vld [vmem:[#allocation4 + $0x330] sm:$0xff]
        %v1891 = vld [vmem:[#allocation4 + $0x338] sm:$0xff]
        %v1892 = vld [vmem:[#allocation4 + $0x340] sm:$0xff]
        %v1893 = vld [vmem:[#allocation4 + $0x348] sm:$0xff]
        %v1894 = vld [vmem:[#allocation4 + $0x350] sm:$0xff]
        %v1895 = vld [vmem:[#allocation4 + $0x358] sm:$0xff]
        %v1896 = vld [vmem:[#allocation4 + $0x360] sm:$0xff]
        %v1897 = vld [vmem:[#allocation4 + $0x368] sm:$0xff]
        %v1898 = vld [vmem:[#allocation4 + $0x370] sm:$0xff]
        %v1899 = vld [vmem:[#allocation4 + $0x378] sm:$0xff]
        %v1900 = vld [vmem:[#allocation4 + $0x380] sm:$0xff]
        %v1901 = vld [vmem:[#allocation4 + $0x388] sm:$0xff]
        %v1902 = vld [vmem:[#allocation4 + $0x390] sm:$0xff]
        %v1903 = vld [vmem:[#allocation4 + $0x398] sm:$0xff]
        %v1904 = vld [vmem:[#allocation4 + $0x3a0] sm:$0xff]
        %v1905 = vld [vmem:[#allocation4 + $0x3a8] sm:$0xff]
        %v1906 = vld [vmem:[#allocation4 + $0x3b0] sm:$0xff]
        %v1907 = vld [vmem:[#allocation4 + $0x3b8] sm:$0xff]
        %v1908 = vld [vmem:[#allocation4 + $0x3c0] sm:$0xff]
        %v1909 = vld [vmem:[#allocation4 + $0x3c8] sm:$0xff]
        %v1910 = vld [vmem:[#allocation4 + $0x3d0] sm:$0xff]
        %v1911 = vld [vmem:[#allocation4 + $0x3d8] sm:$0xff]
        %v1912 = vld [vmem:[#allocation4 + $0x3e0] sm:$0xff]
        %v1913 = vld [vmem:[#allocation4 + $0x3e8] sm:$0xff]
        %v1914 = vld [vmem:[#allocation4 + $0x3f0] sm:$0xff]
        %v1915 = vld [vmem:[#allocation4 + $0x3f8] sm:$0xff]
        %v2044 = vunpack.c.l.b16 %v1788
        %v2045 = vunpack.c.h.b16 %v1788
        %v2046 = vunpack.c.l.b16 %v1789
        %v2047 = vunpack.c.h.b16 %v1789
        %v2048 = vunpack.c.l.b16 %v1790
        %v2049 = vunpack.c.h.b16 %v1790
        %v2050 = vunpack.c.l.b16 %v1791
        %v2051 = vunpack.c.h.b16 %v1791
        %v2052 = vunpack.c.l.b16 %v1792
        %v2053 = vunpack.c.h.b16 %v1792
        %v2054 = vunpack.c.l.b16 %v1793
        %v2055 = vunpack.c.h.b16 %v1793
        %v2056 = vunpack.c.l.b16 %v1794
        %v2057 = vunpack.c.h.b16 %v1794
        %v2058 = vunpack.c.l.b16 %v1795
        %v2059 = vunpack.c.h.b16 %v1795
        %v2060 = vunpack.c.l.b16 %v1796
        %v2061 = vunpack.c.h.b16 %v1796
        %v2062 = vunpack.c.l.b16 %v1797
        %v2063 = vunpack.c.h.b16 %v1797
        %v2064 = vunpack.c.l.b16 %v1798
        %v2065 = vunpack.c.h.b16 %v1798
        %v2066 = vunpack.c.l.b16 %v1799
        %v2067 = vunpack.c.h.b16 %v1799
        %v2068 = vunpack.c.l.b16 %v1800
        %v2069 = vunpack.c.h.b16 %v1800
        %v2070 = vunpack.c.l.b16 %v1801
        %v2071 = vunpack.c.h.b16 %v1801
        %v2072 = vunpack.c.l.b16 %v1802
        %v2073 = vunpack.c.h.b16 %v1802
        %v2074 = vunpack.c.l.b16 %v1803
        %v2075 = vunpack.c.h.b16 %v1803
        %v2076 = vunpack.c.l.b16 %v1804
        %v2077 = vunpack.c.h.b16 %v1804
        %v2078 = vunpack.c.l.b16 %v1805
        %v2079 = vunpack.c.h.b16 %v1805
        %v2080 = vunpack.c.l.b16 %v1806
        %v2081 = vunpack.c.h.b16 %v1806
        %v2082 = vunpack.c.l.b16 %v1807
        %v2083 = vunpack.c.h.b16 %v1807
        %v2084 = vunpack.c.l.b16 %v1808
        %v2085 = vunpack.c.h.b16 %v1808
        %v2086 = vunpack.c.l.b16 %v1809
        %v2087 = vunpack.c.h.b16 %v1809
        %v2088 = vunpack.c.l.b16 %v1810
        %v2089 = vunpack.c.h.b16 %v1810
        %v2090 = vunpack.c.l.b16 %v1811
        %v2091 = vunpack.c.h.b16 %v1811
        %v2092 = vunpack.c.l.b16 %v1812
        %v2093 = vunpack.c.h.b16 %v1812
        %v2094 = vunpack.c.l.b16 %v1813
        %v2095 = vunpack.c.h.b16 %v1813
        %v2096 = vunpack.c.l.b16 %v1814
        %v2097 = vunpack.c.h.b16 %v1814
        %v2098 = vunpack.c.l.b16 %v1815
        %v2099 = vunpack.c.h.b16 %v1815
        %v2100 = vunpack.c.l.b16 %v1816
        %v2101 = vunpack.c.h.b16 %v1816
        %v2102 = vunpack.c.l.b16 %v1817
        %v2103 = vunpack.c.h.b16 %v1817
        %v2104 = vunpack.c.l.b16 %v1818
        %v2105 = vunpack.c.h.b16 %v1818
        %v2106 = vunpack.c.l.b16 %v1819
        %v2107 = vunpack.c.h.b16 %v1819
        %v2108 = vunpack.c.l.b16 %v1820
        %v2109 = vunpack.c.h.b16 %v1820
        %v2110 = vunpack.c.l.b16 %v1821
        %v2111 = vunpack.c.h.b16 %v1821
        %v2112 = vunpack.c.l.b16 %v1822
        %v2113 = vunpack.c.h.b16 %v1822
        %v2114 = vunpack.c.l.b16 %v1823
        %v2115 = vunpack.c.h.b16 %v1823
        %v2116 = vunpack.c.l.b16 %v1824
        %v2117 = vunpack.c.h.b16 %v1824
        %v2118 = vunpack.c.l.b16 %v1825
        %v2119 = vunpack.c.h.b16 %v1825
        %v2120 = vunpack.c.l.b16 %v1826
        %v2121 = vunpack.c.h.b16 %v1826
        %v2122 = vunpack.c.l.b16 %v1827
        %v2123 = vunpack.c.h.b16 %v1827
        %v2124 = vunpack.c.l.b16 %v1828
        %v2125 = vunpack.c.h.b16 %v1828
        %v2126 = vunpack.c.l.b16 %v1829
        %v2127 = vunpack.c.h.b16 %v1829
        %v2128 = vunpack.c.l.b16 %v1830
        %v2129 = vunpack.c.h.b16 %v1830
        %v2130 = vunpack.c.l.b16 %v1831
        %v2131 = vunpack.c.h.b16 %v1831
        %v2132 = vunpack.c.l.b16 %v1832
        %v2133 = vunpack.c.h.b16 %v1832
        %v2134 = vunpack.c.l.b16 %v1833
        %v2135 = vunpack.c.h.b16 %v1833
        %v2136 = vunpack.c.l.b16 %v1834
        %v2137 = vunpack.c.h.b16 %v1834
        %v2138 = vunpack.c.l.b16 %v1835
        %v2139 = vunpack.c.h.b16 %v1835
        %v2140 = vunpack.c.l.b16 %v1836
        %v2141 = vunpack.c.h.b16 %v1836
        %v2142 = vunpack.c.l.b16 %v1837
        %v2143 = vunpack.c.h.b16 %v1837
        %v2144 = vunpack.c.l.b16 %v1838
        %v2145 = vunpack.c.h.b16 %v1838
        %v2146 = vunpack.c.l.b16 %v1839
        %v2147 = vunpack.c.h.b16 %v1839
        %v2148 = vunpack.c.l.b16 %v1840
        %v2149 = vunpack.c.h.b16 %v1840
        %v2150 = vunpack.c.l.b16 %v1841
        %v2151 = vunpack.c.h.b16 %v1841
        %v2152 = vunpack.c.l.b16 %v1842
        %v2153 = vunpack.c.h.b16 %v1842
        %v2154 = vunpack.c.l.b16 %v1843
        %v2155 = vunpack.c.h.b16 %v1843
        %v2156 = vunpack.c.l.b16 %v1844
        %v2157 = vunpack.c.h.b16 %v1844
        %v2158 = vunpack.c.l.b16 %v1845
        %v2159 = vunpack.c.h.b16 %v1845
        %v2160 = vunpack.c.l.b16 %v1846
        %v2161 = vunpack.c.h.b16 %v1846
        %v2162 = vunpack.c.l.b16 %v1847
        %v2163 = vunpack.c.h.b16 %v1847
        %v2164 = vunpack.c.l.b16 %v1848
        %v2165 = vunpack.c.h.b16 %v1848
        %v2166 = vunpack.c.l.b16 %v1849
        %v2167 = vunpack.c.h.b16 %v1849
        %v2168 = vunpack.c.l.b16 %v1850
        %v2169 = vunpack.c.h.b16 %v1850
        %v2170 = vunpack.c.l.b16 %v1851
        %v2171 = vunpack.c.h.b16 %v1851
        %v2172 = vunpack.c.l.b16 %v1852
        %v2173 = vunpack.c.h.b16 %v1852
        %v2174 = vunpack.c.l.b16 %v1853
        %v2175 = vunpack.c.h.b16 %v1853
        %v2176 = vunpack.c.l.b16 %v1854
        %v2177 = vunpack.c.h.b16 %v1854
        %v2178 = vunpack.c.l.b16 %v1855
        %v2179 = vunpack.c.h.b16 %v1855
        %v2180 = vunpack.c.l.b16 %v1856
        %v2181 = vunpack.c.h.b16 %v1856
        %v2182 = vunpack.c.l.b16 %v1857
        %v2183 = vunpack.c.h.b16 %v1857
        %v2184 = vunpack.c.l.b16 %v1858
        %v2185 = vunpack.c.h.b16 %v1858
        %v2186 = vunpack.c.l.b16 %v1859
        %v2187 = vunpack.c.h.b16 %v1859
        %v2188 = vunpack.c.l.b16 %v1860
        %v2189 = vunpack.c.h.b16 %v1860
        %v2190 = vunpack.c.l.b16 %v1861
        %v2191 = vunpack.c.h.b16 %v1861
        %v2192 = vunpack.c.l.b16 %v1862
        %v2193 = vunpack.c.h.b16 %v1862
        %v2194 = vunpack.c.l.b16 %v1863
        %v2195 = vunpack.c.h.b16 %v1863
        %v2196 = vunpack.c.l.b16 %v1864
        %v2197 = vunpack.c.h.b16 %v1864
        %v2198 = vunpack.c.l.b16 %v1865
        %v2199 = vunpack.c.h.b16 %v1865
        %v2200 = vunpack.c.l.b16 %v1866
        %v2201 = vunpack.c.h.b16 %v1866
        %v2202 = vunpack.c.l.b16 %v1867
        %v2203 = vunpack.c.h.b16 %v1867
        %v2204 = vunpack.c.l.b16 %v1868
        %v2205 = vunpack.c.h.b16 %v1868
        %v2206 = vunpack.c.l.b16 %v1869
        %v2207 = vunpack.c.h.b16 %v1869
        %v2208 = vunpack.c.l.b16 %v1870
        %v2209 = vunpack.c.h.b16 %v1870
        %v2210 = vunpack.c.l.b16 %v1871
        %v2211 = vunpack.c.h.b16 %v1871
        %v2212 = vunpack.c.l.b16 %v1872
        %v2213 = vunpack.c.h.b16 %v1872
        %v2214 = vunpack.c.l.b16 %v1873
        %v2215 = vunpack.c.h.b16 %v1873
        %v2216 = vunpack.c.l.b16 %v1874
        %v2217 = vunpack.c.h.b16 %v1874
        %v2218 = vunpack.c.l.b16 %v1875
        %v2219 = vunpack.c.h.b16 %v1875
        %v2220 = vunpack.c.l.b16 %v1876
        %v2221 = vunpack.c.h.b16 %v1876
        %v2222 = vunpack.c.l.b16 %v1877
        %v2223 = vunpack.c.h.b16 %v1877
        %v2224 = vunpack.c.l.b16 %v1878
        %v2225 = vunpack.c.h.b16 %v1878
        %v2226 = vunpack.c.l.b16 %v1879
        %v2227 = vunpack.c.h.b16 %v1879
        %v2228 = vunpack.c.l.b16 %v1880
        %v2229 = vunpack.c.h.b16 %v1880
        %v2230 = vunpack.c.l.b16 %v1881
        %v2231 = vunpack.c.h.b16 %v1881
        %v2232 = vunpack.c.l.b16 %v1882
        %v2233 = vunpack.c.h.b16 %v1882
        %v2234 = vunpack.c.l.b16 %v1883
        %v2235 = vunpack.c.h.b16 %v1883
        %v2236 = vunpack.c.l.b16 %v1884
        %v2237 = vunpack.c.h.b16 %v1884
        %v2238 = vunpack.c.l.b16 %v1885
        %v2239 = vunpack.c.h.b16 %v1885
        %v2240 = vunpack.c.l.b16 %v1886
        %v2241 = vunpack.c.h.b16 %v1886
        %v2242 = vunpack.c.l.b16 %v1887
        %v2243 = vunpack.c.h.b16 %v1887
        %v2244 = vunpack.c.l.b16 %v1888
        %v2245 = vunpack.c.h.b16 %v1888
        %v2246 = vunpack.c.l.b16 %v1889
        %v2247 = vunpack.c.h.b16 %v1889
        %v2248 = vunpack.c.l.b16 %v1890
        %v2249 = vunpack.c.h.b16 %v1890
        %v2250 = vunpack.c.l.b16 %v1891
        %v2251 = vunpack.c.h.b16 %v1891
        %v2252 = vunpack.c.l.b16 %v1892
        %v2253 = vunpack.c.h.b16 %v1892
        %v2254 = vunpack.c.l.b16 %v1893
        %v2255 = vunpack.c.h.b16 %v1893
        %v2256 = vunpack.c.l.b16 %v1894
        %v2257 = vunpack.c.h.b16 %v1894
        %v2258 = vunpack.c.l.b16 %v1895
        %v2259 = vunpack.c.h.b16 %v1895
        %v2260 = vunpack.c.l.b16 %v1896
        %v2261 = vunpack.c.h.b16 %v1896
        %v2262 = vunpack.c.l.b16 %v1897
        %v2263 = vunpack.c.h.b16 %v1897
        %v2264 = vunpack.c.l.b16 %v1898
        %v2265 = vunpack.c.h.b16 %v1898
        %v2266 = vunpack.c.l.b16 %v1899
        %v2267 = vunpack.c.h.b16 %v1899
        %v2268 = vunpack.c.l.b16 %v1900
        %v2269 = vunpack.c.h.b16 %v1900
        %v2270 = vunpack.c.l.b16 %v1901
        %v2271 = vunpack.c.h.b16 %v1901
        %v2272 = vunpack.c.l.b16 %v1902
        %v2273 = vunpack.c.h.b16 %v1902
        %v2274 = vunpack.c.l.b16 %v1903
        %v2275 = vunpack.c.h.b16 %v1903
        %v2276 = vunpack.c.l.b16 %v1904
        %v2277 = vunpack.c.h.b16 %v1904
        %v2278 = vunpack.c.l.b16 %v1905
        %v2279 = vunpack.c.h.b16 %v1905
        %v2280 = vunpack.c.l.b16 %v1906
        %v2281 = vunpack.c.h.b16 %v1906
        %v2282 = vunpack.c.l.b16 %v1907
        %v2283 = vunpack.c.h.b16 %v1907
        %v2284 = vunpack.c.l.b16 %v1908
        %v2285 = vunpack.c.h.b16 %v1908
        %v2286 = vunpack.c.l.b16 %v1909
        %v2287 = vunpack.c.h.b16 %v1909
        %v2288 = vunpack.c.l.b16 %v1910
        %v2289 = vunpack.c.h.b16 %v1910
        %v2290 = vunpack.c.l.b16 %v1911
        %v2291 = vunpack.c.h.b16 %v1911
        %v2292 = vunpack.c.l.b16 %v1912
        %v2293 = vunpack.c.h.b16 %v1912
        %v2294 = vunpack.c.l.b16 %v1913
        %v2295 = vunpack.c.h.b16 %v1913
        %v2296 = vunpack.c.l.b16 %v1914
        %v2297 = vunpack.c.h.b16 %v1914
        %v2298 = vunpack.c.l.b16 %v1915
        %v2299 = vunpack.c.h.b16 %v1915
        %v2300 = vpack.c.b16 %v2048, %v2044
        %v2301 = vpack.c.b16 %v2049, %v2045
        %v2302 = vpack.c.b16 %v2050, %v2046
        %v2303 = vpack.c.b16 %v2051, %v2047
        %v2304 = vpack.c.b16 %v2056, %v2052
        %v2305 = vpack.c.b16 %v2057, %v2053
        %v2306 = vpack.c.b16 %v2058, %v2054
        %v2307 = vpack.c.b16 %v2059, %v2055
        %v2308 = vpack.c.b16 %v2064, %v2060
        %v2309 = vpack.c.b16 %v2065, %v2061
        %v2310 = vpack.c.b16 %v2066, %v2062
        %v2311 = vpack.c.b16 %v2067, %v2063
        %v2312 = vpack.c.b16 %v2072, %v2068
        %v2313 = vpack.c.b16 %v2073, %v2069
        %v2314 = vpack.c.b16 %v2074, %v2070
        %v2315 = vpack.c.b16 %v2075, %v2071
        %v2316 = vpack.c.b16 %v2080, %v2076
        %v2317 = vpack.c.b16 %v2081, %v2077
        %v2318 = vpack.c.b16 %v2082, %v2078
        %v2319 = vpack.c.b16 %v2083, %v2079
        %v2320 = vpack.c.b16 %v2088, %v2084
        %v2321 = vpack.c.b16 %v2089, %v2085
        %v2322 = vpack.c.b16 %v2090, %v2086
        %v2323 = vpack.c.b16 %v2091, %v2087
        %v2324 = vpack.c.b16 %v2096, %v2092
        %v2325 = vpack.c.b16 %v2097, %v2093
        %v2326 = vpack.c.b16 %v2098, %v2094
        %v2327 = vpack.c.b16 %v2099, %v2095
        %v2328 = vpack.c.b16 %v2104, %v2100
        %v2329 = vpack.c.b16 %v2105, %v2101
        %v2330 = vpack.c.b16 %v2106, %v2102
        %v2331 = vpack.c.b16 %v2107, %v2103
        %v2332 = vpack.c.b16 %v2112, %v2108
        %v2333 = vpack.c.b16 %v2113, %v2109
        %v2334 = vpack.c.b16 %v2114, %v2110
        %v2335 = vpack.c.b16 %v2115, %v2111
        %v2336 = vpack.c.b16 %v2120, %v2116
        %v2337 = vpack.c.b16 %v2121, %v2117
        %v2338 = vpack.c.b16 %v2122, %v2118
        %v2339 = vpack.c.b16 %v2123, %v2119
        %v2340 = vpack.c.b16 %v2128, %v2124
        %v2341 = vpack.c.b16 %v2129, %v2125
        %v2342 = vpack.c.b16 %v2130, %v2126
        %v2343 = vpack.c.b16 %v2131, %v2127
        %v2344 = vpack.c.b16 %v2136, %v2132
        %v2345 = vpack.c.b16 %v2137, %v2133
        %v2346 = vpack.c.b16 %v2138, %v2134
        %v2347 = vpack.c.b16 %v2139, %v2135
        %v2348 = vpack.c.b16 %v2144, %v2140
        %v2349 = vpack.c.b16 %v2145, %v2141
        %v2350 = vpack.c.b16 %v2146, %v2142
        %v2351 = vpack.c.b16 %v2147, %v2143
        %v2352 = vpack.c.b16 %v2152, %v2148
        %v2353 = vpack.c.b16 %v2153, %v2149
        %v2354 = vpack.c.b16 %v2154, %v2150
        %v2355 = vpack.c.b16 %v2155, %v2151
        %v2356 = vpack.c.b16 %v2160, %v2156
        %v2357 = vpack.c.b16 %v2161, %v2157
        %v2358 = vpack.c.b16 %v2162, %v2158
        %v2359 = vpack.c.b16 %v2163, %v2159
        %v2360 = vpack.c.b16 %v2168, %v2164
        %v2361 = vpack.c.b16 %v2169, %v2165
        %v2362 = vpack.c.b16 %v2170, %v2166
        %v2363 = vpack.c.b16 %v2171, %v2167
        %v2364 = vpack.c.b16 %v2176, %v2172
        %v2365 = vpack.c.b16 %v2177, %v2173
        %v2366 = vpack.c.b16 %v2178, %v2174
        %v2367 = vpack.c.b16 %v2179, %v2175
        %v2368 = vpack.c.b16 %v2184, %v2180
        %v2369 = vpack.c.b16 %v2185, %v2181
        %v2370 = vpack.c.b16 %v2186, %v2182
        %v2371 = vpack.c.b16 %v2187, %v2183
        %v2372 = vpack.c.b16 %v2192, %v2188
        %v2373 = vpack.c.b16 %v2193, %v2189
        %v2374 = vpack.c.b16 %v2194, %v2190
        %v2375 = vpack.c.b16 %v2195, %v2191
        %v2376 = vpack.c.b16 %v2200, %v2196
        %v2377 = vpack.c.b16 %v2201, %v2197
        %v2378 = vpack.c.b16 %v2202, %v2198
        %v2379 = vpack.c.b16 %v2203, %v2199
        %v2380 = vpack.c.b16 %v2208, %v2204
        %v2381 = vpack.c.b16 %v2209, %v2205
        %v2382 = vpack.c.b16 %v2210, %v2206
        %v2383 = vpack.c.b16 %v2211, %v2207
        %v2384 = vpack.c.b16 %v2216, %v2212
        %v2385 = vpack.c.b16 %v2217, %v2213
        %v2386 = vpack.c.b16 %v2218, %v2214
        %v2387 = vpack.c.b16 %v2219, %v2215
        %v2388 = vpack.c.b16 %v2224, %v2220
        %v2389 = vpack.c.b16 %v2225, %v2221
        %v2390 = vpack.c.b16 %v2226, %v2222
        %v2391 = vpack.c.b16 %v2227, %v2223
        %v2392 = vpack.c.b16 %v2232, %v2228
        %v2393 = vpack.c.b16 %v2233, %v2229
        %v2394 = vpack.c.b16 %v2234, %v2230
        %v2395 = vpack.c.b16 %v2235, %v2231
        %v2396 = vpack.c.b16 %v2240, %v2236
        %v2397 = vpack.c.b16 %v2241, %v2237
        %v2398 = vpack.c.b16 %v2242, %v2238
        %v2399 = vpack.c.b16 %v2243, %v2239
        %v2400 = vpack.c.b16 %v2248, %v2244
        %v2401 = vpack.c.b16 %v2249, %v2245
        %v2402 = vpack.c.b16 %v2250, %v2246
        %v2403 = vpack.c.b16 %v2251, %v2247
        %v2404 = vpack.c.b16 %v2256, %v2252
        %v2405 = vpack.c.b16 %v2257, %v2253
        %v2406 = vpack.c.b16 %v2258, %v2254
        %v2407 = vpack.c.b16 %v2259, %v2255
        %v2408 = vpack.c.b16 %v2264, %v2260
        %v2409 = vpack.c.b16 %v2265, %v2261
        %v2410 = vpack.c.b16 %v2266, %v2262
        %v2411 = vpack.c.b16 %v2267, %v2263
        %v2412 = vpack.c.b16 %v2272, %v2268
        %v2413 = vpack.c.b16 %v2273, %v2269
        %v2414 = vpack.c.b16 %v2274, %v2270
        %v2415 = vpack.c.b16 %v2275, %v2271
        %v2416 = vpack.c.b16 %v2280, %v2276
        %v2417 = vpack.c.b16 %v2281, %v2277
        %v2418 = vpack.c.b16 %v2282, %v2278
        %v2419 = vpack.c.b16 %v2283, %v2279
        %v2420 = vpack.c.b16 %v2288, %v2284
        %v2421 = vpack.c.b16 %v2289, %v2285
        %v2422 = vpack.c.b16 %v2290, %v2286
        %v2423 = vpack.c.b16 %v2291, %v2287
        %v2424 = vpack.c.b16 %v2296, %v2292
        %v2425 = vpack.c.b16 %v2297, %v2293
        %v2426 = vpack.c.b16 %v2298, %v2294
        %v2427 = vpack.c.b16 %v2299, %v2295
        %2556 = vmatprep.subr.bf16.mxu0 %v2301
        %2557 = vmatpush1.bf16.msra.mxu0 %v2300
        %2558 = vmatprep.subr.bf16.mxu0 %v2305
        %2559 = vmatpush1.bf16.msra.mxu0 %v2304
        %2560 = vmatprep.subr.bf16.mxu0 %v2309
        %2561 = vmatpush1.bf16.msra.mxu0 %v2308
        %2562 = vmatprep.subr.bf16.mxu0 %v2313
        %2563 = vmatpush1.bf16.msra.mxu0 %v2312
        %2564 = vmatprep.subr.bf16.mxu0 %v2317
        %2565 = vmatpush1.bf16.msra.mxu0 %v2316
        %2566 = vmatprep.subr.bf16.mxu0 %v2321
        %2567 = vmatpush1.bf16.msra.mxu0 %v2320
        %2568 = vmatprep.subr.bf16.mxu0 %v2325
        %2569 = vmatpush1.bf16.msra.mxu0 %v2324
        %2570 = vmatprep.subr.bf16.mxu0 %v2329
        %2571 = vmatpush1.bf16.msra.mxu0 %v2328
        %2572 = vmatprep.subr.bf16.mxu0 %v2333
        %2573 = vmatpush1.bf16.msra.mxu0 %v2332
        %2574 = vmatprep.subr.bf16.mxu0 %v2337
        %2575 = vmatpush1.bf16.msra.mxu0 %v2336
        %2576 = vmatprep.subr.bf16.mxu0 %v2341
        %2577 = vmatpush1.bf16.msra.mxu0 %v2340
        %2578 = vmatprep.subr.bf16.mxu0 %v2345
        %2579 = vmatpush1.bf16.msra.mxu0 %v2344
        %2580 = vmatprep.subr.bf16.mxu0 %v2349
        %2581 = vmatpush1.bf16.msra.mxu0 %v2348
        %2582 = vmatprep.subr.bf16.mxu0 %v2353
        %2583 = vmatpush1.bf16.msra.mxu0 %v2352
        %2584 = vmatprep.subr.bf16.mxu0 %v2357
        %2585 = vmatpush1.bf16.msra.mxu0 %v2356
        %2586 = vmatprep.subr.bf16.mxu0 %v2361
        %2587 = vmatpush1.bf16.msra.mxu0 %v2360
        %2588 = vmatprep.mubr.bf16.mxu0 %v1785
        %2589 = vmatmul.mubr.bf16.gmra.mrb[0].mxu0 %v1784
        %v2590 = vpop.f32.mrb[0].mxu0
        %v2591 = vadd.f32 0.0, %v2590
        %v2592 = vpop.f32.mrb[0].mxu0
        %v2593 = vadd.f32 0.0, %v2592
        %v2594 = vpop.f32.mrb[0].mxu0
        %v2595 = vadd.f32 0.0, %v2594
        %v2596 = vpop.f32.mrb[0].mxu0
        %v2597 = vadd.f32 0.0, %v2596
        %2598 = vdwg.mxu0
        %2599 = vmatprep.subr.bf16.mxu0 %v2365
        %2600 = vmatpush1.bf16.msra.mxu0 %v2364
        %2601 = vmatprep.subr.bf16.mxu0 %v2369
        %2602 = vmatpush1.bf16.msra.mxu0 %v2368
        %2603 = vmatprep.subr.bf16.mxu0 %v2373
        %2604 = vmatpush1.bf16.msra.mxu0 %v2372
        %2605 = vmatprep.subr.bf16.mxu0 %v2377
        %2606 = vmatpush1.bf16.msra.mxu0 %v2376
        %2607 = vmatprep.subr.bf16.mxu0 %v2381
        %2608 = vmatpush1.bf16.msra.mxu0 %v2380
        %2609 = vmatprep.subr.bf16.mxu0 %v2385
        %2610 = vmatpush1.bf16.msra.mxu0 %v2384
        %2611 = vmatprep.subr.bf16.mxu0 %v2389
        %2612 = vmatpush1.bf16.msra.mxu0 %v2388
        %2613 = vmatprep.subr.bf16.mxu0 %v2393
        %2614 = vmatpush1.bf16.msra.mxu0 %v2392
        %2615 = vmatprep.subr.bf16.mxu0 %v2397
        %2616 = vmatpush1.bf16.msra.mxu0 %v2396
        %2617 = vmatprep.subr.bf16.mxu0 %v2401
        %2618 = vmatpush1.bf16.msra.mxu0 %v2400
        %2619 = vmatprep.subr.bf16.mxu0 %v2405
        %2620 = vmatpush1.bf16.msra.mxu0 %v2404
        %2621 = vmatprep.subr.bf16.mxu0 %v2409
        %2622 = vmatpush1.bf16.msra.mxu0 %v2408
        %2623 = vmatprep.subr.bf16.mxu0 %v2413
        %2624 = vmatpush1.bf16.msra.mxu0 %v2412
        %2625 = vmatprep.subr.bf16.mxu0 %v2417
        %2626 = vmatpush1.bf16.msra.mxu0 %v2416
        %2627 = vmatprep.subr.bf16.mxu0 %v2421
        %2628 = vmatpush1.bf16.msra.mxu0 %v2420
        %2629 = vmatprep.subr.bf16.mxu0 %v2425
        %2630 = vmatpush1.bf16.msra.mxu0 %v2424
        %2631 = vmatprep.mubr.bf16.mxu0 %v1787
        %2632 = vmatmul.mubr.bf16.gmra.mrb[0].mxu0 %v1786
        %v2633 = vpop.f32.mrb[0].mxu0
        %v2634 = vadd.f32 %v2591, %v2633
        %v2635 = vpop.f32.mrb[0].mxu0
        %v2636 = vadd.f32 %v2593, %v2635
        %v2637 = vpop.f32.mrb[0].mxu0
        %v2638 = vadd.f32 %v2595, %v2637
        %v2639 = vpop.f32.mrb[0].mxu0
        %v2640 = vadd.f32 %v2597, %v2639
        %2641 = vdwg.mxu0
        %2642 = vmatprep.subr.bf16.mxu0 %v2303
        %2643 = vmatpush1.bf16.msra.mxu0 %v2302
        %2644 = vmatprep.subr.bf16.mxu0 %v2307
        %2645 = vmatpush1.bf16.msra.mxu0 %v2306
        %2646 = vmatprep.subr.bf16.mxu0 %v2311
        %2647 = vmatpush1.bf16.msra.mxu0 %v2310
        %2648 = vmatprep.subr.bf16.mxu0 %v2315
        %2649 = vmatpush1.bf16.msra.mxu0 %v2314
        %2650 = vmatprep.subr.bf16.mxu0 %v2319
        %2651 = vmatpush1.bf16.msra.mxu0 %v2318
        %2652 = vmatprep.subr.bf16.mxu0 %v2323
        %2653 = vmatpush1.bf16.msra.mxu0 %v2322
        %2654 = vmatprep.subr.bf16.mxu0 %v2327
        %2655 = vmatpush1.bf16.msra.mxu0 %v2326
        %2656 = vmatprep.subr.bf16.mxu0 %v2331
        %2657 = vmatpush1.bf16.msra.mxu0 %v2330
        %2658 = vmatprep.subr.bf16.mxu0 %v2335
        %2659 = vmatpush1.bf16.msra.mxu0 %v2334
        %2660 = vmatprep.subr.bf16.mxu0 %v2339
        %2661 = vmatpush1.bf16.msra.mxu0 %v2338
        %2662 = vmatprep.subr.bf16.mxu0 %v2343
        %2663 = vmatpush1.bf16.msra.mxu0 %v2342
        %2664 = vmatprep.subr.bf16.mxu0 %v2347
        %2665 = vmatpush1.bf16.msra.mxu0 %v2346
        %2666 = vmatprep.subr.bf16.mxu0 %v2351
        %2667 = vmatpush1.bf16.msra.mxu0 %v2350
        %2668 = vmatprep.subr.bf16.mxu0 %v2355
        %2669 = vmatpush1.bf16.msra.mxu0 %v2354
        %2670 = vmatprep.subr.bf16.mxu0 %v2359
        %2671 = vmatpush1.bf16.msra.mxu0 %v2358
        %2672 = vmatprep.subr.bf16.mxu0 %v2363
        %2673 = vmatpush1.bf16.msra.mxu0 %v2362
        %2674 = vmatprep.mubr.bf16.mxu0 %v1785
        %2675 = vmatmul.mubr.bf16.gmra.mrb[0].mxu0 %v1784
        %v2676 = vpop.f32.mrb[0].mxu0
        %v2677 = vadd.f32 0.0, %v2676
        %v2678 = vpop.f32.mrb[0].mxu0
        %v2679 = vadd.f32 0.0, %v2678
        %v2680 = vpop.f32.mrb[0].mxu0
        %v2681 = vadd.f32 0.0, %v2680
        %v2682 = vpop.f32.mrb[0].mxu0
        %v2683 = vadd.f32 0.0, %v2682
        %2684 = vdwg.mxu0
        %2685 = vmatprep.subr.bf16.mxu0 %v2367
        %2686 = vmatpush1.bf16.msra.mxu0 %v2366
        %2687 = vmatprep.subr.bf16.mxu0 %v2371
        %2688 = vmatpush1.bf16.msra.mxu0 %v2370
        %2689 = vmatprep.subr.bf16.mxu0 %v2375
        %2690 = vmatpush1.bf16.msra.mxu0 %v2374
        %2691 = vmatprep.subr.bf16.mxu0 %v2379
        %2692 = vmatpush1.bf16.msra.mxu0 %v2378
        %2693 = vmatprep.subr.bf16.mxu0 %v2383
        %2694 = vmatpush1.bf16.msra.mxu0 %v2382
        %2695 = vmatprep.subr.bf16.mxu0 %v2387
        %2696 = vmatpush1.bf16.msra.mxu0 %v2386
        %2697 = vmatprep.subr.bf16.mxu0 %v2391
        %2698 = vmatpush1.bf16.msra.mxu0 %v2390
        %2699 = vmatprep.subr.bf16.mxu0 %v2395
        %2700 = vmatpush1.bf16.msra.mxu0 %v2394
        %2701 = vmatprep.subr.bf16.mxu0 %v2399
        %2702 = vmatpush1.bf16.msra.mxu0 %v2398
        %2703 = vmatprep.subr.bf16.mxu0 %v2403
        %2704 = vmatpush1.bf16.msra.mxu0 %v2402
        %2705 = vmatprep.subr.bf16.mxu0 %v2407
        %2706 = vmatpush1.bf16.msra.mxu0 %v2406
        %2707 = vmatprep.subr.bf16.mxu0 %v2411
        %2708 = vmatpush1.bf16.msra.mxu0 %v2410
        %2709 = vmatprep.subr.bf16.mxu0 %v2415
        %2710 = vmatpush1.bf16.msra.mxu0 %v2414
        %2711 = vmatprep.subr.bf16.mxu0 %v2419
        %2712 = vmatpush1.bf16.msra.mxu0 %v2418
        %2713 = vmatprep.subr.bf16.mxu0 %v2423
        %2714 = vmatpush1.bf16.msra.mxu0 %v2422
        %2715 = vmatprep.subr.bf16.mxu0 %v2427
        %2716 = vmatpush1.bf16.msra.mxu0 %v2426
        %2717 = vmatprep.mubr.bf16.mxu0 %v1787
        %2718 = vmatmul.mubr.bf16.gmra.mrb[0].mxu0 %v1786
        %v2719 = vpop.f32.mrb[0].mxu0
        %v2720 = vadd.f32 %v2677, %v2719
        %v2721 = vpop.f32.mrb[0].mxu0
        %v2722 = vadd.f32 %v2679, %v2721
        %v2723 = vpop.f32.mrb[0].mxu0
        %v2724 = vadd.f32 %v2681, %v2723
        %v2725 = vpop.f32.mrb[0].mxu0
        %v2726 = vadd.f32 %v2683, %v2725
        %2727 = vdwg.mxu0
        %v2728 = vpack.c.bf16 %v2638, %v2634
        %v2729 = vpack.c.bf16 %v2640, %v2636
        %v2730 = vpack.c.bf16 %v2724, %v2720
        %v2731 = vpack.c.bf16 %v2726, %v2722
        %v2732 = vld [vmem:[%s8] sm:$0xf]
        %v2734 = vlaneseq
        %v2735 = vshrl.u32 %v2734, 7
        %v2736 = vsub.s32 0, %v2735
        %v2737 = vrot.slane %v2732, %v2736
        %v2738 = vlaneseq
        %v2739 = vshrl.u32 %v2738, 7
        %v2740 = vsub.s32 1, %v2739
        %v2741 = vrot.slane %v2732, %v2740
        %v2742 = vlaneseq
        %v2743 = vshrl.u32 %v2742, 7
        %v2744 = vsub.s32 2, %v2743
        %v2745 = vrot.slane %v2732, %v2744
        %v2746 = vlaneseq
        %v2747 = vshrl.u32 %v2746, 7
        %v2748 = vsub.s32 3, %v2747
        %v2749 = vrot.slane %v2732, %v2748
        %v2754 = vpack.c.bf16 %v2737, %v2737
        %v2755 = vpack.c.bf16 %v2741, %v2741
        %v2756 = vpack.c.bf16 %v2745, %v2745
        %v2757 = vpack.c.bf16 %v2749, %v2749
        %v2759 = vpack.i.b16 %v2754, %v2754
        %v2761 = vlaneseq
        %v2762 = vshrl.u32 %v2761, 7
        %v2763 = vsub.s32 0, %v2762
        %v2764 = vrot.slane %v2759, %v2763
        %v2766 = vpack.i.b16 %v2755, %v2755
        %v2768 = vlaneseq
        %v2769 = vshrl.u32 %v2768, 7
        %v2770 = vsub.s32 0, %v2769
        %v2771 = vrot.slane %v2766, %v2770
        %v2773 = vpack.i.b16 %v2756, %v2756
        %v2775 = vlaneseq
        %v2776 = vshrl.u32 %v2775, 7
        %v2777 = vsub.s32 0, %v2776
        %v2778 = vrot.slane %v2773, %v2777
        %v2780 = vpack.i.b16 %v2757, %v2757
        %v2782 = vlaneseq
        %v2783 = vshrl.u32 %v2782, 7
        %v2784 = vsub.s32 0, %v2783
        %v2785 = vrot.slane %v2780, %v2784
        %v2786 = vadd.bf16 %v2728, %v2764
        %v2787 = vadd.bf16 %v2729, %v2771
        %v2788 = vadd.bf16 %v2730, %v2778
        %v2789 = vadd.bf16 %v2731, %v2785
        %v2790 = vmax.bf16 %v2786, 0
        %v2791 = vmax.bf16 %v2787, 0
        %v2792 = vmax.bf16 %v2788, 0
        %v2793 = vmax.bf16 %v2789, 0
        %v2794 = vld [vmem:[#allocation6] sm:$0xff]
        %v2795 = vld [vmem:[#allocation6 + $0x8] sm:$0xff]
        %v2796 = vld [vmem:[#allocation6 + $0x10] sm:$0xff]
        %v2797 = vld [vmem:[#allocation6 + $0x18] sm:$0xff]
        %v2798 = vld [vmem:[#allocation6 + $0x20] sm:$0xff]
        %v2799 = vld [vmem:[#allocation6 + $0x28] sm:$0xff]
        %v2800 = vld [vmem:[#allocation6 + $0x30] sm:$0xff]
        %v2801 = vld [vmem:[#allocation6 + $0x38] sm:$0xff]
        %v2802 = vld [vmem:[#allocation6 + $0x40] sm:$0xff]
        %v2803 = vld [vmem:[#allocation6 + $0x48] sm:$0xff]
        %v2804 = vld [vmem:[#allocation6 + $0x50] sm:$0xff]
        %v2805 = vld [vmem:[#allocation6 + $0x58] sm:$0xff]
        %v2806 = vld [vmem:[#allocation6 + $0x60] sm:$0xff]
        %v2807 = vld [vmem:[#allocation6 + $0x68] sm:$0xff]
        %v2808 = vld [vmem:[#allocation6 + $0x70] sm:$0xff]
        %v2809 = vld [vmem:[#allocation6 + $0x78] sm:$0xff]
        %v2810 = vld [vmem:[#allocation6 + $0x80] sm:$0xff]
        %v2811 = vld [vmem:[#allocation6 + $0x88] sm:$0xff]
        %v2812 = vld [vmem:[#allocation6 + $0x90] sm:$0xff]
        %v2813 = vld [vmem:[#allocation6 + $0x98] sm:$0xff]
        %v2814 = vld [vmem:[#allocation6 + $0xa0] sm:$0xff]
        %v2815 = vld [vmem:[#allocation6 + $0xa8] sm:$0xff]
        %v2816 = vld [vmem:[#allocation6 + $0xb0] sm:$0xff]
        %v2817 = vld [vmem:[#allocation6 + $0xb8] sm:$0xff]
        %v2818 = vld [vmem:[#allocation6 + $0xc0] sm:$0xff]
        %v2819 = vld [vmem:[#allocation6 + $0xc8] sm:$0xff]
        %v2820 = vld [vmem:[#allocation6 + $0xd0] sm:$0xff]
        %v2821 = vld [vmem:[#allocation6 + $0xd8] sm:$0xff]
        %v2822 = vld [vmem:[#allocation6 + $0xe0] sm:$0xff]
        %v2823 = vld [vmem:[#allocation6 + $0xe8] sm:$0xff]
        %v2824 = vld [vmem:[#allocation6 + $0xf0] sm:$0xff]
        %v2825 = vld [vmem:[#allocation6 + $0xf8] sm:$0xff]
        %v2826 = vld [vmem:[#allocation6 + $0x100] sm:$0xff]
        %v2827 = vld [vmem:[#allocation6 + $0x108] sm:$0xff]
        %v2828 = vld [vmem:[#allocation6 + $0x110] sm:$0xff]
        %v2829 = vld [vmem:[#allocation6 + $0x118] sm:$0xff]
        %v2830 = vld [vmem:[#allocation6 + $0x120] sm:$0xff]
        %v2831 = vld [vmem:[#allocation6 + $0x128] sm:$0xff]
        %v2832 = vld [vmem:[#allocation6 + $0x130] sm:$0xff]
        %v2833 = vld [vmem:[#allocation6 + $0x138] sm:$0xff]
        %v2834 = vld [vmem:[#allocation6 + $0x140] sm:$0xff]
        %v2835 = vld [vmem:[#allocation6 + $0x148] sm:$0xff]
        %v2836 = vld [vmem:[#allocation6 + $0x150] sm:$0xff]
        %v2837 = vld [vmem:[#allocation6 + $0x158] sm:$0xff]
        %v2838 = vld [vmem:[#allocation6 + $0x160] sm:$0xff]
        %v2839 = vld [vmem:[#allocation6 + $0x168] sm:$0xff]
        %v2840 = vld [vmem:[#allocation6 + $0x170] sm:$0xff]
        %v2841 = vld [vmem:[#allocation6 + $0x178] sm:$0xff]
        %v2842 = vld [vmem:[#allocation6 + $0x180] sm:$0xff]
        %v2843 = vld [vmem:[#allocation6 + $0x188] sm:$0xff]
        %v2844 = vld [vmem:[#allocation6 + $0x190] sm:$0xff]
        %v2845 = vld [vmem:[#allocation6 + $0x198] sm:$0xff]
        %v2846 = vld [vmem:[#allocation6 + $0x1a0] sm:$0xff]
        %v2847 = vld [vmem:[#allocation6 + $0x1a8] sm:$0xff]
        %v2848 = vld [vmem:[#allocation6 + $0x1b0] sm:$0xff]
        %v2849 = vld [vmem:[#allocation6 + $0x1b8] sm:$0xff]
        %v2850 = vld [vmem:[#allocation6 + $0x1c0] sm:$0xff]
        %v2851 = vld [vmem:[#allocation6 + $0x1c8] sm:$0xff]
        %v2852 = vld [vmem:[#allocation6 + $0x1d0] sm:$0xff]
        %v2853 = vld [vmem:[#allocation6 + $0x1d8] sm:$0xff]
        %v2854 = vld [vmem:[#allocation6 + $0x1e0] sm:$0xff]
        %v2855 = vld [vmem:[#allocation6 + $0x1e8] sm:$0xff]
        %v2856 = vld [vmem:[#allocation6 + $0x1f0] sm:$0xff]
        %v2857 = vld [vmem:[#allocation6 + $0x1f8] sm:$0xff]
        %v2922 = vunpack.c.l.b16 %v2794
        %v2923 = vunpack.c.h.b16 %v2794
        %v2924 = vunpack.c.l.b16 %v2795
        %v2925 = vunpack.c.h.b16 %v2795
        %v2926 = vunpack.c.l.b16 %v2796
        %v2927 = vunpack.c.h.b16 %v2796
        %v2928 = vunpack.c.l.b16 %v2797
        %v2929 = vunpack.c.h.b16 %v2797
        %v2930 = vunpack.c.l.b16 %v2798
        %v2931 = vunpack.c.h.b16 %v2798
        %v2932 = vunpack.c.l.b16 %v2799
        %v2933 = vunpack.c.h.b16 %v2799
        %v2934 = vunpack.c.l.b16 %v2800
        %v2935 = vunpack.c.h.b16 %v2800
        %v2936 = vunpack.c.l.b16 %v2801
        %v2937 = vunpack.c.h.b16 %v2801
        %v2938 = vunpack.c.l.b16 %v2802
        %v2939 = vunpack.c.h.b16 %v2802
        %v2940 = vunpack.c.l.b16 %v2803
        %v2941 = vunpack.c.h.b16 %v2803
        %v2942 = vunpack.c.l.b16 %v2804
        %v2943 = vunpack.c.h.b16 %v2804
        %v2944 = vunpack.c.l.b16 %v2805
        %v2945 = vunpack.c.h.b16 %v2805
        %v2946 = vunpack.c.l.b16 %v2806
        %v2947 = vunpack.c.h.b16 %v2806
        %v2948 = vunpack.c.l.b16 %v2807
        %v2949 = vunpack.c.h.b16 %v2807
        %v2950 = vunpack.c.l.b16 %v2808
        %v2951 = vunpack.c.h.b16 %v2808
        %v2952 = vunpack.c.l.b16 %v2809
        %v2953 = vunpack.c.h.b16 %v2809
        %v2954 = vunpack.c.l.b16 %v2810
        %v2955 = vunpack.c.h.b16 %v2810
        %v2956 = vunpack.c.l.b16 %v2811
        %v2957 = vunpack.c.h.b16 %v2811
        %v2958 = vunpack.c.l.b16 %v2812
        %v2959 = vunpack.c.h.b16 %v2812
        %v2960 = vunpack.c.l.b16 %v2813
        %v2961 = vunpack.c.h.b16 %v2813
        %v2962 = vunpack.c.l.b16 %v2814
        %v2963 = vunpack.c.h.b16 %v2814
        %v2964 = vunpack.c.l.b16 %v2815
        %v2965 = vunpack.c.h.b16 %v2815
        %v2966 = vunpack.c.l.b16 %v2816
        %v2967 = vunpack.c.h.b16 %v2816
        %v2968 = vunpack.c.l.b16 %v2817
        %v2969 = vunpack.c.h.b16 %v2817
        %v2970 = vunpack.c.l.b16 %v2818
        %v2971 = vunpack.c.h.b16 %v2818
        %v2972 = vunpack.c.l.b16 %v2819
        %v2973 = vunpack.c.h.b16 %v2819
        %v2974 = vunpack.c.l.b16 %v2820
        %v2975 = vunpack.c.h.b16 %v2820
        %v2976 = vunpack.c.l.b16 %v2821
        %v2977 = vunpack.c.h.b16 %v2821
        %v2978 = vunpack.c.l.b16 %v2822
        %v2979 = vunpack.c.h.b16 %v2822
        %v2980 = vunpack.c.l.b16 %v2823
        %v2981 = vunpack.c.h.b16 %v2823
        %v2982 = vunpack.c.l.b16 %v2824
        %v2983 = vunpack.c.h.b16 %v2824
        %v2984 = vunpack.c.l.b16 %v2825
        %v2985 = vunpack.c.h.b16 %v2825
        %v2986 = vunpack.c.l.b16 %v2826
        %v2987 = vunpack.c.h.b16 %v2826
        %v2988 = vunpack.c.l.b16 %v2827
        %v2989 = vunpack.c.h.b16 %v2827
        %v2990 = vunpack.c.l.b16 %v2828
        %v2991 = vunpack.c.h.b16 %v2828
        %v2992 = vunpack.c.l.b16 %v2829
        %v2993 = vunpack.c.h.b16 %v2829
        %v2994 = vunpack.c.l.b16 %v2830
        %v2995 = vunpack.c.h.b16 %v2830
        %v2996 = vunpack.c.l.b16 %v2831
        %v2997 = vunpack.c.h.b16 %v2831
        %v2998 = vunpack.c.l.b16 %v2832
        %v2999 = vunpack.c.h.b16 %v2832
        %v3000 = vunpack.c.l.b16 %v2833
        %v3001 = vunpack.c.h.b16 %v2833
        %v3002 = vunpack.c.l.b16 %v2834
        %v3003 = vunpack.c.h.b16 %v2834
        %v3004 = vunpack.c.l.b16 %v2835
        %v3005 = vunpack.c.h.b16 %v2835
        %v3006 = vunpack.c.l.b16 %v2836
        %v3007 = vunpack.c.h.b16 %v2836
        %v3008 = vunpack.c.l.b16 %v2837
        %v3009 = vunpack.c.h.b16 %v2837
        %v3010 = vunpack.c.l.b16 %v2838
        %v3011 = vunpack.c.h.b16 %v2838
        %v3012 = vunpack.c.l.b16 %v2839
        %v3013 = vunpack.c.h.b16 %v2839
        %v3014 = vunpack.c.l.b16 %v2840
        %v3015 = vunpack.c.h.b16 %v2840
        %v3016 = vunpack.c.l.b16 %v2841
        %v3017 = vunpack.c.h.b16 %v2841
        %v3018 = vunpack.c.l.b16 %v2842
        %v3019 = vunpack.c.h.b16 %v2842
        %v3020 = vunpack.c.l.b16 %v2843
        %v3021 = vunpack.c.h.b16 %v2843
        %v3022 = vunpack.c.l.b16 %v2844
        %v3023 = vunpack.c.h.b16 %v2844
        %v3024 = vunpack.c.l.b16 %v2845
        %v3025 = vunpack.c.h.b16 %v2845
        %v3026 = vunpack.c.l.b16 %v2846
        %v3027 = vunpack.c.h.b16 %v2846
        %v3028 = vunpack.c.l.b16 %v2847
        %v3029 = vunpack.c.h.b16 %v2847
        %v3030 = vunpack.c.l.b16 %v2848
        %v3031 = vunpack.c.h.b16 %v2848
        %v3032 = vunpack.c.l.b16 %v2849
        %v3033 = vunpack.c.h.b16 %v2849
        %v3034 = vunpack.c.l.b16 %v2850
        %v3035 = vunpack.c.h.b16 %v2850
        %v3036 = vunpack.c.l.b16 %v2851
        %v3037 = vunpack.c.h.b16 %v2851
        %v3038 = vunpack.c.l.b16 %v2852
        %v3039 = vunpack.c.h.b16 %v2852
        %v3040 = vunpack.c.l.b16 %v2853
        %v3041 = vunpack.c.h.b16 %v2853
        %v3042 = vunpack.c.l.b16 %v2854
        %v3043 = vunpack.c.h.b16 %v2854
        %v3044 = vunpack.c.l.b16 %v2855
        %v3045 = vunpack.c.h.b16 %v2855
        %v3046 = vunpack.c.l.b16 %v2856
        %v3047 = vunpack.c.h.b16 %v2856
        %v3048 = vunpack.c.l.b16 %v2857
        %v3049 = vunpack.c.h.b16 %v2857
        %v3050 = vpack.c.b16 %v2924, %v2922
        %v3051 = vpack.c.b16 %v2925, %v2923
        %v3052 = vpack.c.b16 %v2928, %v2926
        %v3053 = vpack.c.b16 %v2929, %v2927
        %v3054 = vpack.c.b16 %v2932, %v2930
        %v3055 = vpack.c.b16 %v2933, %v2931
        %v3056 = vpack.c.b16 %v2936, %v2934
        %v3057 = vpack.c.b16 %v2937, %v2935
        %v3058 = vpack.c.b16 %v2940, %v2938
        %v3059 = vpack.c.b16 %v2941, %v2939
        %v3060 = vpack.c.b16 %v2944, %v2942
        %v3061 = vpack.c.b16 %v2945, %v2943
        %v3062 = vpack.c.b16 %v2948, %v2946
        %v3063 = vpack.c.b16 %v2949, %v2947
        %v3064 = vpack.c.b16 %v2952, %v2950
        %v3065 = vpack.c.b16 %v2953, %v2951
        %v3066 = vpack.c.b16 %v2956, %v2954
        %v3067 = vpack.c.b16 %v2957, %v2955
        %v3068 = vpack.c.b16 %v2960, %v2958
        %v3069 = vpack.c.b16 %v2961, %v2959
        %v3070 = vpack.c.b16 %v2964, %v2962
        %v3071 = vpack.c.b16 %v2965, %v2963
        %v3072 = vpack.c.b16 %v2968, %v2966
        %v3073 = vpack.c.b16 %v2969, %v2967
        %v3074 = vpack.c.b16 %v2972, %v2970
        %v3075 = vpack.c.b16 %v2973, %v2971
        %v3076 = vpack.c.b16 %v2976, %v2974
        %v3077 = vpack.c.b16 %v2977, %v2975
        %v3078 = vpack.c.b16 %v2980, %v2978
        %v3079 = vpack.c.b16 %v2981, %v2979
        %v3080 = vpack.c.b16 %v2984, %v2982
        %v3081 = vpack.c.b16 %v2985, %v2983
        %v3082 = vpack.c.b16 %v2988, %v2986
        %v3083 = vpack.c.b16 %v2989, %v2987
        %v3084 = vpack.c.b16 %v2992, %v2990
        %v3085 = vpack.c.b16 %v2993, %v2991
        %v3086 = vpack.c.b16 %v2996, %v2994
        %v3087 = vpack.c.b16 %v2997, %v2995
        %v3088 = vpack.c.b16 %v3000, %v2998
        %v3089 = vpack.c.b16 %v3001, %v2999
        %v3090 = vpack.c.b16 %v3004, %v3002
        %v3091 = vpack.c.b16 %v3005, %v3003
        %v3092 = vpack.c.b16 %v3008, %v3006
        %v3093 = vpack.c.b16 %v3009, %v3007
        %v3094 = vpack.c.b16 %v3012, %v3010
        %v3095 = vpack.c.b16 %v3013, %v3011
        %v3096 = vpack.c.b16 %v3016, %v3014
        %v3097 = vpack.c.b16 %v3017, %v3015
        %v3098 = vpack.c.b16 %v3020, %v3018
        %v3099 = vpack.c.b16 %v3021, %v3019
        %v3100 = vpack.c.b16 %v3024, %v3022
        %v3101 = vpack.c.b16 %v3025, %v3023
        %v3102 = vpack.c.b16 %v3028, %v3026
        %v3103 = vpack.c.b16 %v3029, %v3027
        %v3104 = vpack.c.b16 %v3032, %v3030
        %v3105 = vpack.c.b16 %v3033, %v3031
        %v3106 = vpack.c.b16 %v3036, %v3034
        %v3107 = vpack.c.b16 %v3037, %v3035
        %v3108 = vpack.c.b16 %v3040, %v3038
        %v3109 = vpack.c.b16 %v3041, %v3039
        %v3110 = vpack.c.b16 %v3044, %v3042
        %v3111 = vpack.c.b16 %v3045, %v3043
        %v3112 = vpack.c.b16 %v3048, %v3046
        %v3113 = vpack.c.b16 %v3049, %v3047
        %3178 = vmatprep.subr.bf16.mxu0 %v3051
        %3179 = vmatpush1.bf16.msra.mxu0 %v3050
        %3180 = vmatprep.subr.bf16.mxu0 %v3053
        %3181 = vmatpush1.bf16.msra.mxu0 %v3052
        %3182 = vmatprep.subr.bf16.mxu0 %v3055
        %3183 = vmatpush1.bf16.msra.mxu0 %v3054
        %3184 = vmatprep.subr.bf16.mxu0 %v3057
        %3185 = vmatpush1.bf16.msra.mxu0 %v3056
        %3186 = vmatprep.subr.bf16.mxu0 %v3059
        %3187 = vmatpush1.bf16.msra.mxu0 %v3058
        %3188 = vmatprep.subr.bf16.mxu0 %v3061
        %3189 = vmatpush1.bf16.msra.mxu0 %v3060
        %3190 = vmatprep.subr.bf16.mxu0 %v3063
        %3191 = vmatpush1.bf16.msra.mxu0 %v3062
        %3192 = vmatprep.subr.bf16.mxu0 %v3065
        %3193 = vmatpush1.bf16.msra.mxu0 %v3064
        %3194 = vmatprep.subr.bf16.mxu0 %v3067
        %3195 = vmatpush1.bf16.msra.mxu0 %v3066
        %3196 = vmatprep.subr.bf16.mxu0 %v3069
        %3197 = vmatpush1.bf16.msra.mxu0 %v3068
        %3198 = vmatprep.subr.bf16.mxu0 %v3071
        %3199 = vmatpush1.bf16.msra.mxu0 %v3070
        %3200 = vmatprep.subr.bf16.mxu0 %v3073
        %3201 = vmatpush1.bf16.msra.mxu0 %v3072
        %3202 = vmatprep.subr.bf16.mxu0 %v3075
        %3203 = vmatpush1.bf16.msra.mxu0 %v3074
        %3204 = vmatprep.subr.bf16.mxu0 %v3077
        %3205 = vmatpush1.bf16.msra.mxu0 %v3076
        %3206 = vmatprep.subr.bf16.mxu0 %v3079
        %3207 = vmatpush1.bf16.msra.mxu0 %v3078
        %3208 = vmatprep.subr.bf16.mxu0 %v3081
        %3209 = vmatpush1.bf16.msra.mxu0 %v3080
        %3210 = vmatprep.mubr.bf16.mxu0 %v2791
        %3211 = vmatmul.mubr.bf16.gmra.mrb[0].mxu0 %v2790
        %v3212 = vpop.f32.mrb[0].mxu0
        %v3213 = vadd.f32 0.0, %v3212
        %v3214 = vpop.f32.mrb[0].mxu0
        %v3215 = vadd.f32 0.0, %v3214
        %v3216 = vpop.f32.mrb[0].mxu0
        %v3217 = vadd.f32 0.0, %v3216
        %v3218 = vpop.f32.mrb[0].mxu0
        %v3219 = vadd.f32 0.0, %v3218
        %3220 = vdwg.mxu0
        %3221 = vmatprep.subr.bf16.mxu0 %v3083
        %3222 = vmatpush1.bf16.msra.mxu0 %v3082
        %3223 = vmatprep.subr.bf16.mxu0 %v3085
        %3224 = vmatpush1.bf16.msra.mxu0 %v3084
        %3225 = vmatprep.subr.bf16.mxu0 %v3087
        %3226 = vmatpush1.bf16.msra.mxu0 %v3086
        %3227 = vmatprep.subr.bf16.mxu0 %v3089
        %3228 = vmatpush1.bf16.msra.mxu0 %v3088
        %3229 = vmatprep.subr.bf16.mxu0 %v3091
        %3230 = vmatpush1.bf16.msra.mxu0 %v3090
        %3231 = vmatprep.subr.bf16.mxu0 %v3093
        %3232 = vmatpush1.bf16.msra.mxu0 %v3092
        %3233 = vmatprep.subr.bf16.mxu0 %v3095
        %3234 = vmatpush1.bf16.msra.mxu0 %v3094
        %3235 = vmatprep.subr.bf16.mxu0 %v3097
        %3236 = vmatpush1.bf16.msra.mxu0 %v3096
        %3237 = vmatprep.subr.bf16.mxu0 %v3099
        %3238 = vmatpush1.bf16.msra.mxu0 %v3098
        %3239 = vmatprep.subr.bf16.mxu0 %v3101
        %3240 = vmatpush1.bf16.msra.mxu0 %v3100
        %3241 = vmatprep.subr.bf16.mxu0 %v3103
        %3242 = vmatpush1.bf16.msra.mxu0 %v3102
        %3243 = vmatprep.subr.bf16.mxu0 %v3105
        %3244 = vmatpush1.bf16.msra.mxu0 %v3104
        %3245 = vmatprep.subr.bf16.mxu0 %v3107
        %3246 = vmatpush1.bf16.msra.mxu0 %v3106
        %3247 = vmatprep.subr.bf16.mxu0 %v3109
        %3248 = vmatpush1.bf16.msra.mxu0 %v3108
        %3249 = vmatprep.subr.bf16.mxu0 %v3111
        %3250 = vmatpush1.bf16.msra.mxu0 %v3110
        %3251 = vmatprep.subr.bf16.mxu0 %v3113
        %3252 = vmatpush1.bf16.msra.mxu0 %v3112
        %3253 = vmatprep.mubr.bf16.mxu0 %v2793
        %3254 = vmatmul.mubr.bf16.gmra.mrb[0].mxu0 %v2792
        %v3255 = vpop.f32.mrb[0].mxu0
        %v3256 = vadd.f32 %v3213, %v3255
        %v3257 = vpop.f32.mrb[0].mxu0
        %v3258 = vadd.f32 %v3215, %v3257
        %v3259 = vpop.f32.mrb[0].mxu0
        %v3260 = vadd.f32 %v3217, %v3259
        %v3261 = vpop.f32.mrb[0].mxu0
        %v3262 = vadd.f32 %v3219, %v3261
        %3263 = vdwg.mxu0
        %v3264 = vpack.c.bf16 %v3260, %v3256
        %v3265 = vpack.c.bf16 %v3262, %v3258
        %v3266 = vld [vmem:[%s10] sm:$0x3]
        %v3268 = vlaneseq
        %v3269 = vshrl.u32 %v3268, 7
        %v3270 = vsub.s32 0, %v3269
        %v3271 = vrot.slane %v3266, %v3270
        %v3272 = vlaneseq
        %v3273 = vshrl.u32 %v3272, 7
        %v3274 = vsub.s32 1, %v3273
        %v3275 = vrot.slane %v3266, %v3274
        %v3278 = vpack.c.bf16 %v3271, %v3271
        %v3279 = vpack.c.bf16 %v3275, %v3275
        %v3281 = vpack.i.b16 %v3278, %v3278
        %v3283 = vlaneseq
        %v3284 = vshrl.u32 %v3283, 7
        %v3285 = vsub.s32 0, %v3284
        %v3286 = vrot.slane %v3281, %v3285
        %v3288 = vpack.i.b16 %v3279, %v3279
        %v3290 = vlaneseq
        %v3291 = vshrl.u32 %v3290, 7
        %v3292 = vsub.s32 0, %v3291
        %v3293 = vrot.slane %v3288, %v3292
        %v3294 = vadd.bf16 %v3264, %v3286
        %v3295 = vadd.bf16 %v3265, %v3293
        %v3296 = vmax.bf16 %v3294, 0
        %v3297 = vmax.bf16 %v3295, 0
        %v3298 = vld [vmem:[%s11] sm:$0xf]
        %v3299 = vld [vmem:[%s11 + $0x4] sm:$0xf]
        %v3300 = vld [vmem:[%s11 + $0x8] sm:$0xf]
        %v3301 = vld [vmem:[%s11 + $0xc] sm:$0xf]
        %v3302 = vld [vmem:[%s11 + $0x10] sm:$0xf]
        %v3303 = vld [vmem:[%s11 + $0x14] sm:$0xf]
        %v3304 = vld [vmem:[%s11 + $0x18] sm:$0xf]
        %v3305 = vld [vmem:[%s11 + $0x1c] sm:$0xf]
        %v3306 = vld [vmem:[%s11 + $0x20] sm:$0xf]
        %v3307 = vld [vmem:[%s11 + $0x24] sm:$0xf]
        %v3308 = vld [vmem:[%s11 + $0x28] sm:$0xf]
        %v3309 = vld [vmem:[%s11 + $0x2c] sm:$0xf]
        %v3310 = vld [vmem:[%s11 + $0x30] sm:$0xf]
        %v3311 = vld [vmem:[%s11 + $0x34] sm:$0xf]
        %v3312 = vld [vmem:[%s11 + $0x38] sm:$0xf]
        %v3313 = vld [vmem:[%s11 + $0x3c] sm:$0xf]
        %v3314 = vld [vmem:[%s11 + $0x40] sm:$0xf]
        %v3315 = vld [vmem:[%s11 + $0x44] sm:$0xf]
        %v3316 = vld [vmem:[%s11 + $0x48] sm:$0xf]
        %v3317 = vld [vmem:[%s11 + $0x4c] sm:$0xf]
        %v3318 = vld [vmem:[%s11 + $0x50] sm:$0xf]
        %v3319 = vld [vmem:[%s11 + $0x54] sm:$0xf]
        %v3320 = vld [vmem:[%s11 + $0x58] sm:$0xf]
        %v3321 = vld [vmem:[%s11 + $0x5c] sm:$0xf]
        %v3322 = vld [vmem:[%s11 + $0x60] sm:$0xf]
        %v3323 = vld [vmem:[%s11 + $0x64] sm:$0xf]
        %v3324 = vld [vmem:[%s11 + $0x68] sm:$0xf]
        %v3325 = vld [vmem:[%s11 + $0x6c] sm:$0xf]
        %v3326 = vld [vmem:[%s11 + $0x70] sm:$0xf]
        %v3327 = vld [vmem:[%s11 + $0x74] sm:$0xf]
        %v3328 = vld [vmem:[%s11 + $0x78] sm:$0xf]
        %v3329 = vld [vmem:[%s11 + $0x7c] sm:$0xf]
        %v3362 = vunpack.c.l.b16 %v3298
        %v3363 = vunpack.c.l.b16 %v3299
        %v3364 = vunpack.c.l.b16 %v3300
        %v3365 = vunpack.c.l.b16 %v3301
        %v3366 = vunpack.c.l.b16 %v3302
        %v3367 = vunpack.c.l.b16 %v3303
        %v3368 = vunpack.c.l.b16 %v3304
        %v3369 = vunpack.c.l.b16 %v3305
        %v3370 = vunpack.c.l.b16 %v3306
        %v3371 = vunpack.c.l.b16 %v3307
        %v3372 = vunpack.c.l.b16 %v3308
        %v3373 = vunpack.c.l.b16 %v3309
        %v3374 = vunpack.c.l.b16 %v3310
        %v3375 = vunpack.c.l.b16 %v3311
        %v3376 = vunpack.c.l.b16 %v3312
        %v3377 = vunpack.c.l.b16 %v3313
        %v3378 = vunpack.c.l.b16 %v3314
        %v3379 = vunpack.c.l.b16 %v3315
        %v3380 = vunpack.c.l.b16 %v3316
        %v3381 = vunpack.c.l.b16 %v3317
        %v3382 = vunpack.c.l.b16 %v3318
        %v3383 = vunpack.c.l.b16 %v3319
        %v3384 = vunpack.c.l.b16 %v3320
        %v3385 = vunpack.c.l.b16 %v3321
        %v3386 = vunpack.c.l.b16 %v3322
        %v3387 = vunpack.c.l.b16 %v3323
        %v3388 = vunpack.c.l.b16 %v3324
        %v3389 = vunpack.c.l.b16 %v3325
        %v3390 = vunpack.c.l.b16 %v3326
        %v3391 = vunpack.c.l.b16 %v3327
        %v3392 = vunpack.c.l.b16 %v3328
        %v3393 = vunpack.c.l.b16 %v3329
        %v3394 = vpack.c.b16 %v3363, %v3362
        %v3395 = vpack.c.b16 %v3365, %v3364
        %v3396 = vpack.c.b16 %v3367, %v3366
        %v3397 = vpack.c.b16 %v3369, %v3368
        %v3398 = vpack.c.b16 %v3371, %v3370
        %v3399 = vpack.c.b16 %v3373, %v3372
        %v3400 = vpack.c.b16 %v3375, %v3374
        %v3401 = vpack.c.b16 %v3377, %v3376
        %v3402 = vpack.c.b16 %v3379, %v3378
        %v3403 = vpack.c.b16 %v3381, %v3380
        %v3404 = vpack.c.b16 %v3383, %v3382
        %v3405 = vpack.c.b16 %v3385, %v3384
        %v3406 = vpack.c.b16 %v3387, %v3386
        %v3407 = vpack.c.b16 %v3389, %v3388
        %v3408 = vpack.c.b16 %v3391, %v3390
        %v3409 = vpack.c.b16 %v3393, %v3392
        %3426 = vmatprep.subr.bf16.mxu0 0
        %3427 = vmatpush1.bf16.msra.mxu0 %v3394
        %3428 = vmatprep.subr.bf16.mxu0 0
        %3429 = vmatpush1.bf16.msra.mxu0 %v3395
        %3430 = vmatprep.subr.bf16.mxu0 0
        %3431 = vmatpush1.bf16.msra.mxu0 %v3396
        %3432 = vmatprep.subr.bf16.mxu0 0
        %3433 = vmatpush1.bf16.msra.mxu0 %v3397
        %3434 = vmatprep.subr.bf16.mxu0 0
        %3435 = vmatpush1.bf16.msra.mxu0 %v3398
        %3436 = vmatprep.subr.bf16.mxu0 0
        %3437 = vmatpush1.bf16.msra.mxu0 %v3399
        %3438 = vmatprep.subr.bf16.mxu0 0
        %3439 = vmatpush1.bf16.msra.mxu0 %v3400
        %3440 = vmatprep.subr.bf16.mxu0 0
        %3441 = vmatpush1.bf16.msra.mxu0 %v3401
        %3442 = vmatprep.subr.bf16.mxu0 0
        %3443 = vmatpush1.bf16.msra.mxu0 %v3402
        %3444 = vmatprep.subr.bf16.mxu0 0
        %3445 = vmatpush1.bf16.msra.mxu0 %v3403
        %3446 = vmatprep.subr.bf16.mxu0 0
        %3447 = vmatpush1.bf16.msra.mxu0 %v3404
        %3448 = vmatprep.subr.bf16.mxu0 0
        %3449 = vmatpush1.bf16.msra.mxu0 %v3405
        %3450 = vmatprep.subr.bf16.mxu0 0
        %3451 = vmatpush1.bf16.msra.mxu0 %v3406
        %3452 = vmatprep.subr.bf16.mxu0 0
        %3453 = vmatpush1.bf16.msra.mxu0 %v3407
        %3454 = vmatprep.subr.bf16.mxu0 0
        %3455 = vmatpush1.bf16.msra.mxu0 %v3408
        %3456 = vmatprep.subr.bf16.mxu0 0
        %3457 = vmatpush1.bf16.msra.mxu0 %v3409
        %3458 = vmatprep.mubr.bf16.mxu0 %v3297
        %3459 = vmatmul.mubr.bf16.gmra.mrb[0].mxu0 %v3296
        %v3460 = vpop.f32.mrb[0].mxu0
        %v3461 = vadd.f32 0.0, %v3460
        %v3462 = vpop.f32.mrb[0].mxu0
        %v3463 = vpop.f32.mrb[0].mxu0
        %v3464 = vadd.f32 0.0, %v3463
        %v3465 = vpop.f32.mrb[0].mxu0
        %3466 = vdwg.mxu0
        %v3467 = vpack.c.bf16 %v3464, %v3461
        %v3468 = vld [vmem:[%s12] sm:$0x1]
        %v3469 = vpack.c.bf16 %v3468, %v3468
        %v3471 = vpack.i.b16 %v3469, %v3469
        %v3473 = vlaneseq
        %v3474 = vshrl.u32 %v3473, 7
        %v3475 = vsub.s32 0, %v3474
        %v3476 = vrot.slane %v3471, %v3475
        %v3477 = vadd.bf16 %v3467, %v3476
        %v3478 = vmax.bf16 %v3477, 0
        %v3479 = vld [vmem:[%s13] sm:$0xf]
        %v3480 = vld [vmem:[%s13 + $0x4] sm:$0xf]
        %v3481 = vld [vmem:[%s13 + $0x8] sm:$0xf]
        %v3482 = vld [vmem:[%s13 + $0xc] sm:$0xf]
        %v3483 = vld [vmem:[%s13 + $0x10] sm:$0xf]
        %v3484 = vld [vmem:[%s13 + $0x14] sm:$0xf]
        %v3485 = vld [vmem:[%s13 + $0x18] sm:$0xf]
        %v3486 = vld [vmem:[%s13 + $0x1c] sm:$0xf]
        %v3487 = vld [vmem:[%s13 + $0x20] sm:$0xf]
        %v3488 = vld [vmem:[%s13 + $0x24] sm:$0xf]
        %v3489 = vld [vmem:[%s13 + $0x28] sm:$0xf]
        %v3490 = vld [vmem:[%s13 + $0x2c] sm:$0xf]
        %v3491 = vld [vmem:[%s13 + $0x30] sm:$0xf]
        %v3492 = vld [vmem:[%s13 + $0x34] sm:$0xf]
        %v3493 = vld [vmem:[%s13 + $0x38] sm:$0xf]
        %v3494 = vld [vmem:[%s13 + $0x3c] sm:$0xf]
        %v3495 = vld [vmem:[%s14] sm:$0x1]
        %v3497 = vlaneseq
        %v3498 = vshrl.u32 %v3497, 7
        %v3499 = vsub.s32 0, %v3498
        %v3500 = vrot.slane %v3495, %v3499
        %v3518 = vunpack.c.l.b16 %v3479
        %v3519 = vunpack.c.l.b16 %v3480
        %v3520 = vunpack.c.l.b16 %v3481
        %v3521 = vunpack.c.l.b16 %v3482
        %v3522 = vunpack.c.l.b16 %v3483
        %v3523 = vunpack.c.l.b16 %v3484
        %v3524 = vunpack.c.l.b16 %v3485
        %v3525 = vunpack.c.l.b16 %v3486
        %v3526 = vunpack.c.l.b16 %v3487
        %v3527 = vunpack.c.l.b16 %v3488
        %v3528 = vunpack.c.l.b16 %v3489
        %v3529 = vunpack.c.l.b16 %v3490
        %v3530 = vunpack.c.l.b16 %v3491
        %v3531 = vunpack.c.l.b16 %v3492
        %v3532 = vunpack.c.l.b16 %v3493
        %v3533 = vunpack.c.l.b16 %v3494
        %v3534 = vpack.c.b16 %v3519, %v3518
        %v3535 = vpack.c.b16 %v3521, %v3520
        %v3536 = vpack.c.b16 %v3523, %v3522
        %v3537 = vpack.c.b16 %v3525, %v3524
        %v3538 = vpack.c.b16 %v3527, %v3526
        %v3539 = vpack.c.b16 %v3529, %v3528
        %v3540 = vpack.c.b16 %v3531, %v3530
        %v3541 = vpack.c.b16 %v3533, %v3532
        %3550 = vmatprep.subr.bf16.mxu0 0
        %3551 = vmatpush1.bf16.msra.mxu0 %v3534
        %3552 = vmatprep.subr.bf16.mxu0 0
        %3553 = vmatpush1.bf16.msra.mxu0 %v3535
        %3554 = vmatprep.subr.bf16.mxu0 0
        %3555 = vmatpush1.bf16.msra.mxu0 %v3536
        %3556 = vmatprep.subr.bf16.mxu0 0
        %3557 = vmatpush1.bf16.msra.mxu0 %v3537
        %3558 = vmatprep.subr.bf16.mxu0 0
        %3559 = vmatpush1.bf16.msra.mxu0 %v3538
        %3560 = vmatprep.subr.bf16.mxu0 0
        %3561 = vmatpush1.bf16.msra.mxu0 %v3539
        %3562 = vmatprep.subr.bf16.mxu0 0
        %3563 = vmatpush1.bf16.msra.mxu0 %v3540
        %3564 = vmatprep.subr.bf16.mxu0 0
        %3565 = vmatpush1.bf16.msra.mxu0 %v3541
        %3566 = vmatprep.subr.bf16.mxu0 0
        %3567 = vmatpush1.bf16.msra.mxu0 0
        %3568 = vmatprep.subr.bf16.mxu0 0
        %3569 = vmatpush1.bf16.msra.mxu0 0
        %3570 = vmatprep.subr.bf16.mxu0 0
        %3571 = vmatpush1.bf16.msra.mxu0 0
        %3572 = vmatprep.subr.bf16.mxu0 0
        %3573 = vmatpush1.bf16.msra.mxu0 0
        %3574 = vmatprep.subr.bf16.mxu0 0
        %3575 = vmatpush1.bf16.msra.mxu0 0
        %3576 = vmatprep.subr.bf16.mxu0 0
        %3577 = vmatpush1.bf16.msra.mxu0 0
        %3578 = vmatprep.subr.bf16.mxu0 0
        %3579 = vmatpush1.bf16.msra.mxu0 0
        %3580 = vmatprep.subr.bf16.mxu0 0
        %3581 = vmatpush1.bf16.msra.mxu0 0
        %3582 = vmatprep.mubr.bf16.mxu0 0
        %3583 = vmatmul.mubr.bf16.gmra.mrb[0].mxu0 %v3478
        %v3584 = vpop.f32.mrb[0].mxu0
        %v3585 = vadd.f32 %v3500, %v3584
        %v3586 = vpop.f32.mrb[0].mxu0
        %v3587 = vpop.f32.mrb[0].mxu0
        %v3588 = vadd.f32 %v3500, %v3587
        %v3589 = vpop.f32.mrb[0].mxu0
        %3590 = vdwg.mxu0
        %v3591 = vxor.u32 %v3585, 2147483648
        %v3592 = vxor.u32 %v3588, 2147483648
        %v3593 = vmul.f32 %v3591, 1.442695
        %v3594 = vpow.pop %v3593
        %v3595 = vmul.f32 %v3592, 1.442695
        %v3596 = vpow.pop %v3595
        %v3597 = vadd.f32 %v3594, 1.0
        %v3598 = vadd.f32 %v3596, 1.0
        %v3599 = vrcp.pop %v3597
        %v3600 = vmul.f32 1.0, %v3599
        %v3601 = vrcp.pop %v3598
        %v3602 = vmul.f32 1.0, %v3601
        %v3603 = vmul.f32 %v3600, %v595
        %v3604 = vmul.f32 %v3602, %v596
        %v3605 = vadd.f32 %v593, %v3603
        %v3606 = vadd.f32 %v594, %v3604
        %3607 = vst.msk [vmem:[%s584] sm:$0xff] %vm626, %v3605
        %3608 = vst.msk [vmem:[%s584 + $0x8] sm:$0xff] %vm626, %v3606
        %s3609 = smul.u32 2, %s28
        %p3610 = scmp.lt.s32.totalorder %s3609, 3
        %s3611 = scalar_select %p3610, %s3609, 3
        %s3612 = smul.addr %s3611, 8
        %s3613 = scalar_lea.vmem %s15, %s3612
        // Predicated region
        $region93: #{imputer_forward.1} parent=79 // pred_check
          %p3614 = pneg %p376
        $region94: #{imputer_forward.1} parent=79 // pred_check_branch
          %3616 = sbr.rel (%p3614) target = $region96
        $region95: #{imputer_forward.1} parent=79 // pred_region
          %s3617 = smul.u32 2, %s28
        $region96: #{imputer_forward.1} parent=79 // pred_fallthru
          _
      $region80: #{imputer_forward.1} parent=5 // pred_fallthru
        _
      %p3618 = scmp.le.s32.totalorder 2, %s23
      // Predicated region
      $region97: #{imputer_forward.1} parent=5 // pred_check
        %p3619 = pneg %p3618
      $region98: #{imputer_forward.1} parent=5 // pred_check_branch
        %3621 = sbr.rel (%p3619) target = $region100
      $region99: #{imputer_forward.1} parent=5 // pred_region
        %s3622 = ssub.s32 %s23, 2
        // Predicated region
        $region101: #{imputer_forward.1} parent=99 // pred_check
          %p3623 = pneg %p382
        $region102: #{imputer_forward.1} parent=99 // pred_check_branch
          %3625 = sbr.rel (%p3623) target = $region104
        $region103: #{imputer_forward.1} parent=99 // pred_region
          %s3626 = smul.u32 2, %s29
          %p3627 = scmp.lt.s32.totalorder %s3626, 3
          %s3628 = scalar_select %p3627, %s3626, 3
          %s3629 = smul.addr %s3628, 8
          %s3630 = scalar_lea.vmem %s15, %s3629
        $region104: #{imputer_forward.1} parent=99 // pred_fallthru
          _
      $region100: #{imputer_forward.1} parent=5 // pred_fallthru
        _
    $region6: #{imputer_forward.1} parent=1 // loop_footer
      %s27 = sadd.s32 1, %s23
    $region7: #{imputer_forward.1} parent=1 // loop_footer_branch
      %22 = sbr.rel target = $region3
    $region8: #{imputer_forward.1} parent=1 // loop_exit
      _
    %3631 = vsyncpa [#allocation3], 1
    %s3632 = scalar_lea.sflag [#allocation3], 1
    %3633 = vsyncpa %s3632, 1
    %3634 = vsyncpa [#allocation5], 1

</llo_original>
